<compile_context>
chip_gen: v5e
topology: v5e:2x2
jax: 0.10.0
libtpu: 0.0.40
codegen_flags: <defaults>
</compile_context>

<pallas_src>
import math

import jax
import jax.numpy as jnp
from jax import lax
from jax.experimental import pallas as pl
from jax.experimental.pallas import tpu as pltpu

# ----- module config (matches SimpleTransformerEncoder_Access defaults) -----
N_FEATURE = 64
N_HEAD = 2
N_LAYERS = 3
N_HIDDEN = 1024
N_OUT = 2
OUT_PAD = 128          # lane-dense padded head output width
IMG_DIM = 512
MAX_LEN = 80
VOCAB_PAD = 8          # cue/decision vocab is 5, padded to 8 for TPU tiling
HEAD_DIM = N_FEATURE // N_HEAD
LN_EPS = 1e-5


def _full_spec(a):
    # whole-array block, constant index map (works for any grid rank)
    return pl.BlockSpec(a.shape, lambda *_i, _nd=a.ndim: (0,) * _nd)


def _layer_norm(x, g, b):
    mu = jnp.mean(x, axis=-1, keepdims=True)
    var = jnp.mean(jnp.square(x - mu), axis=-1, keepdims=True)
    return (x - mu) * lax.rsqrt(var + LN_EPS) * g + b


# ---------------------------------------------------------------------------
# Single fused kernel: preprocess + 3 encoder layers + MLP head
# ---------------------------------------------------------------------------
def _fused_forward_kernel(mid_ref, cue_ref, dec_ref, mask_ref,
                          w_img_ref, b_img_ref, e_cue_ref, e_dec_ref, pe_ref,
                          wqkv_ref, bqkv_ref, wo_ref, bo_ref,
                          ln1g_ref, ln1b_ref, w1_ref, bf1_ref,
                          w2_ref, bf2_ref, ln2g_ref, ln2b_ref,
                          a1_ref, ab1_ref, a2_ref, ab2_ref, a3_ref, ab3_ref,
                          out_ref):
    bb, s, _ = mid_ref.shape
    n = bb * s
    f = N_FEATURE

    # ---- preprocess: img Linear + one-hot embedding matmuls + PE -----------
    mid = mid_ref[...].reshape(n, IMG_DIM)
    x = jnp.dot(mid, w_img_ref[...],
                preferred_element_type=jnp.float32) + b_img_ref[...]
    iota = lax.broadcasted_iota(jnp.int32, (n, VOCAB_PAD), 1)
    cue_oh = (cue_ref[...].reshape(n, 1) == iota).astype(jnp.float32)
    dec_oh = (dec_ref[...].reshape(n, 1) == iota).astype(jnp.float32)
    x = x + jnp.dot(cue_oh, e_cue_ref[...], preferred_element_type=jnp.float32)
    x = x + jnp.dot(dec_oh, e_dec_ref[...], preferred_element_type=jnp.float32)
    # positional encoding depends only on the sequence index
    x = (x.reshape(bb, s, f) + pe_ref[...][None, :, :]).reshape(n, f)

    # additive key-padding mask built in-kernel from the int mask
    mask_add = jnp.where(mask_ref[...] != 0, -1e30, 0.0).astype(jnp.float32)  # (bb,1,s)

    scale = 1.0 / math.sqrt(HEAD_DIM)

    # ---- 3x post-norm TransformerEncoderLayer ------------------------------
    for l in range(N_LAYERS):
        # fused QKV projection: one (n,64)x(64,192) matmul
        qkv = jnp.dot(x, wqkv_ref[l],
                      preferred_element_type=jnp.float32) + bqkv_ref[l]
        q = qkv[:, 0 * f:1 * f].reshape(bb, s, f)
        k = qkv[:, 1 * f:2 * f].reshape(bb, s, f)
        v = qkv[:, 2 * f:3 * f].reshape(bb, s, f)

        head_outs = []
        for h in range(N_HEAD):
            sl = slice(h * HEAD_DIM, (h + 1) * HEAD_DIM)
            sc = jnp.einsum('bqd,bkd->bqk', q[:, :, sl], k[:, :, sl],
                            preferred_element_type=jnp.float32) * scale
            sc = sc + mask_add
            sc = sc - jnp.max(sc, axis=-1, keepdims=True)
            p = jnp.exp(sc)
            p = p * pl.reciprocal(jnp.sum(p, axis=-1, keepdims=True),
                                  approx=True)
            head_outs.append(jnp.einsum('bqk,bkd->bqd', p, v[:, :, sl],
                                        preferred_element_type=jnp.float32))
        attn = jnp.concatenate(head_outs, axis=-1).reshape(n, f)
        # single output projection across both heads
        attn = jnp.dot(attn, wo_ref[l],
                       preferred_element_type=jnp.float32) + bo_ref[l]

        x = _layer_norm(x + attn, ln1g_ref[l], ln1b_ref[l])
        hid = jnp.maximum(
            jnp.dot(x, w1_ref[l], preferred_element_type=jnp.float32)
            + bf1_ref[l], 0.0)
        ff = jnp.dot(hid, w2_ref[l],
                     preferred_element_type=jnp.float32) + bf2_ref[l]
        x = _layer_norm(x + ff, ln2g_ref[l], ln2b_ref[l])

    # ---- MLP head (dropout = identity), lane-padded (128-wide) output ------
    h1 = jnp.maximum(
        jnp.dot(x, a1_ref[...], preferred_element_type=jnp.float32)
        + ab1_ref[...], 0.0)
    h2 = jnp.maximum(
        jnp.dot(h1, a2_ref[...], preferred_element_type=jnp.float32)
        + ab2_ref[...], 0.0)
    out = jnp.dot(h2, a3_ref[...],
                  preferred_element_type=jnp.float32) + ab3_ref[...]
    out_ref[...] = out.reshape(bb, s, OUT_PAD)


# ---------------------------------------------------------------------------
# Weight preparation: stack per-layer weights, fuse QKV, lane-pad head output
# ---------------------------------------------------------------------------
def prepare_weights(params, seq_len):
    layers = params['layers']

    def stack(key):
        return jnp.stack([lp[key] for lp in layers], axis=0)

    wqkv = jnp.stack([jnp.concatenate([lp['wq'], lp['wk'], lp['wv']], axis=1)
                      for lp in layers], axis=0)            # (L, 64, 192)
    bqkv = jnp.stack([jnp.concatenate([lp['bq'], lp['bk'], lp['bv']], axis=1)
                      for lp in layers], axis=0)            # (L, 1, 192)

    a3p = jnp.zeros((N_FEATURE, OUT_PAD), jnp.float32).at[:, :N_OUT].set(
        params['a3'])
    ab3p = jnp.zeros((1, OUT_PAD), jnp.float32).at[:, :N_OUT].set(
        params['ab3'])

    return [
        params['w_img'], params['b_img'], params['e_cue'], params['e_dec'],
        params['pe'][:seq_len],
        wqkv, bqkv, stack('wo'), stack('bo'),
        stack('ln1g'), stack('ln1b'), stack('w1'), stack('bf1'),
        stack('w2'), stack('bf2'), stack('ln2g'), stack('ln2b'),
        params['a1'], params['ab1'], params['a2'], params['ab2'], a3p, ab3p,
    ]


def _pick_block_b(batch, seq, max_tokens=1024):
    bb = max(1, min(batch, max(1, max_tokens // max(seq, 1))))
    while batch % bb:
        bb -= 1
    return bb


# ---------------------------------------------------------------------------
# Forward wrapper (layout glue only: transposes at the PyTorch boundary)
# ---------------------------------------------------------------------------
def forward(params, middles, cues, decisions, middles_mask, *, block_b=None):
    # middles: (S, B, 512) f32 ; cues, decisions: (S, B) int ; mask: (B, S) bool
    s, b, _ = middles.shape
    mid = middles.astype(jnp.float32).transpose(1, 0, 2)        # (B, S, 512)
    cue = cues.astype(jnp.int32).transpose(1, 0)[..., None]     # (B, S, 1)
    dec = decisions.astype(jnp.int32).transpose(1, 0)[..., None]
    mask = middles_mask.astype(jnp.int32).reshape(b, 1, s)      # (B, 1, S)

    weights = prepare_weights(params, s)
    bb = block_b if block_b is not None else _pick_block_b(b, s)
    grid = (b // bb,)

    in_specs = [
        pl.BlockSpec((bb, s, IMG_DIM), lambda i: (i, 0, 0)),
        pl.BlockSpec((bb, s, 1), lambda i: (i, 0, 0)),
        pl.BlockSpec((bb, s, 1), lambda i: (i, 0, 0)),
        pl.BlockSpec((bb, 1, s), lambda i: (i, 0, 0)),
    ] + [_full_spec(w) for w in weights]

    out_pad = pl.pallas_call(
        _fused_forward_kernel,
        out_shape=jax.ShapeDtypeStruct((b, s, OUT_PAD), jnp.float32),
        grid=grid,
        in_specs=in_specs,
        out_specs=pl.BlockSpec((bb, s, OUT_PAD), lambda i: (i, 0, 0)),
        compiler_params=pltpu.CompilerParams(
            dimension_semantics=("parallel",)),
    )(mid, cue, dec, mask, *weights)

    # (B, S, OUT_PAD) -> (S, B, N_OUT); PyTorch's squeeze(2) is a no-op for n_out=2
    return out_pad[:, :, :N_OUT].transpose(1, 0, 2)


# ---------------------------------------------------------------------------
# Deterministic parameter init (synthetic; shapes from __init__)
# ---------------------------------------------------------------------------
def init_params(key):
    keys = iter(jax.random.split(key, 64))

    def nrm(shape, std=0.05):
        return std * jax.random.normal(next(keys), shape, jnp.float32)

    def uni(shape, r):
        return jax.random.uniform(next(keys), shape, jnp.float32, -r, r)

    params = {
        'w_img': uni((IMG_DIM, N_FEATURE), 0.1),   # init_weights: uniform(-0.1, 0.1)
        'b_img': uni((1, N_FEATURE), 1.0 / math.sqrt(IMG_DIM)),
        'e_cue': nrm((VOCAB_PAD, N_FEATURE), 1.0),  # nn.Embedding(5,F) padded to 8 rows
        'e_dec': nrm((VOCAB_PAD, N_FEATURE), 1.0),
    }
    # sinusoidal positional encoding buffer (max_len=80)
    pos = jnp.arange(MAX_LEN, dtype=jnp.float32)[:, None]
    div = jnp.exp(jnp.arange(0, N_FEATURE, 2, dtype=jnp.float32)
                  * (-math.log(10000.0) / N_FEATURE))
    pe = jnp.zeros((MAX_LEN, N_FEATURE), jnp.float32)
    pe = pe.at[:, 0::2].set(jnp.sin(pos * div))
    pe = pe.at[:, 1::2].set(jnp.cos(pos * div))
    params['pe'] = pe

    layers = []
    for _ in range(N_LAYERS):
        layers.append({
            'wq': nrm((N_FEATURE, N_FEATURE)),
            'wk': nrm((N_FEATURE, N_FEATURE)),
            'wv': nrm((N_FEATURE, N_FEATURE)),
            'bq': nrm((1, N_FEATURE), 0.01),
            'bk': nrm((1, N_FEATURE), 0.01),
            'bv': nrm((1, N_FEATURE), 0.01),
            'wo': nrm((N_FEATURE, N_FEATURE)),
            'bo': nrm((1, N_FEATURE), 0.01),
            'ln1g': jnp.ones((1, N_FEATURE), jnp.float32),
            'ln1b': jnp.zeros((1, N_FEATURE), jnp.float32),
            'w1': nrm((N_FEATURE, N_HIDDEN)),
            'bf1': nrm((1, N_HIDDEN), 0.01),
            'w2': nrm((N_HIDDEN, N_FEATURE)),
            'bf2': nrm((1, N_FEATURE), 0.01),
            'ln2g': jnp.ones((1, N_FEATURE), jnp.float32),
            'ln2b': jnp.zeros((1, N_FEATURE), jnp.float32),
        })
    params['layers'] = layers

    params['a1'] = nrm((N_FEATURE, N_FEATURE))
    params['ab1'] = nrm((1, N_FEATURE), 0.01)
    params['a2'] = nrm((N_FEATURE, N_FEATURE))
    params['ab2'] = nrm((1, N_FEATURE), 0.01)
    params['a3'] = nrm((N_FEATURE, N_OUT))
    params['ab3'] = nrm((1, N_OUT), 0.01)
    return params


if __name__ == "__main__":
    key = jax.random.PRNGKey(0)
    kp, km, kc, kd = jax.random.split(key, 4)
    params = init_params(kp)

    S, B = 8, 2
    middles = jax.random.normal(km, (S, B, IMG_DIM), jnp.float32)
    cues = jax.random.randint(kc, (S, B), 0, 5, jnp.int32)
    decisions = jax.random.randint(kd, (S, B), 0, 5, jnp.int32)
    middles_mask = jnp.zeros((B, S), dtype=bool).at[1, S - 1].set(True)

    out = forward(params, middles, cues, decisions, middles_mask)
    out = jax.block_until_ready(out)
    assert out.shape == (S, B, N_OUT), out.shape
    assert bool(jnp.all(jnp.isfinite(out)))
    print("KERNEL_OK")
</pallas_src>

<mosaic_0001>
module attributes {stable_mosaic.version = 11 : i64} {
  func.func @_fused_forward_kernel(%arg0: i32, %arg1: memref<2x8x512xf32, #tpu.memory_space<vmem>>, %arg2: memref<2x8x1xi32, #tpu.memory_space<vmem>>, %arg3: memref<2x8x1xi32, #tpu.memory_space<vmem>>, %arg4: memref<2x1x8xi32, #tpu.memory_space<vmem>>, %arg5: memref<512x64xf32, #tpu.memory_space<vmem>>, %arg6: memref<1x64xf32, #tpu.memory_space<vmem>>, %arg7: memref<8x64xf32, #tpu.memory_space<vmem>>, %arg8: memref<8x64xf32, #tpu.memory_space<vmem>>, %arg9: memref<8x64xf32, #tpu.memory_space<vmem>>, %arg10: memref<3x64x192xf32, #tpu.memory_space<vmem>>, %arg11: memref<3x1x192xf32, #tpu.memory_space<vmem>>, %arg12: memref<3x64x64xf32, #tpu.memory_space<vmem>>, %arg13: memref<3x1x64xf32, #tpu.memory_space<vmem>>, %arg14: memref<3x1x64xf32, #tpu.memory_space<vmem>>, %arg15: memref<3x1x64xf32, #tpu.memory_space<vmem>>, %arg16: memref<3x64x1024xf32, #tpu.memory_space<vmem>>, %arg17: memref<3x1x1024xf32, #tpu.memory_space<vmem>>, %arg18: memref<3x1024x64xf32, #tpu.memory_space<vmem>>, %arg19: memref<3x1x64xf32, #tpu.memory_space<vmem>>, %arg20: memref<3x1x64xf32, #tpu.memory_space<vmem>>, %arg21: memref<3x1x64xf32, #tpu.memory_space<vmem>>, %arg22: memref<64x64xf32, #tpu.memory_space<vmem>>, %arg23: memref<1x64xf32, #tpu.memory_space<vmem>>, %arg24: memref<64x64xf32, #tpu.memory_space<vmem>>, %arg25: memref<1x64xf32, #tpu.memory_space<vmem>>, %arg26: memref<64x128xf32, #tpu.memory_space<vmem>>, %arg27: memref<1x128xf32, #tpu.memory_space<vmem>>, %arg28: memref<2x8x128xf32, #tpu.memory_space<vmem>>) attributes {dimension_semantics = [#tpu.dimension_semantics<parallel>], iteration_bounds = array<i64: 1>, scalar_prefetch = 0 : i64, scratch_operands = 0 : i64, tpu.core_type = #tpu.core_type<tc>, window_params = [{transform_indices = @transform_0, window_bounds = array<i64: 2, 8, 512>}, {transform_indices = @transform_1, window_bounds = array<i64: 2, 8, 1>}, {transform_indices = @transform_2, window_bounds = array<i64: 2, 8, 1>}, {transform_indices = @transform_3, window_bounds = array<i64: 2, 1, 8>}, {pipeline_mode = #tpu.pipeline_mode<synchronous>, transform_indices = @transform_4, window_bounds = array<i64: 512, 64>}, {pipeline_mode = #tpu.pipeline_mode<synchronous>, transform_indices = @transform_5, window_bounds = array<i64: 1, 64>}, {pipeline_mode = #tpu.pipeline_mode<synchronous>, transform_indices = @transform_6, window_bounds = array<i64: 8, 64>}, {pipeline_mode = #tpu.pipeline_mode<synchronous>, transform_indices = @transform_7, window_bounds = array<i64: 8, 64>}, {pipeline_mode = #tpu.pipeline_mode<synchronous>, transform_indices = @transform_8, window_bounds = array<i64: 8, 64>}, {pipeline_mode = #tpu.pipeline_mode<synchronous>, transform_indices = @transform_9, window_bounds = array<i64: 3, 64, 192>}, {pipeline_mode = #tpu.pipeline_mode<synchronous>, transform_indices = @transform_10, window_bounds = array<i64: 3, 1, 192>}, {pipeline_mode = #tpu.pipeline_mode<synchronous>, transform_indices = @transform_11, window_bounds = array<i64: 3, 64, 64>}, {pipeline_mode = #tpu.pipeline_mode<synchronous>, transform_indices = @transform_12, window_bounds = array<i64: 3, 1, 64>}, {pipeline_mode = #tpu.pipeline_mode<synchronous>, transform_indices = @transform_13, window_bounds = array<i64: 3, 1, 64>}, {pipeline_mode = #tpu.pipeline_mode<synchronous>, transform_indices = @transform_14, window_bounds = array<i64: 3, 1, 64>}, {pipeline_mode = #tpu.pipeline_mode<synchronous>, transform_indices = @transform_15, window_bounds = array<i64: 3, 64, 1024>}, {pipeline_mode = #tpu.pipeline_mode<synchronous>, transform_indices = @transform_16, window_bounds = array<i64: 3, 1, 1024>}, {pipeline_mode = #tpu.pipeline_mode<synchronous>, transform_indices = @transform_17, window_bounds = array<i64: 3, 1024, 64>}, {pipeline_mode = #tpu.pipeline_mode<synchronous>, transform_indices = @transform_18, window_bounds = array<i64: 3, 1, 64>}, {pipeline_mode = #tpu.pipeline_mode<synchronous>, transform_indices = @transform_19, window_bounds = array<i64: 3, 1, 64>}, {pipeline_mode = #tpu.pipeline_mode<synchronous>, transform_indices = @transform_20, window_bounds = array<i64: 3, 1, 64>}, {pipeline_mode = #tpu.pipeline_mode<synchronous>, transform_indices = @transform_21, window_bounds = array<i64: 64, 64>}, {pipeline_mode = #tpu.pipeline_mode<synchronous>, transform_indices = @transform_22, window_bounds = array<i64: 1, 64>}, {pipeline_mode = #tpu.pipeline_mode<synchronous>, transform_indices = @transform_23, window_bounds = array<i64: 64, 64>}, {pipeline_mode = #tpu.pipeline_mode<synchronous>, transform_indices = @transform_24, window_bounds = array<i64: 1, 64>}, {pipeline_mode = #tpu.pipeline_mode<synchronous>, transform_indices = @transform_25, window_bounds = array<i64: 64, 128>}, {pipeline_mode = #tpu.pipeline_mode<synchronous>, transform_indices = @transform_26, window_bounds = array<i64: 1, 128>}, {transform_indices = @transform_27, window_bounds = array<i64: 2, 8, 128>}]} {
    %c0 = arith.constant 0 : index
    %c0_0 = arith.constant 0 : index
    %c0_1 = arith.constant 0 : index
    %0 = vector.load %arg1[%c0, %c0_0, %c0_1] : memref<2x8x512xf32, #tpu.memory_space<vmem>>, vector<2x8x512xf32>
    %1 = vector.shape_cast %0 : vector<2x8x512xf32> to vector<16x512xf32>
    %c0_2 = arith.constant 0 : index
    %c0_3 = arith.constant 0 : index
    %2 = vector.load %arg5[%c0_2, %c0_3] : memref<512x64xf32, #tpu.memory_space<vmem>>, vector<512x64xf32>
    %cst = arith.constant dense<0.000000e+00> : vector<16x64xf32>
    %3 = tpu.matmul %1, %2, %cst {dimension_numbers = #tpu.dot_dimension_numbers<[1], [0], [0], [1], [0, 0, 1, 1], [], []>} : vector<16x512xf32>, vector<512x64xf32>, vector<16x64xf32> -> vector<16x64xf32>
    %c0_4 = arith.constant 0 : index
    %c0_5 = arith.constant 0 : index
    %4 = vector.load %arg6[%c0_4, %c0_5] : memref<1x64xf32, #tpu.memory_space<vmem>>, vector<1x64xf32>
    %5 = vector.broadcast %4 : vector<1x64xf32> to vector<16x64xf32>
    %6 = arith.addf %3, %5 : vector<16x64xf32>
    %7 = tpu.iota {dimensions = array<i32: 1>} : vector<16x8xi32>
    %c0_6 = arith.constant 0 : index
    %c0_7 = arith.constant 0 : index
    %c0_8 = arith.constant 0 : index
    %8 = vector.load %arg2[%c0_6, %c0_7, %c0_8] : memref<2x8x1xi32, #tpu.memory_space<vmem>>, vector<2x8x1xi32>
    %9 = vector.shape_cast %8 : vector<2x8x1xi32> to vector<16x1xi32>
    %10 = vector.broadcast %9 : vector<16x1xi32> to vector<16x8xi32>
    %11 = arith.cmpi eq, %10, %7 : vector<16x8xi32>
    %12 = arith.extui %11 : vector<16x8xi1> to vector<16x8xi32>
    %13 = arith.sitofp %12 : vector<16x8xi32> to vector<16x8xf32>
    %c0_9 = arith.constant 0 : index
    %c0_10 = arith.constant 0 : index
    %c0_11 = arith.constant 0 : index
    %14 = vector.load %arg3[%c0_9, %c0_10, %c0_11] : memref<2x8x1xi32, #tpu.memory_space<vmem>>, vector<2x8x1xi32>
    %15 = vector.shape_cast %14 : vector<2x8x1xi32> to vector<16x1xi32>
    %16 = vector.broadcast %15 : vector<16x1xi32> to vector<16x8xi32>
    %17 = arith.cmpi eq, %16, %7 : vector<16x8xi32>
    %18 = arith.extui %17 : vector<16x8xi1> to vector<16x8xi32>
    %19 = arith.sitofp %18 : vector<16x8xi32> to vector<16x8xf32>
    %c0_12 = arith.constant 0 : index
    %c0_13 = arith.constant 0 : index
    %20 = vector.load %arg7[%c0_12, %c0_13] : memref<8x64xf32, #tpu.memory_space<vmem>>, vector<8x64xf32>
    %cst_14 = arith.constant dense<0.000000e+00> : vector<16x64xf32>
    %21 = tpu.matmul %13, %20, %cst_14 {dimension_numbers = #tpu.dot_dimension_numbers<[1], [0], [0], [1], [0, 0, 1, 1], [], []>} : vector<16x8xf32>, vector<8x64xf32>, vector<16x64xf32> -> vector<16x64xf32>
    %22 = arith.addf %6, %21 : vector<16x64xf32>
    %c0_15 = arith.constant 0 : index
    %c0_16 = arith.constant 0 : index
    %23 = vector.load %arg8[%c0_15, %c0_16] : memref<8x64xf32, #tpu.memory_space<vmem>>, vector<8x64xf32>
    %cst_17 = arith.constant dense<0.000000e+00> : vector<16x64xf32>
    %24 = tpu.matmul %19, %23, %cst_17 {dimension_numbers = #tpu.dot_dimension_numbers<[1], [0], [0], [1], [0, 0, 1, 1], [], []>} : vector<16x8xf32>, vector<8x64xf32>, vector<16x64xf32> -> vector<16x64xf32>
    %25 = arith.addf %22, %24 : vector<16x64xf32>
    %26 = vector.shape_cast %25 : vector<16x64xf32> to vector<2x8x64xf32>
    %c0_18 = arith.constant 0 : index
    %c0_19 = arith.constant 0 : index
    %27 = vector.load %arg9[%c0_18, %c0_19] : memref<8x64xf32, #tpu.memory_space<vmem>>, vector<8x64xf32>
    %28 = vector.shape_cast %27 : vector<8x64xf32> to vector<1x8x64xf32>
    %29 = vector.broadcast %28 : vector<1x8x64xf32> to vector<2x8x64xf32>
    %30 = arith.addf %26, %29 : vector<2x8x64xf32>
    %31 = vector.shape_cast %30 : vector<2x8x64xf32> to vector<16x64xf32>
    %c0_20 = arith.constant 0 : index
    %c0_21 = arith.constant 0 : index
    %c0_22 = arith.constant 0 : index
    %32 = vector.load %arg4[%c0_20, %c0_21, %c0_22] : memref<2x1x8xi32, #tpu.memory_space<vmem>>, vector<2x1x8xi32>
    %c0_i32 = arith.constant 0 : i32
    %33 = vector.broadcast %c0_i32 : i32 to vector<2x1x8xi32>
    %34 = arith.cmpi ne, %32, %33 : vector<2x1x8xi32>
    %cst_23 = arith.constant -1.000000e+30 : f32
    %cst_24 = arith.constant 0.000000e+00 : f32
    %35 = vector.broadcast %cst_23 : f32 to vector<2x1x8xf32>
    %36 = vector.broadcast %cst_24 : f32 to vector<2x1x8xf32>
    %37 = arith.select %34, %35, %36 : vector<2x1x8xi1>, vector<2x1x8xf32>
    %c0_25 = arith.constant 0 : index
    %c0_26 = arith.constant 0 : index
    %c0_27 = arith.constant 0 : index
    %38 = vector.load %arg10[%c0_25, %c0_26, %c0_27] : memref<3x64x192xf32, #tpu.memory_space<vmem>>, vector<1x64x192xf32>
    %39 = vector.shape_cast %38 : vector<1x64x192xf32> to vector<64x192xf32>
    %cst_28 = arith.constant dense<0.000000e+00> : vector<16x192xf32>
    %40 = tpu.matmul %31, %39, %cst_28 {dimension_numbers = #tpu.dot_dimension_numbers<[1], [0], [0], [1], [0, 0, 1, 1], [], []>} : vector<16x64xf32>, vector<64x192xf32>, vector<16x192xf32> -> vector<16x192xf32>
    %c0_29 = arith.constant 0 : index
    %c0_30 = arith.constant 0 : index
    %c0_31 = arith.constant 0 : index
    %41 = vector.load %arg11[%c0_29, %c0_30, %c0_31] : memref<3x1x192xf32, #tpu.memory_space<vmem>>, vector<1x1x192xf32>
    %42 = vector.shape_cast %41 : vector<1x1x192xf32> to vector<1x192xf32>
    %43 = vector.broadcast %42 : vector<1x192xf32> to vector<16x192xf32>
    %44 = arith.addf %40, %43 : vector<16x192xf32>
    %45 = vector.extract_strided_slice %44 {offsets = [0, 0], sizes = [16, 64], strides = [1, 1]} : vector<16x192xf32> to vector<16x64xf32>
    %46 = vector.shape_cast %45 : vector<16x64xf32> to vector<2x8x64xf32>
    %47 = vector.extract_strided_slice %44 {offsets = [0, 64], sizes = [16, 64], strides = [1, 1]} : vector<16x192xf32> to vector<16x64xf32>
    %48 = vector.shape_cast %47 : vector<16x64xf32> to vector<2x8x64xf32>
    %49 = vector.extract_strided_slice %44 {offsets = [0, 128], sizes = [16, 64], strides = [1, 1]} : vector<16x192xf32> to vector<16x64xf32>
    %50 = vector.shape_cast %49 : vector<16x64xf32> to vector<2x8x64xf32>
    %51 = vector.extract_strided_slice %46 {offsets = [0, 0, 0], sizes = [2, 8, 32], strides = [1, 1, 1]} : vector<2x8x64xf32> to vector<2x8x32xf32>
    %52 = vector.extract_strided_slice %48 {offsets = [0, 0, 0], sizes = [2, 8, 32], strides = [1, 1, 1]} : vector<2x8x64xf32> to vector<2x8x32xf32>
    "tpu.trace_start"() <{level = 10 : i32, message = "bqd,bkd->bqk"}> : () -> ()
    %cst_32 = arith.constant dense<0.000000e+00> : vector<2x8x8xf32>
    %53 = tpu.matmul %51, %52, %cst_32 {dimension_numbers = #tpu.dot_dimension_numbers<[2], [2], [1], [1], [0, 0, 0, 1, 1, 1], [0], [0]>} : vector<2x8x32xf32>, vector<2x8x32xf32>, vector<2x8x8xf32> -> vector<2x8x8xf32>
    "tpu.trace_stop"() : () -> ()
    %cst_33 = arith.constant 0.176776692 : f32
    %54 = vector.broadcast %cst_33 : f32 to vector<2x8x8xf32>
    %55 = arith.mulf %53, %54 : vector<2x8x8xf32>
    %56 = vector.broadcast %37 : vector<2x1x8xf32> to vector<2x8x8xf32>
    %57 = arith.addf %55, %56 : vector<2x8x8xf32>
    %cst_34 = arith.constant dense<0xFF800000> : vector<2x8xf32>
    %58 = vector.multi_reduction <maximumf>, %57, %cst_34 [2] : vector<2x8x8xf32> to vector<2x8xf32>
    %59 = vector.shape_cast %58 : vector<2x8xf32> to vector<2x8x1xf32>
    %60 = vector.broadcast %59 : vector<2x8x1xf32> to vector<2x8x8xf32>
    %61 = arith.subf %57, %60 : vector<2x8x8xf32>
    %62 = math.exp %61 : vector<2x8x8xf32>
    %cst_35 = arith.constant dense<0.000000e+00> : vector<2x8xf32>
    %63 = vector.multi_reduction <add>, %62, %cst_35 [2] : vector<2x8x8xf32> to vector<2x8xf32>
    %64 = vector.shape_cast %63 : vector<2x8xf32> to vector<2x8x1xf32>
    %65 = tpu.reciprocal %64 {approx = true} : vector<2x8x1xf32> -> vector<2x8x1xf32>
    %66 = vector.broadcast %65 : vector<2x8x1xf32> to vector<2x8x8xf32>
    %67 = arith.mulf %62, %66 : vector<2x8x8xf32>
    %68 = vector.extract_strided_slice %50 {offsets = [0, 0, 0], sizes = [2, 8, 32], strides = [1, 1, 1]} : vector<2x8x64xf32> to vector<2x8x32xf32>
    "tpu.trace_start"() <{level = 10 : i32, message = "bqk,bkd->bqd"}> : () -> ()
    %cst_36 = arith.constant dense<0.000000e+00> : vector<2x8x32xf32>
    %69 = tpu.matmul %67, %68, %cst_36 {dimension_numbers = #tpu.dot_dimension_numbers<[2], [1], [1], [2], [0, 0, 0, 1, 1, 2], [0], [0]>} : vector<2x8x8xf32>, vector<2x8x32xf32>, vector<2x8x32xf32> -> vector<2x8x32xf32>
    "tpu.trace_stop"() : () -> ()
    %70 = vector.extract_strided_slice %46 {offsets = [0, 0, 32], sizes = [2, 8, 32], strides = [1, 1, 1]} : vector<2x8x64xf32> to vector<2x8x32xf32>
    %71 = vector.extract_strided_slice %48 {offsets = [0, 0, 32], sizes = [2, 8, 32], strides = [1, 1, 1]} : vector<2x8x64xf32> to vector<2x8x32xf32>
    "tpu.trace_start"() <{level = 10 : i32, message = "bqd,bkd->bqk"}> : () -> ()
    %cst_37 = arith.constant dense<0.000000e+00> : vector<2x8x8xf32>
    %72 = tpu.matmul %70, %71, %cst_37 {dimension_numbers = #tpu.dot_dimension_numbers<[2], [2], [1], [1], [0, 0, 0, 1, 1, 1], [0], [0]>} : vector<2x8x32xf32>, vector<2x8x32xf32>, vector<2x8x8xf32> -> vector<2x8x8xf32>
    "tpu.trace_stop"() : () -> ()
    %cst_38 = arith.constant 0.176776692 : f32
    %73 = vector.broadcast %cst_38 : f32 to vector<2x8x8xf32>
    %74 = arith.mulf %72, %73 : vector<2x8x8xf32>
    %75 = vector.broadcast %37 : vector<2x1x8xf32> to vector<2x8x8xf32>
    %76 = arith.addf %74, %75 : vector<2x8x8xf32>
    %cst_39 = arith.constant dense<0xFF800000> : vector<2x8xf32>
    %77 = vector.multi_reduction <maximumf>, %76, %cst_39 [2] : vector<2x8x8xf32> to vector<2x8xf32>
    %78 = vector.shape_cast %77 : vector<2x8xf32> to vector<2x8x1xf32>
    %79 = vector.broadcast %78 : vector<2x8x1xf32> to vector<2x8x8xf32>
    %80 = arith.subf %76, %79 : vector<2x8x8xf32>
    %81 = math.exp %80 : vector<2x8x8xf32>
    %cst_40 = arith.constant dense<0.000000e+00> : vector<2x8xf32>
    %82 = vector.multi_reduction <add>, %81, %cst_40 [2] : vector<2x8x8xf32> to vector<2x8xf32>
    %83 = vector.shape_cast %82 : vector<2x8xf32> to vector<2x8x1xf32>
    %84 = tpu.reciprocal %83 {approx = true} : vector<2x8x1xf32> -> vector<2x8x1xf32>
    %85 = vector.broadcast %84 : vector<2x8x1xf32> to vector<2x8x8xf32>
    %86 = arith.mulf %81, %85 : vector<2x8x8xf32>
    %87 = vector.extract_strided_slice %50 {offsets = [0, 0, 32], sizes = [2, 8, 32], strides = [1, 1, 1]} : vector<2x8x64xf32> to vector<2x8x32xf32>
    "tpu.trace_start"() <{level = 10 : i32, message = "bqk,bkd->bqd"}> : () -> ()
    %cst_41 = arith.constant dense<0.000000e+00> : vector<2x8x32xf32>
    %88 = tpu.matmul %86, %87, %cst_41 {dimension_numbers = #tpu.dot_dimension_numbers<[2], [1], [1], [2], [0, 0, 0, 1, 1, 2], [0], [0]>} : vector<2x8x8xf32>, vector<2x8x32xf32>, vector<2x8x32xf32> -> vector<2x8x32xf32>
    "tpu.trace_stop"() : () -> ()
    %89 = tpu.concatenate %69, %88 in 2 : vector<2x8x32xf32>, vector<2x8x32xf32> -> vector<2x8x64xf32>
    %90 = vector.shape_cast %89 : vector<2x8x64xf32> to vector<16x64xf32>
    %c0_42 = arith.constant 0 : index
    %c0_43 = arith.constant 0 : index
    %c0_44 = arith.constant 0 : index
    %91 = vector.load %arg12[%c0_42, %c0_43, %c0_44] : memref<3x64x64xf32, #tpu.memory_space<vmem>>, vector<1x64x64xf32>
    %92 = vector.shape_cast %91 : vector<1x64x64xf32> to vector<64x64xf32>
    %cst_45 = arith.constant dense<0.000000e+00> : vector<16x64xf32>
    %93 = tpu.matmul %90, %92, %cst_45 {dimension_numbers = #tpu.dot_dimension_numbers<[1], [0], [0], [1], [0, 0, 1, 1], [], []>} : vector<16x64xf32>, vector<64x64xf32>, vector<16x64xf32> -> vector<16x64xf32>
    %c0_46 = arith.constant 0 : index
    %c0_47 = arith.constant 0 : index
    %c0_48 = arith.constant 0 : index
    %94 = vector.load %arg13[%c0_46, %c0_47, %c0_48] : memref<3x1x64xf32, #tpu.memory_space<vmem>>, vector<1x1x64xf32>
    %95 = vector.shape_cast %94 : vector<1x1x64xf32> to vector<1x64xf32>
    %96 = vector.broadcast %95 : vector<1x64xf32> to vector<16x64xf32>
    %97 = arith.addf %93, %96 : vector<16x64xf32>
    %98 = arith.addf %31, %97 : vector<16x64xf32>
    %c0_49 = arith.constant 0 : index
    %c0_50 = arith.constant 0 : index
    %c0_51 = arith.constant 0 : index
    %99 = vector.load %arg14[%c0_49, %c0_50, %c0_51] : memref<3x1x64xf32, #tpu.memory_space<vmem>>, vector<1x1x64xf32>
    %100 = vector.shape_cast %99 : vector<1x1x64xf32> to vector<1x64xf32>
    %c0_52 = arith.constant 0 : index
    %c0_53 = arith.constant 0 : index
    %c0_54 = arith.constant 0 : index
    %101 = vector.load %arg15[%c0_52, %c0_53, %c0_54] : memref<3x1x64xf32, #tpu.memory_space<vmem>>, vector<1x1x64xf32>
    %102 = vector.shape_cast %101 : vector<1x1x64xf32> to vector<1x64xf32>
    %cst_55 = arith.constant dense<0.000000e+00> : vector<16xf32>
    %103 = vector.multi_reduction <add>, %98, %cst_55 [1] : vector<16x64xf32> to vector<16xf32>
    %104 = vector.shape_cast %103 : vector<16xf32> to vector<16x1xf32>
    %cst_56 = arith.constant 6.400000e+01 : f32
    %105 = vector.broadcast %cst_56 : f32 to vector<16x1xf32>
    %106 = arith.divf %104, %105 : vector<16x1xf32>
    %107 = vector.broadcast %106 : vector<16x1xf32> to vector<16x64xf32>
    %108 = arith.subf %98, %107 : vector<16x64xf32>
    %109 = arith.mulf %108, %108 : vector<16x64xf32>
    %cst_57 = arith.constant dense<0.000000e+00> : vector<16xf32>
    %110 = vector.multi_reduction <add>, %109, %cst_57 [1] : vector<16x64xf32> to vector<16xf32>
    %111 = vector.shape_cast %110 : vector<16xf32> to vector<16x1xf32>
    %cst_58 = arith.constant 6.400000e+01 : f32
    %112 = vector.broadcast %cst_58 : f32 to vector<16x1xf32>
    %113 = arith.divf %111, %112 : vector<16x1xf32>
    %114 = vector.broadcast %106 : vector<16x1xf32> to vector<16x64xf32>
    %115 = arith.subf %98, %114 : vector<16x64xf32>
    %cst_59 = arith.constant 9.99999974E-6 : f32
    %116 = vector.broadcast %cst_59 : f32 to vector<16x1xf32>
    %117 = arith.addf %113, %116 : vector<16x1xf32>
    %118 = math.rsqrt %117 : vector<16x1xf32>
    %119 = vector.broadcast %118 : vector<16x1xf32> to vector<16x64xf32>
    %120 = arith.mulf %115, %119 : vector<16x64xf32>
    %121 = vector.broadcast %100 : vector<1x64xf32> to vector<16x64xf32>
    %122 = arith.mulf %120, %121 : vector<16x64xf32>
    %123 = vector.broadcast %102 : vector<1x64xf32> to vector<16x64xf32>
    %124 = arith.addf %122, %123 : vector<16x64xf32>
    %c0_60 = arith.constant 0 : index
    %c0_61 = arith.constant 0 : index
    %c0_62 = arith.constant 0 : index
    %125 = vector.load %arg16[%c0_60, %c0_61, %c0_62] : memref<3x64x1024xf32, #tpu.memory_space<vmem>>, vector<1x64x1024xf32>
    %126 = vector.shape_cast %125 : vector<1x64x1024xf32> to vector<64x1024xf32>
    %cst_63 = arith.constant dense<0.000000e+00> : vector<16x1024xf32>
    %127 = tpu.matmul %124, %126, %cst_63 {dimension_numbers = #tpu.dot_dimension_numbers<[1], [0], [0], [1], [0, 0, 1, 1], [], []>} : vector<16x64xf32>, vector<64x1024xf32>, vector<16x1024xf32> -> vector<16x1024xf32>
    %c0_64 = arith.constant 0 : index
    %c0_65 = arith.constant 0 : index
    %c0_66 = arith.constant 0 : index
    %128 = vector.load %arg17[%c0_64, %c0_65, %c0_66] : memref<3x1x1024xf32, #tpu.memory_space<vmem>>, vector<1x1x1024xf32>
    %129 = vector.shape_cast %128 : vector<1x1x1024xf32> to vector<1x1024xf32>
    %130 = vector.broadcast %129 : vector<1x1024xf32> to vector<16x1024xf32>
    %131 = arith.addf %127, %130 : vector<16x1024xf32>
    %cst_67 = arith.constant 0.000000e+00 : f32
    %132 = vector.broadcast %cst_67 : f32 to vector<16x1024xf32>
    %133 = arith.maximumf %131, %132 : vector<16x1024xf32>
    %c0_68 = arith.constant 0 : index
    %c0_69 = arith.constant 0 : index
    %c0_70 = arith.constant 0 : index
    %134 = vector.load %arg18[%c0_68, %c0_69, %c0_70] : memref<3x1024x64xf32, #tpu.memory_space<vmem>>, vector<1x1024x64xf32>
    %135 = vector.shape_cast %134 : vector<1x1024x64xf32> to vector<1024x64xf32>
    %cst_71 = arith.constant dense<0.000000e+00> : vector<16x64xf32>
    %136 = tpu.matmul %133, %135, %cst_71 {dimension_numbers = #tpu.dot_dimension_numbers<[1], [0], [0], [1], [0, 0, 1, 1], [], []>} : vector<16x1024xf32>, vector<1024x64xf32>, vector<16x64xf32> -> vector<16x64xf32>
    %c0_72 = arith.constant 0 : index
    %c0_73 = arith.constant 0 : index
    %c0_74 = arith.constant 0 : index
    %137 = vector.load %arg19[%c0_72, %c0_73, %c0_74] : memref<3x1x64xf32, #tpu.memory_space<vmem>>, vector<1x1x64xf32>
    %138 = vector.shape_cast %137 : vector<1x1x64xf32> to vector<1x64xf32>
    %139 = vector.broadcast %138 : vector<1x64xf32> to vector<16x64xf32>
    %140 = arith.addf %136, %139 : vector<16x64xf32>
    %141 = arith.addf %124, %140 : vector<16x64xf32>
    %c0_75 = arith.constant 0 : index
    %c0_76 = arith.constant 0 : index
    %c0_77 = arith.constant 0 : index
    %142 = vector.load %arg20[%c0_75, %c0_76, %c0_77] : memref<3x1x64xf32, #tpu.memory_space<vmem>>, vector<1x1x64xf32>
    %143 = vector.shape_cast %142 : vector<1x1x64xf32> to vector<1x64xf32>
    %c0_78 = arith.constant 0 : index
    %c0_79 = arith.constant 0 : index
    %c0_80 = arith.constant 0 : index
    %144 = vector.load %arg21[%c0_78, %c0_79, %c0_80] : memref<3x1x64xf32, #tpu.memory_space<vmem>>, vector<1x1x64xf32>
    %145 = vector.shape_cast %144 : vector<1x1x64xf32> to vector<1x64xf32>
    %cst_81 = arith.constant dense<0.000000e+00> : vector<16xf32>
    %146 = vector.multi_reduction <add>, %141, %cst_81 [1] : vector<16x64xf32> to vector<16xf32>
    %147 = vector.shape_cast %146 : vector<16xf32> to vector<16x1xf32>
    %cst_82 = arith.constant 6.400000e+01 : f32
    %148 = vector.broadcast %cst_82 : f32 to vector<16x1xf32>
    %149 = arith.divf %147, %148 : vector<16x1xf32>
    %150 = vector.broadcast %149 : vector<16x1xf32> to vector<16x64xf32>
    %151 = arith.subf %141, %150 : vector<16x64xf32>
    %152 = arith.mulf %151, %151 : vector<16x64xf32>
    %cst_83 = arith.constant dense<0.000000e+00> : vector<16xf32>
    %153 = vector.multi_reduction <add>, %152, %cst_83 [1] : vector<16x64xf32> to vector<16xf32>
    %154 = vector.shape_cast %153 : vector<16xf32> to vector<16x1xf32>
    %cst_84 = arith.constant 6.400000e+01 : f32
    %155 = vector.broadcast %cst_84 : f32 to vector<16x1xf32>
    %156 = arith.divf %154, %155 : vector<16x1xf32>
    %157 = vector.broadcast %149 : vector<16x1xf32> to vector<16x64xf32>
    %158 = arith.subf %141, %157 : vector<16x64xf32>
    %cst_85 = arith.constant 9.99999974E-6 : f32
    %159 = vector.broadcast %cst_85 : f32 to vector<16x1xf32>
    %160 = arith.addf %156, %159 : vector<16x1xf32>
    %161 = math.rsqrt %160 : vector<16x1xf32>
    %162 = vector.broadcast %161 : vector<16x1xf32> to vector<16x64xf32>
    %163 = arith.mulf %158, %162 : vector<16x64xf32>
    %164 = vector.broadcast %143 : vector<1x64xf32> to vector<16x64xf32>
    %165 = arith.mulf %163, %164 : vector<16x64xf32>
    %166 = vector.broadcast %145 : vector<1x64xf32> to vector<16x64xf32>
    %167 = arith.addf %165, %166 : vector<16x64xf32>
    %c1 = arith.constant 1 : index
    %c0_86 = arith.constant 0 : index
    %c0_87 = arith.constant 0 : index
    %168 = vector.load %arg10[%c1, %c0_86, %c0_87] : memref<3x64x192xf32, #tpu.memory_space<vmem>>, vector<1x64x192xf32>
    %169 = vector.shape_cast %168 : vector<1x64x192xf32> to vector<64x192xf32>
    %cst_88 = arith.constant dense<0.000000e+00> : vector<16x192xf32>
    %170 = tpu.matmul %167, %169, %cst_88 {dimension_numbers = #tpu.dot_dimension_numbers<[1], [0], [0], [1], [0, 0, 1, 1], [], []>} : vector<16x64xf32>, vector<64x192xf32>, vector<16x192xf32> -> vector<16x192xf32>
    %c1_89 = arith.constant 1 : index
    %c0_90 = arith.constant 0 : index
    %c0_91 = arith.constant 0 : index
    %171 = vector.load %arg11[%c1_89, %c0_90, %c0_91] : memref<3x1x192xf32, #tpu.memory_space<vmem>>, vector<1x1x192xf32>
    %172 = vector.shape_cast %171 : vector<1x1x192xf32> to vector<1x192xf32>
    %173 = vector.broadcast %172 : vector<1x192xf32> to vector<16x192xf32>
    %174 = arith.addf %170, %173 : vector<16x192xf32>
    %175 = vector.extract_strided_slice %174 {offsets = [0, 0], sizes = [16, 64], strides = [1, 1]} : vector<16x192xf32> to vector<16x64xf32>
    %176 = vector.shape_cast %175 : vector<16x64xf32> to vector<2x8x64xf32>
    %177 = vector.extract_strided_slice %174 {offsets = [0, 64], sizes = [16, 64], strides = [1, 1]} : vector<16x192xf32> to vector<16x64xf32>
    %178 = vector.shape_cast %177 : vector<16x64xf32> to vector<2x8x64xf32>
    %179 = vector.extract_strided_slice %174 {offsets = [0, 128], sizes = [16, 64], strides = [1, 1]} : vector<16x192xf32> to vector<16x64xf32>
    %180 = vector.shape_cast %179 : vector<16x64xf32> to vector<2x8x64xf32>
    %181 = vector.extract_strided_slice %176 {offsets = [0, 0, 0], sizes = [2, 8, 32], strides = [1, 1, 1]} : vector<2x8x64xf32> to vector<2x8x32xf32>
    %182 = vector.extract_strided_slice %178 {offsets = [0, 0, 0], sizes = [2, 8, 32], strides = [1, 1, 1]} : vector<2x8x64xf32> to vector<2x8x32xf32>
    "tpu.trace_start"() <{level = 10 : i32, message = "bqd,bkd->bqk"}> : () -> ()
    %cst_92 = arith.constant dense<0.000000e+00> : vector<2x8x8xf32>
    %183 = tpu.matmul %181, %182, %cst_92 {dimension_numbers = #tpu.dot_dimension_numbers<[2], [2], [1], [1], [0, 0, 0, 1, 1, 1], [0], [0]>} : vector<2x8x32xf32>, vector<2x8x32xf32>, vector<2x8x8xf32> -> vector<2x8x8xf32>
    "tpu.trace_stop"() : () -> ()
    %cst_93 = arith.constant 0.176776692 : f32
    %184 = vector.broadcast %cst_93 : f32 to vector<2x8x8xf32>
    %185 = arith.mulf %183, %184 : vector<2x8x8xf32>
    %186 = vector.broadcast %37 : vector<2x1x8xf32> to vector<2x8x8xf32>
    %187 = arith.addf %185, %186 : vector<2x8x8xf32>
    %cst_94 = arith.constant dense<0xFF800000> : vector<2x8xf32>
    %188 = vector.multi_reduction <maximumf>, %187, %cst_94 [2] : vector<2x8x8xf32> to vector<2x8xf32>
    %189 = vector.shape_cast %188 : vector<2x8xf32> to vector<2x8x1xf32>
    %190 = vector.broadcast %189 : vector<2x8x1xf32> to vector<2x8x8xf32>
    %191 = arith.subf %187, %190 : vector<2x8x8xf32>
    %192 = math.exp %191 : vector<2x8x8xf32>
    %cst_95 = arith.constant dense<0.000000e+00> : vector<2x8xf32>
    %193 = vector.multi_reduction <add>, %192, %cst_95 [2] : vector<2x8x8xf32> to vector<2x8xf32>
    %194 = vector.shape_cast %193 : vector<2x8xf32> to vector<2x8x1xf32>
    %195 = tpu.reciprocal %194 {approx = true} : vector<2x8x1xf32> -> vector<2x8x1xf32>
    %196 = vector.broadcast %195 : vector<2x8x1xf32> to vector<2x8x8xf32>
    %197 = arith.mulf %192, %196 : vector<2x8x8xf32>
    %198 = vector.extract_strided_slice %180 {offsets = [0, 0, 0], sizes = [2, 8, 32], strides = [1, 1, 1]} : vector<2x8x64xf32> to vector<2x8x32xf32>
    "tpu.trace_start"() <{level = 10 : i32, message = "bqk,bkd->bqd"}> : () -> ()
    %cst_96 = arith.constant dense<0.000000e+00> : vector<2x8x32xf32>
    %199 = tpu.matmul %197, %198, %cst_96 {dimension_numbers = #tpu.dot_dimension_numbers<[2], [1], [1], [2], [0, 0, 0, 1, 1, 2], [0], [0]>} : vector<2x8x8xf32>, vector<2x8x32xf32>, vector<2x8x32xf32> -> vector<2x8x32xf32>
    "tpu.trace_stop"() : () -> ()
    %200 = vector.extract_strided_slice %176 {offsets = [0, 0, 32], sizes = [2, 8, 32], strides = [1, 1, 1]} : vector<2x8x64xf32> to vector<2x8x32xf32>
    %201 = vector.extract_strided_slice %178 {offsets = [0, 0, 32], sizes = [2, 8, 32], strides = [1, 1, 1]} : vector<2x8x64xf32> to vector<2x8x32xf32>
    "tpu.trace_start"() <{level = 10 : i32, message = "bqd,bkd->bqk"}> : () -> ()
    %cst_97 = arith.constant dense<0.000000e+00> : vector<2x8x8xf32>
    %202 = tpu.matmul %200, %201, %cst_97 {dimension_numbers = #tpu.dot_dimension_numbers<[2], [2], [1], [1], [0, 0, 0, 1, 1, 1], [0], [0]>} : vector<2x8x32xf32>, vector<2x8x32xf32>, vector<2x8x8xf32> -> vector<2x8x8xf32>
    "tpu.trace_stop"() : () -> ()
    %cst_98 = arith.constant 0.176776692 : f32
    %203 = vector.broadcast %cst_98 : f32 to vector<2x8x8xf32>
    %204 = arith.mulf %202, %203 : vector<2x8x8xf32>
    %205 = vector.broadcast %37 : vector<2x1x8xf32> to vector<2x8x8xf32>
    %206 = arith.addf %204, %205 : vector<2x8x8xf32>
    %cst_99 = arith.constant dense<0xFF800000> : vector<2x8xf32>
    %207 = vector.multi_reduction <maximumf>, %206, %cst_99 [2] : vector<2x8x8xf32> to vector<2x8xf32>
    %208 = vector.shape_cast %207 : vector<2x8xf32> to vector<2x8x1xf32>
    %209 = vector.broadcast %208 : vector<2x8x1xf32> to vector<2x8x8xf32>
    %210 = arith.subf %206, %209 : vector<2x8x8xf32>
    %211 = math.exp %210 : vector<2x8x8xf32>
    %cst_100 = arith.constant dense<0.000000e+00> : vector<2x8xf32>
    %212 = vector.multi_reduction <add>, %211, %cst_100 [2] : vector<2x8x8xf32> to vector<2x8xf32>
    %213 = vector.shape_cast %212 : vector<2x8xf32> to vector<2x8x1xf32>
    %214 = tpu.reciprocal %213 {approx = true} : vector<2x8x1xf32> -> vector<2x8x1xf32>
    %215 = vector.broadcast %214 : vector<2x8x1xf32> to vector<2x8x8xf32>
    %216 = arith.mulf %211, %215 : vector<2x8x8xf32>
    %217 = vector.extract_strided_slice %180 {offsets = [0, 0, 32], sizes = [2, 8, 32], strides = [1, 1, 1]} : vector<2x8x64xf32> to vector<2x8x32xf32>
    "tpu.trace_start"() <{level = 10 : i32, message = "bqk,bkd->bqd"}> : () -> ()
    %cst_101 = arith.constant dense<0.000000e+00> : vector<2x8x32xf32>
    %218 = tpu.matmul %216, %217, %cst_101 {dimension_numbers = #tpu.dot_dimension_numbers<[2], [1], [1], [2], [0, 0, 0, 1, 1, 2], [0], [0]>} : vector<2x8x8xf32>, vector<2x8x32xf32>, vector<2x8x32xf32> -> vector<2x8x32xf32>
    "tpu.trace_stop"() : () -> ()
    %219 = tpu.concatenate %199, %218 in 2 : vector<2x8x32xf32>, vector<2x8x32xf32> -> vector<2x8x64xf32>
    %220 = vector.shape_cast %219 : vector<2x8x64xf32> to vector<16x64xf32>
    %c1_102 = arith.constant 1 : index
    %c0_103 = arith.constant 0 : index
    %c0_104 = arith.constant 0 : index
    %221 = vector.load %arg12[%c1_102, %c0_103, %c0_104] : memref<3x64x64xf32, #tpu.memory_space<vmem>>, vector<1x64x64xf32>
    %222 = vector.shape_cast %221 : vector<1x64x64xf32> to vector<64x64xf32>
    %cst_105 = arith.constant dense<0.000000e+00> : vector<16x64xf32>
    %223 = tpu.matmul %220, %222, %cst_105 {dimension_numbers = #tpu.dot_dimension_numbers<[1], [0], [0], [1], [0, 0, 1, 1], [], []>} : vector<16x64xf32>, vector<64x64xf32>, vector<16x64xf32> -> vector<16x64xf32>
    %c1_106 = arith.constant 1 : index
    %c0_107 = arith.constant 0 : index
    %c0_108 = arith.constant 0 : index
    %224 = vector.load %arg13[%c1_106, %c0_107, %c0_108] : memref<3x1x64xf32, #tpu.memory_space<vmem>>, vector<1x1x64xf32>
    %225 = vector.shape_cast %224 : vector<1x1x64xf32> to vector<1x64xf32>
    %226 = vector.broadcast %225 : vector<1x64xf32> to vector<16x64xf32>
    %227 = arith.addf %223, %226 : vector<16x64xf32>
    %228 = arith.addf %167, %227 : vector<16x64xf32>
    %c1_109 = arith.constant 1 : index
    %c0_110 = arith.constant 0 : index
    %c0_111 = arith.constant 0 : index
    %229 = vector.load %arg14[%c1_109, %c0_110, %c0_111] : memref<3x1x64xf32, #tpu.memory_space<vmem>>, vector<1x1x64xf32>
    %230 = vector.shape_cast %229 : vector<1x1x64xf32> to vector<1x64xf32>
    %c1_112 = arith.constant 1 : index
    %c0_113 = arith.constant 0 : index
    %c0_114 = arith.constant 0 : index
    %231 = vector.load %arg15[%c1_112, %c0_113, %c0_114] : memref<3x1x64xf32, #tpu.memory_space<vmem>>, vector<1x1x64xf32>
    %232 = vector.shape_cast %231 : vector<1x1x64xf32> to vector<1x64xf32>
    %cst_115 = arith.constant dense<0.000000e+00> : vector<16xf32>
    %233 = vector.multi_reduction <add>, %228, %cst_115 [1] : vector<16x64xf32> to vector<16xf32>
    %234 = vector.shape_cast %233 : vector<16xf32> to vector<16x1xf32>
    %cst_116 = arith.constant 6.400000e+01 : f32
    %235 = vector.broadcast %cst_116 : f32 to vector<16x1xf32>
    %236 = arith.divf %234, %235 : vector<16x1xf32>
    %237 = vector.broadcast %236 : vector<16x1xf32> to vector<16x64xf32>
    %238 = arith.subf %228, %237 : vector<16x64xf32>
    %239 = arith.mulf %238, %238 : vector<16x64xf32>
    %cst_117 = arith.constant dense<0.000000e+00> : vector<16xf32>
    %240 = vector.multi_reduction <add>, %239, %cst_117 [1] : vector<16x64xf32> to vector<16xf32>
    %241 = vector.shape_cast %240 : vector<16xf32> to vector<16x1xf32>
    %cst_118 = arith.constant 6.400000e+01 : f32
    %242 = vector.broadcast %cst_118 : f32 to vector<16x1xf32>
    %243 = arith.divf %241, %242 : vector<16x1xf32>
    %244 = vector.broadcast %236 : vector<16x1xf32> to vector<16x64xf32>
    %245 = arith.subf %228, %244 : vector<16x64xf32>
    %cst_119 = arith.constant 9.99999974E-6 : f32
    %246 = vector.broadcast %cst_119 : f32 to vector<16x1xf32>
    %247 = arith.addf %243, %246 : vector<16x1xf32>
    %248 = math.rsqrt %247 : vector<16x1xf32>
    %249 = vector.broadcast %248 : vector<16x1xf32> to vector<16x64xf32>
    %250 = arith.mulf %245, %249 : vector<16x64xf32>
    %251 = vector.broadcast %230 : vector<1x64xf32> to vector<16x64xf32>
    %252 = arith.mulf %250, %251 : vector<16x64xf32>
    %253 = vector.broadcast %232 : vector<1x64xf32> to vector<16x64xf32>
    %254 = arith.addf %252, %253 : vector<16x64xf32>
    %c1_120 = arith.constant 1 : index
    %c0_121 = arith.constant 0 : index
    %c0_122 = arith.constant 0 : index
    %255 = vector.load %arg16[%c1_120, %c0_121, %c0_122] : memref<3x64x1024xf32, #tpu.memory_space<vmem>>, vector<1x64x1024xf32>
    %256 = vector.shape_cast %255 : vector<1x64x1024xf32> to vector<64x1024xf32>
    %cst_123 = arith.constant dense<0.000000e+00> : vector<16x1024xf32>
    %257 = tpu.matmul %254, %256, %cst_123 {dimension_numbers = #tpu.dot_dimension_numbers<[1], [0], [0], [1], [0, 0, 1, 1], [], []>} : vector<16x64xf32>, vector<64x1024xf32>, vector<16x1024xf32> -> vector<16x1024xf32>
    %c1_124 = arith.constant 1 : index
    %c0_125 = arith.constant 0 : index
    %c0_126 = arith.constant 0 : index
    %258 = vector.load %arg17[%c1_124, %c0_125, %c0_126] : memref<3x1x1024xf32, #tpu.memory_space<vmem>>, vector<1x1x1024xf32>
    %259 = vector.shape_cast %258 : vector<1x1x1024xf32> to vector<1x1024xf32>
    %260 = vector.broadcast %259 : vector<1x1024xf32> to vector<16x1024xf32>
    %261 = arith.addf %257, %260 : vector<16x1024xf32>
    %cst_127 = arith.constant 0.000000e+00 : f32
    %262 = vector.broadcast %cst_127 : f32 to vector<16x1024xf32>
    %263 = arith.maximumf %261, %262 : vector<16x1024xf32>
    %c1_128 = arith.constant 1 : index
    %c0_129 = arith.constant 0 : index
    %c0_130 = arith.constant 0 : index
    %264 = vector.load %arg18[%c1_128, %c0_129, %c0_130] : memref<3x1024x64xf32, #tpu.memory_space<vmem>>, vector<1x1024x64xf32>
    %265 = vector.shape_cast %264 : vector<1x1024x64xf32> to vector<1024x64xf32>
    %cst_131 = arith.constant dense<0.000000e+00> : vector<16x64xf32>
    %266 = tpu.matmul %263, %265, %cst_131 {dimension_numbers = #tpu.dot_dimension_numbers<[1], [0], [0], [1], [0, 0, 1, 1], [], []>} : vector<16x1024xf32>, vector<1024x64xf32>, vector<16x64xf32> -> vector<16x64xf32>
    %c1_132 = arith.constant 1 : index
    %c0_133 = arith.constant 0 : index
    %c0_134 = arith.constant 0 : index
    %267 = vector.load %arg19[%c1_132, %c0_133, %c0_134] : memref<3x1x64xf32, #tpu.memory_space<vmem>>, vector<1x1x64xf32>
    %268 = vector.shape_cast %267 : vector<1x1x64xf32> to vector<1x64xf32>
    %269 = vector.broadcast %268 : vector<1x64xf32> to vector<16x64xf32>
    %270 = arith.addf %266, %269 : vector<16x64xf32>
    %271 = arith.addf %254, %270 : vector<16x64xf32>
    %c1_135 = arith.constant 1 : index
    %c0_136 = arith.constant 0 : index
    %c0_137 = arith.constant 0 : index
    %272 = vector.load %arg20[%c1_135, %c0_136, %c0_137] : memref<3x1x64xf32, #tpu.memory_space<vmem>>, vector<1x1x64xf32>
    %273 = vector.shape_cast %272 : vector<1x1x64xf32> to vector<1x64xf32>
    %c1_138 = arith.constant 1 : index
    %c0_139 = arith.constant 0 : index
    %c0_140 = arith.constant 0 : index
    %274 = vector.load %arg21[%c1_138, %c0_139, %c0_140] : memref<3x1x64xf32, #tpu.memory_space<vmem>>, vector<1x1x64xf32>
    %275 = vector.shape_cast %274 : vector<1x1x64xf32> to vector<1x64xf32>
    %cst_141 = arith.constant dense<0.000000e+00> : vector<16xf32>
    %276 = vector.multi_reduction <add>, %271, %cst_141 [1] : vector<16x64xf32> to vector<16xf32>
    %277 = vector.shape_cast %276 : vector<16xf32> to vector<16x1xf32>
    %cst_142 = arith.constant 6.400000e+01 : f32
    %278 = vector.broadcast %cst_142 : f32 to vector<16x1xf32>
    %279 = arith.divf %277, %278 : vector<16x1xf32>
    %280 = vector.broadcast %279 : vector<16x1xf32> to vector<16x64xf32>
    %281 = arith.subf %271, %280 : vector<16x64xf32>
    %282 = arith.mulf %281, %281 : vector<16x64xf32>
    %cst_143 = arith.constant dense<0.000000e+00> : vector<16xf32>
    %283 = vector.multi_reduction <add>, %282, %cst_143 [1] : vector<16x64xf32> to vector<16xf32>
    %284 = vector.shape_cast %283 : vector<16xf32> to vector<16x1xf32>
    %cst_144 = arith.constant 6.400000e+01 : f32
    %285 = vector.broadcast %cst_144 : f32 to vector<16x1xf32>
    %286 = arith.divf %284, %285 : vector<16x1xf32>
    %287 = vector.broadcast %279 : vector<16x1xf32> to vector<16x64xf32>
    %288 = arith.subf %271, %287 : vector<16x64xf32>
    %cst_145 = arith.constant 9.99999974E-6 : f32
    %289 = vector.broadcast %cst_145 : f32 to vector<16x1xf32>
    %290 = arith.addf %286, %289 : vector<16x1xf32>
    %291 = math.rsqrt %290 : vector<16x1xf32>
    %292 = vector.broadcast %291 : vector<16x1xf32> to vector<16x64xf32>
    %293 = arith.mulf %288, %292 : vector<16x64xf32>
    %294 = vector.broadcast %273 : vector<1x64xf32> to vector<16x64xf32>
    %295 = arith.mulf %293, %294 : vector<16x64xf32>
    %296 = vector.broadcast %275 : vector<1x64xf32> to vector<16x64xf32>
    %297 = arith.addf %295, %296 : vector<16x64xf32>
    %c2 = arith.constant 2 : index
    %c0_146 = arith.constant 0 : index
    %c0_147 = arith.constant 0 : index
    %298 = vector.load %arg10[%c2, %c0_146, %c0_147] : memref<3x64x192xf32, #tpu.memory_space<vmem>>, vector<1x64x192xf32>
    %299 = vector.shape_cast %298 : vector<1x64x192xf32> to vector<64x192xf32>
    %cst_148 = arith.constant dense<0.000000e+00> : vector<16x192xf32>
    %300 = tpu.matmul %297, %299, %cst_148 {dimension_numbers = #tpu.dot_dimension_numbers<[1], [0], [0], [1], [0, 0, 1, 1], [], []>} : vector<16x64xf32>, vector<64x192xf32>, vector<16x192xf32> -> vector<16x192xf32>
    %c2_149 = arith.constant 2 : index
    %c0_150 = arith.constant 0 : index
    %c0_151 = arith.constant 0 : index
    %301 = vector.load %arg11[%c2_149, %c0_150, %c0_151] : memref<3x1x192xf32, #tpu.memory_space<vmem>>, vector<1x1x192xf32>
    %302 = vector.shape_cast %301 : vector<1x1x192xf32> to vector<1x192xf32>
    %303 = vector.broadcast %302 : vector<1x192xf32> to vector<16x192xf32>
    %304 = arith.addf %300, %303 : vector<16x192xf32>
    %305 = vector.extract_strided_slice %304 {offsets = [0, 0], sizes = [16, 64], strides = [1, 1]} : vector<16x192xf32> to vector<16x64xf32>
    %306 = vector.shape_cast %305 : vector<16x64xf32> to vector<2x8x64xf32>
    %307 = vector.extract_strided_slice %304 {offsets = [0, 64], sizes = [16, 64], strides = [1, 1]} : vector<16x192xf32> to vector<16x64xf32>
    %308 = vector.shape_cast %307 : vector<16x64xf32> to vector<2x8x64xf32>
    %309 = vector.extract_strided_slice %304 {offsets = [0, 128], sizes = [16, 64], strides = [1, 1]} : vector<16x192xf32> to vector<16x64xf32>
    %310 = vector.shape_cast %309 : vector<16x64xf32> to vector<2x8x64xf32>
    %311 = vector.extract_strided_slice %306 {offsets = [0, 0, 0], sizes = [2, 8, 32], strides = [1, 1, 1]} : vector<2x8x64xf32> to vector<2x8x32xf32>
    %312 = vector.extract_strided_slice %308 {offsets = [0, 0, 0], sizes = [2, 8, 32], strides = [1, 1, 1]} : vector<2x8x64xf32> to vector<2x8x32xf32>
    "tpu.trace_start"() <{level = 10 : i32, message = "bqd,bkd->bqk"}> : () -> ()
    %cst_152 = arith.constant dense<0.000000e+00> : vector<2x8x8xf32>
    %313 = tpu.matmul %311, %312, %cst_152 {dimension_numbers = #tpu.dot_dimension_numbers<[2], [2], [1], [1], [0, 0, 0, 1, 1, 1], [0], [0]>} : vector<2x8x32xf32>, vector<2x8x32xf32>, vector<2x8x8xf32> -> vector<2x8x8xf32>
    "tpu.trace_stop"() : () -> ()
    %cst_153 = arith.constant 0.176776692 : f32
    %314 = vector.broadcast %cst_153 : f32 to vector<2x8x8xf32>
    %315 = arith.mulf %313, %314 : vector<2x8x8xf32>
    %316 = vector.broadcast %37 : vector<2x1x8xf32> to vector<2x8x8xf32>
    %317 = arith.addf %315, %316 : vector<2x8x8xf32>
    %cst_154 = arith.constant dense<0xFF800000> : vector<2x8xf32>
    %318 = vector.multi_reduction <maximumf>, %317, %cst_154 [2] : vector<2x8x8xf32> to vector<2x8xf32>
    %319 = vector.shape_cast %318 : vector<2x8xf32> to vector<2x8x1xf32>
    %320 = vector.broadcast %319 : vector<2x8x1xf32> to vector<2x8x8xf32>
    %321 = arith.subf %317, %320 : vector<2x8x8xf32>
    %322 = math.exp %321 : vector<2x8x8xf32>
    %cst_155 = arith.constant dense<0.000000e+00> : vector<2x8xf32>
    %323 = vector.multi_reduction <add>, %322, %cst_155 [2] : vector<2x8x8xf32> to vector<2x8xf32>
    %324 = vector.shape_cast %323 : vector<2x8xf32> to vector<2x8x1xf32>
    %325 = tpu.reciprocal %324 {approx = true} : vector<2x8x1xf32> -> vector<2x8x1xf32>
    %326 = vector.broadcast %325 : vector<2x8x1xf32> to vector<2x8x8xf32>
    %327 = arith.mulf %322, %326 : vector<2x8x8xf32>
    %328 = vector.extract_strided_slice %310 {offsets = [0, 0, 0], sizes = [2, 8, 32], strides = [1, 1, 1]} : vector<2x8x64xf32> to vector<2x8x32xf32>
    "tpu.trace_start"() <{level = 10 : i32, message = "bqk,bkd->bqd"}> : () -> ()
    %cst_156 = arith.constant dense<0.000000e+00> : vector<2x8x32xf32>
    %329 = tpu.matmul %327, %328, %cst_156 {dimension_numbers = #tpu.dot_dimension_numbers<[2], [1], [1], [2], [0, 0, 0, 1, 1, 2], [0], [0]>} : vector<2x8x8xf32>, vector<2x8x32xf32>, vector<2x8x32xf32> -> vector<2x8x32xf32>
    "tpu.trace_stop"() : () -> ()
    %330 = vector.extract_strided_slice %306 {offsets = [0, 0, 32], sizes = [2, 8, 32], strides = [1, 1, 1]} : vector<2x8x64xf32> to vector<2x8x32xf32>
    %331 = vector.extract_strided_slice %308 {offsets = [0, 0, 32], sizes = [2, 8, 32], strides = [1, 1, 1]} : vector<2x8x64xf32> to vector<2x8x32xf32>
    "tpu.trace_start"() <{level = 10 : i32, message = "bqd,bkd->bqk"}> : () -> ()
    %cst_157 = arith.constant dense<0.000000e+00> : vector<2x8x8xf32>
    %332 = tpu.matmul %330, %331, %cst_157 {dimension_numbers = #tpu.dot_dimension_numbers<[2], [2], [1], [1], [0, 0, 0, 1, 1, 1], [0], [0]>} : vector<2x8x32xf32>, vector<2x8x32xf32>, vector<2x8x8xf32> -> vector<2x8x8xf32>
    "tpu.trace_stop"() : () -> ()
    %cst_158 = arith.constant 0.176776692 : f32
    %333 = vector.broadcast %cst_158 : f32 to vector<2x8x8xf32>
    %334 = arith.mulf %332, %333 : vector<2x8x8xf32>
    %335 = vector.broadcast %37 : vector<2x1x8xf32> to vector<2x8x8xf32>
    %336 = arith.addf %334, %335 : vector<2x8x8xf32>
    %cst_159 = arith.constant dense<0xFF800000> : vector<2x8xf32>
    %337 = vector.multi_reduction <maximumf>, %336, %cst_159 [2] : vector<2x8x8xf32> to vector<2x8xf32>
    %338 = vector.shape_cast %337 : vector<2x8xf32> to vector<2x8x1xf32>
    %339 = vector.broadcast %338 : vector<2x8x1xf32> to vector<2x8x8xf32>
    %340 = arith.subf %336, %339 : vector<2x8x8xf32>
    %341 = math.exp %340 : vector<2x8x8xf32>
    %cst_160 = arith.constant dense<0.000000e+00> : vector<2x8xf32>
    %342 = vector.multi_reduction <add>, %341, %cst_160 [2] : vector<2x8x8xf32> to vector<2x8xf32>
    %343 = vector.shape_cast %342 : vector<2x8xf32> to vector<2x8x1xf32>
    %344 = tpu.reciprocal %343 {approx = true} : vector<2x8x1xf32> -> vector<2x8x1xf32>
    %345 = vector.broadcast %344 : vector<2x8x1xf32> to vector<2x8x8xf32>
    %346 = arith.mulf %341, %345 : vector<2x8x8xf32>
    %347 = vector.extract_strided_slice %310 {offsets = [0, 0, 32], sizes = [2, 8, 32], strides = [1, 1, 1]} : vector<2x8x64xf32> to vector<2x8x32xf32>
    "tpu.trace_start"() <{level = 10 : i32, message = "bqk,bkd->bqd"}> : () -> ()
    %cst_161 = arith.constant dense<0.000000e+00> : vector<2x8x32xf32>
    %348 = tpu.matmul %346, %347, %cst_161 {dimension_numbers = #tpu.dot_dimension_numbers<[2], [1], [1], [2], [0, 0, 0, 1, 1, 2], [0], [0]>} : vector<2x8x8xf32>, vector<2x8x32xf32>, vector<2x8x32xf32> -> vector<2x8x32xf32>
    "tpu.trace_stop"() : () -> ()
    %349 = tpu.concatenate %329, %348 in 2 : vector<2x8x32xf32>, vector<2x8x32xf32> -> vector<2x8x64xf32>
    %350 = vector.shape_cast %349 : vector<2x8x64xf32> to vector<16x64xf32>
    %c2_162 = arith.constant 2 : index
    %c0_163 = arith.constant 0 : index
    %c0_164 = arith.constant 0 : index
    %351 = vector.load %arg12[%c2_162, %c0_163, %c0_164] : memref<3x64x64xf32, #tpu.memory_space<vmem>>, vector<1x64x64xf32>
    %352 = vector.shape_cast %351 : vector<1x64x64xf32> to vector<64x64xf32>
    %cst_165 = arith.constant dense<0.000000e+00> : vector<16x64xf32>
    %353 = tpu.matmul %350, %352, %cst_165 {dimension_numbers = #tpu.dot_dimension_numbers<[1], [0], [0], [1], [0, 0, 1, 1], [], []>} : vector<16x64xf32>, vector<64x64xf32>, vector<16x64xf32> -> vector<16x64xf32>
    %c2_166 = arith.constant 2 : index
    %c0_167 = arith.constant 0 : index
    %c0_168 = arith.constant 0 : index
    %354 = vector.load %arg13[%c2_166, %c0_167, %c0_168] : memref<3x1x64xf32, #tpu.memory_space<vmem>>, vector<1x1x64xf32>
    %355 = vector.shape_cast %354 : vector<1x1x64xf32> to vector<1x64xf32>
    %356 = vector.broadcast %355 : vector<1x64xf32> to vector<16x64xf32>
    %357 = arith.addf %353, %356 : vector<16x64xf32>
    %358 = arith.addf %297, %357 : vector<16x64xf32>
    %c2_169 = arith.constant 2 : index
    %c0_170 = arith.constant 0 : index
    %c0_171 = arith.constant 0 : index
    %359 = vector.load %arg14[%c2_169, %c0_170, %c0_171] : memref<3x1x64xf32, #tpu.memory_space<vmem>>, vector<1x1x64xf32>
    %360 = vector.shape_cast %359 : vector<1x1x64xf32> to vector<1x64xf32>
    %c2_172 = arith.constant 2 : index
    %c0_173 = arith.constant 0 : index
    %c0_174 = arith.constant 0 : index
    %361 = vector.load %arg15[%c2_172, %c0_173, %c0_174] : memref<3x1x64xf32, #tpu.memory_space<vmem>>, vector<1x1x64xf32>
    %362 = vector.shape_cast %361 : vector<1x1x64xf32> to vector<1x64xf32>
    %cst_175 = arith.constant dense<0.000000e+00> : vector<16xf32>
    %363 = vector.multi_reduction <add>, %358, %cst_175 [1] : vector<16x64xf32> to vector<16xf32>
    %364 = vector.shape_cast %363 : vector<16xf32> to vector<16x1xf32>
    %cst_176 = arith.constant 6.400000e+01 : f32
    %365 = vector.broadcast %cst_176 : f32 to vector<16x1xf32>
    %366 = arith.divf %364, %365 : vector<16x1xf32>
    %367 = vector.broadcast %366 : vector<16x1xf32> to vector<16x64xf32>
    %368 = arith.subf %358, %367 : vector<16x64xf32>
    %369 = arith.mulf %368, %368 : vector<16x64xf32>
    %cst_177 = arith.constant dense<0.000000e+00> : vector<16xf32>
    %370 = vector.multi_reduction <add>, %369, %cst_177 [1] : vector<16x64xf32> to vector<16xf32>
    %371 = vector.shape_cast %370 : vector<16xf32> to vector<16x1xf32>
    %cst_178 = arith.constant 6.400000e+01 : f32
    %372 = vector.broadcast %cst_178 : f32 to vector<16x1xf32>
    %373 = arith.divf %371, %372 : vector<16x1xf32>
    %374 = vector.broadcast %366 : vector<16x1xf32> to vector<16x64xf32>
    %375 = arith.subf %358, %374 : vector<16x64xf32>
    %cst_179 = arith.constant 9.99999974E-6 : f32
    %376 = vector.broadcast %cst_179 : f32 to vector<16x1xf32>
    %377 = arith.addf %373, %376 : vector<16x1xf32>
    %378 = math.rsqrt %377 : vector<16x1xf32>
    %379 = vector.broadcast %378 : vector<16x1xf32> to vector<16x64xf32>
    %380 = arith.mulf %375, %379 : vector<16x64xf32>
    %381 = vector.broadcast %360 : vector<1x64xf32> to vector<16x64xf32>
    %382 = arith.mulf %380, %381 : vector<16x64xf32>
    %383 = vector.broadcast %362 : vector<1x64xf32> to vector<16x64xf32>
    %384 = arith.addf %382, %383 : vector<16x64xf32>
    %c2_180 = arith.constant 2 : index
    %c0_181 = arith.constant 0 : index
    %c0_182 = arith.constant 0 : index
    %385 = vector.load %arg16[%c2_180, %c0_181, %c0_182] : memref<3x64x1024xf32, #tpu.memory_space<vmem>>, vector<1x64x1024xf32>
    %386 = vector.shape_cast %385 : vector<1x64x1024xf32> to vector<64x1024xf32>
    %cst_183 = arith.constant dense<0.000000e+00> : vector<16x1024xf32>
    %387 = tpu.matmul %384, %386, %cst_183 {dimension_numbers = #tpu.dot_dimension_numbers<[1], [0], [0], [1], [0, 0, 1, 1], [], []>} : vector<16x64xf32>, vector<64x1024xf32>, vector<16x1024xf32> -> vector<16x1024xf32>
    %c2_184 = arith.constant 2 : index
    %c0_185 = arith.constant 0 : index
    %c0_186 = arith.constant 0 : index
    %388 = vector.load %arg17[%c2_184, %c0_185, %c0_186] : memref<3x1x1024xf32, #tpu.memory_space<vmem>>, vector<1x1x1024xf32>
    %389 = vector.shape_cast %388 : vector<1x1x1024xf32> to vector<1x1024xf32>
    %390 = vector.broadcast %389 : vector<1x1024xf32> to vector<16x1024xf32>
    %391 = arith.addf %387, %390 : vector<16x1024xf32>
    %cst_187 = arith.constant 0.000000e+00 : f32
    %392 = vector.broadcast %cst_187 : f32 to vector<16x1024xf32>
    %393 = arith.maximumf %391, %392 : vector<16x1024xf32>
    %c2_188 = arith.constant 2 : index
    %c0_189 = arith.constant 0 : index
    %c0_190 = arith.constant 0 : index
    %394 = vector.load %arg18[%c2_188, %c0_189, %c0_190] : memref<3x1024x64xf32, #tpu.memory_space<vmem>>, vector<1x1024x64xf32>
    %395 = vector.shape_cast %394 : vector<1x1024x64xf32> to vector<1024x64xf32>
    %cst_191 = arith.constant dense<0.000000e+00> : vector<16x64xf32>
    %396 = tpu.matmul %393, %395, %cst_191 {dimension_numbers = #tpu.dot_dimension_numbers<[1], [0], [0], [1], [0, 0, 1, 1], [], []>} : vector<16x1024xf32>, vector<1024x64xf32>, vector<16x64xf32> -> vector<16x64xf32>
    %c2_192 = arith.constant 2 : index
    %c0_193 = arith.constant 0 : index
    %c0_194 = arith.constant 0 : index
    %397 = vector.load %arg19[%c2_192, %c0_193, %c0_194] : memref<3x1x64xf32, #tpu.memory_space<vmem>>, vector<1x1x64xf32>
    %398 = vector.shape_cast %397 : vector<1x1x64xf32> to vector<1x64xf32>
    %399 = vector.broadcast %398 : vector<1x64xf32> to vector<16x64xf32>
    %400 = arith.addf %396, %399 : vector<16x64xf32>
    %401 = arith.addf %384, %400 : vector<16x64xf32>
    %c2_195 = arith.constant 2 : index
    %c0_196 = arith.constant 0 : index
    %c0_197 = arith.constant 0 : index
    %402 = vector.load %arg20[%c2_195, %c0_196, %c0_197] : memref<3x1x64xf32, #tpu.memory_space<vmem>>, vector<1x1x64xf32>
    %403 = vector.shape_cast %402 : vector<1x1x64xf32> to vector<1x64xf32>
    %c2_198 = arith.constant 2 : index
    %c0_199 = arith.constant 0 : index
    %c0_200 = arith.constant 0 : index
    %404 = vector.load %arg21[%c2_198, %c0_199, %c0_200] : memref<3x1x64xf32, #tpu.memory_space<vmem>>, vector<1x1x64xf32>
    %405 = vector.shape_cast %404 : vector<1x1x64xf32> to vector<1x64xf32>
    %cst_201 = arith.constant dense<0.000000e+00> : vector<16xf32>
    %406 = vector.multi_reduction <add>, %401, %cst_201 [1] : vector<16x64xf32> to vector<16xf32>
    %407 = vector.shape_cast %406 : vector<16xf32> to vector<16x1xf32>
    %cst_202 = arith.constant 6.400000e+01 : f32
    %408 = vector.broadcast %cst_202 : f32 to vector<16x1xf32>
    %409 = arith.divf %407, %408 : vector<16x1xf32>
    %410 = vector.broadcast %409 : vector<16x1xf32> to vector<16x64xf32>
    %411 = arith.subf %401, %410 : vector<16x64xf32>
    %412 = arith.mulf %411, %411 : vector<16x64xf32>
    %cst_203 = arith.constant dense<0.000000e+00> : vector<16xf32>
    %413 = vector.multi_reduction <add>, %412, %cst_203 [1] : vector<16x64xf32> to vector<16xf32>
    %414 = vector.shape_cast %413 : vector<16xf32> to vector<16x1xf32>
    %cst_204 = arith.constant 6.400000e+01 : f32
    %415 = vector.broadcast %cst_204 : f32 to vector<16x1xf32>
    %416 = arith.divf %414, %415 : vector<16x1xf32>
    %417 = vector.broadcast %409 : vector<16x1xf32> to vector<16x64xf32>
    %418 = arith.subf %401, %417 : vector<16x64xf32>
    %cst_205 = arith.constant 9.99999974E-6 : f32
    %419 = vector.broadcast %cst_205 : f32 to vector<16x1xf32>
    %420 = arith.addf %416, %419 : vector<16x1xf32>
    %421 = math.rsqrt %420 : vector<16x1xf32>
    %422 = vector.broadcast %421 : vector<16x1xf32> to vector<16x64xf32>
    %423 = arith.mulf %418, %422 : vector<16x64xf32>
    %424 = vector.broadcast %403 : vector<1x64xf32> to vector<16x64xf32>
    %425 = arith.mulf %423, %424 : vector<16x64xf32>
    %426 = vector.broadcast %405 : vector<1x64xf32> to vector<16x64xf32>
    %427 = arith.addf %425, %426 : vector<16x64xf32>
    %c0_206 = arith.constant 0 : index
    %c0_207 = arith.constant 0 : index
    %428 = vector.load %arg22[%c0_206, %c0_207] : memref<64x64xf32, #tpu.memory_space<vmem>>, vector<64x64xf32>
    %cst_208 = arith.constant dense<0.000000e+00> : vector<16x64xf32>
    %429 = tpu.matmul %427, %428, %cst_208 {dimension_numbers = #tpu.dot_dimension_numbers<[1], [0], [0], [1], [0, 0, 1, 1], [], []>} : vector<16x64xf32>, vector<64x64xf32>, vector<16x64xf32> -> vector<16x64xf32>
    %c0_209 = arith.constant 0 : index
    %c0_210 = arith.constant 0 : index
    %430 = vector.load %arg23[%c0_209, %c0_210] : memref<1x64xf32, #tpu.memory_space<vmem>>, vector<1x64xf32>
    %431 = vector.broadcast %430 : vector<1x64xf32> to vector<16x64xf32>
    %432 = arith.addf %429, %431 : vector<16x64xf32>
    %cst_211 = arith.constant 0.000000e+00 : f32
    %433 = vector.broadcast %cst_211 : f32 to vector<16x64xf32>
    %434 = arith.maximumf %432, %433 : vector<16x64xf32>
    %c0_212 = arith.constant 0 : index
    %c0_213 = arith.constant 0 : index
    %435 = vector.load %arg24[%c0_212, %c0_213] : memref<64x64xf32, #tpu.memory_space<vmem>>, vector<64x64xf32>
    %cst_214 = arith.constant dense<0.000000e+00> : vector<16x64xf32>
    %436 = tpu.matmul %434, %435, %cst_214 {dimension_numbers = #tpu.dot_dimension_numbers<[1], [0], [0], [1], [0, 0, 1, 1], [], []>} : vector<16x64xf32>, vector<64x64xf32>, vector<16x64xf32> -> vector<16x64xf32>
    %c0_215 = arith.constant 0 : index
    %c0_216 = arith.constant 0 : index
    %437 = vector.load %arg25[%c0_215, %c0_216] : memref<1x64xf32, #tpu.memory_space<vmem>>, vector<1x64xf32>
    %438 = vector.broadcast %437 : vector<1x64xf32> to vector<16x64xf32>
    %439 = arith.addf %436, %438 : vector<16x64xf32>
    %cst_217 = arith.constant 0.000000e+00 : f32
    %440 = vector.broadcast %cst_217 : f32 to vector<16x64xf32>
    %441 = arith.maximumf %439, %440 : vector<16x64xf32>
    %c0_218 = arith.constant 0 : index
    %c0_219 = arith.constant 0 : index
    %442 = vector.load %arg26[%c0_218, %c0_219] : memref<64x128xf32, #tpu.memory_space<vmem>>, vector<64x128xf32>
    %cst_220 = arith.constant dense<0.000000e+00> : vector<16x128xf32>
    %443 = tpu.matmul %441, %442, %cst_220 {dimension_numbers = #tpu.dot_dimension_numbers<[1], [0], [0], [1], [0, 0, 1, 1], [], []>} : vector<16x64xf32>, vector<64x128xf32>, vector<16x128xf32> -> vector<16x128xf32>
    %c0_221 = arith.constant 0 : index
    %c0_222 = arith.constant 0 : index
    %444 = vector.load %arg27[%c0_221, %c0_222] : memref<1x128xf32, #tpu.memory_space<vmem>>, vector<1x128xf32>
    %445 = vector.broadcast %444 : vector<1x128xf32> to vector<16x128xf32>
    %446 = arith.addf %443, %445 : vector<16x128xf32>
    %447 = vector.shape_cast %446 : vector<16x128xf32> to vector<2x8x128xf32>
    %c0_223 = arith.constant 0 : index
    %c0_224 = arith.constant 0 : index
    %c0_225 = arith.constant 0 : index
    %448 = vector.load %arg28[%c0_223, %c0_224, %c0_225] : memref<2x8x128xf32, #tpu.memory_space<vmem>>, vector<2x8x128xf32>
    tpu.vector_store %arg28[%c0_223, %c0_224, %c0_225], %447 {strides = array<i32>} : memref<2x8x128xf32, #tpu.memory_space<vmem>>, vector<2x8x128xf32>,
    return
  }
  func.func @transform_0(%arg0: i32) -> (i32, i32, i32) {
    %c0_i32 = arith.constant 0 : i32
    %c0_i32_0 = arith.constant 0 : i32
    %c0_i32_1 = arith.constant 0 : i32
    return %arg0, %c0_i32, %c0_i32_0 : i32, i32, i32
  }
  func.func @transform_1(%arg0: i32) -> (i32, i32, i32) {
    %c0_i32 = arith.constant 0 : i32
    %c0_i32_0 = arith.constant 0 : i32
    %c0_i32_1 = arith.constant 0 : i32
    return %arg0, %c0_i32, %c0_i32_0 : i32, i32, i32
  }
  func.func @transform_2(%arg0: i32) -> (i32, i32, i32) {
    %c0_i32 = arith.constant 0 : i32
    %c0_i32_0 = arith.constant 0 : i32
    %c0_i32_1 = arith.constant 0 : i32
    return %arg0, %c0_i32, %c0_i32_0 : i32, i32, i32
  }
  func.func @transform_3(%arg0: i32) -> (i32, i32, i32) {
    %c0_i32 = arith.constant 0 : i32
    %c0_i32_0 = arith.constant 0 : i32
    %c0_i32_1 = arith.constant 0 : i32
    return %arg0, %c0_i32, %c0_i32_0 : i32, i32, i32
  }
  func.func @transform_4(%arg0: i32) -> (i32, i32) {
    %c0_i32 = arith.constant 0 : i32
    %c0_i32_0 = arith.constant 0 : i32
    %c0_i32_1 = arith.constant 0 : i32
    return %c0_i32, %c0_i32_0 : i32, i32
  }
  func.func @transform_5(%arg0: i32) -> (i32, i32) {
    %c0_i32 = arith.constant 0 : i32
    %c0_i32_0 = arith.constant 0 : i32
    %c0_i32_1 = arith.constant 0 : i32
    return %c0_i32, %c0_i32_0 : i32, i32
  }
  func.func @transform_6(%arg0: i32) -> (i32, i32) {
    %c0_i32 = arith.constant 0 : i32
    %c0_i32_0 = arith.constant 0 : i32
    %c0_i32_1 = arith.constant 0 : i32
    return %c0_i32, %c0_i32_0 : i32, i32
  }
  func.func @transform_7(%arg0: i32) -> (i32, i32) {
    %c0_i32 = arith.constant 0 : i32
    %c0_i32_0 = arith.constant 0 : i32
    %c0_i32_1 = arith.constant 0 : i32
    return %c0_i32, %c0_i32_0 : i32, i32
  }
  func.func @transform_8(%arg0: i32) -> (i32, i32) {
    %c0_i32 = arith.constant 0 : i32
    %c0_i32_0 = arith.constant 0 : i32
    %c0_i32_1 = arith.constant 0 : i32
    return %c0_i32, %c0_i32_0 : i32, i32
  }
  func.func @transform_9(%arg0: i32) -> (i32, i32, i32) {
    %c0_i32 = arith.constant 0 : i32
    %c0_i32_0 = arith.constant 0 : i32
    %c0_i32_1 = arith.constant 0 : i32
    %c0_i32_2 = arith.constant 0 : i32
    return %c0_i32, %c0_i32_0, %c0_i32_1 : i32, i32, i32
  }
  func.func @transform_10(%arg0: i32) -> (i32, i32, i32) {
    %c0_i32 = arith.constant 0 : i32
    %c0_i32_0 = arith.constant 0 : i32
    %c0_i32_1 = arith.constant 0 : i32
    %c0_i32_2 = arith.constant 0 : i32
    return %c0_i32, %c0_i32_0, %c0_i32_1 : i32, i32, i32
  }
  func.func @transform_11(%arg0: i32) -> (i32, i32, i32) {
    %c0_i32 = arith.constant 0 : i32
    %c0_i32_0 = arith.constant 0 : i32
    %c0_i32_1 = arith.constant 0 : i32
    %c0_i32_2 = arith.constant 0 : i32
    return %c0_i32, %c0_i32_0, %c0_i32_1 : i32, i32, i32
  }
  func.func @transform_12(%arg0: i32) -> (i32, i32, i32) {
    %c0_i32 = arith.constant 0 : i32
    %c0_i32_0 = arith.constant 0 : i32
    %c0_i32_1 = arith.constant 0 : i32
    %c0_i32_2 = arith.constant 0 : i32
    return %c0_i32, %c0_i32_0, %c0_i32_1 : i32, i32, i32
  }
  func.func @transform_13(%arg0: i32) -> (i32, i32, i32) {
    %c0_i32 = arith.constant 0 : i32
    %c0_i32_0 = arith.constant 0 : i32
    %c0_i32_1 = arith.constant 0 : i32
    %c0_i32_2 = arith.constant 0 : i32
    return %c0_i32, %c0_i32_0, %c0_i32_1 : i32, i32, i32
  }
  func.func @transform_14(%arg0: i32) -> (i32, i32, i32) {
    %c0_i32 = arith.constant 0 : i32
    %c0_i32_0 = arith.constant 0 : i32
    %c0_i32_1 = arith.constant 0 : i32
    %c0_i32_2 = arith.constant 0 : i32
    return %c0_i32, %c0_i32_0, %c0_i32_1 : i32, i32, i32
  }
  func.func @transform_15(%arg0: i32) -> (i32, i32, i32) {
    %c0_i32 = arith.constant 0 : i32
    %c0_i32_0 = arith.constant 0 : i32
    %c0_i32_1 = arith.constant 0 : i32
    %c0_i32_2 = arith.constant 0 : i32
    return %c0_i32, %c0_i32_0, %c0_i32_1 : i32, i32, i32
  }
  func.func @transform_16(%arg0: i32) -> (i32, i32, i32) {
    %c0_i32 = arith.constant 0 : i32
    %c0_i32_0 = arith.constant 0 : i32
    %c0_i32_1 = arith.constant 0 : i32
    %c0_i32_2 = arith.constant 0 : i32
    return %c0_i32, %c0_i32_0, %c0_i32_1 : i32, i32, i32
  }
  func.func @transform_17(%arg0: i32) -> (i32, i32, i32) {
    %c0_i32 = arith.constant 0 : i32
    %c0_i32_0 = arith.constant 0 : i32
    %c0_i32_1 = arith.constant 0 : i32
    %c0_i32_2 = arith.constant 0 : i32
    return %c0_i32, %c0_i32_0, %c0_i32_1 : i32, i32, i32
  }
  func.func @transform_18(%arg0: i32) -> (i32, i32, i32) {
    %c0_i32 = arith.constant 0 : i32
    %c0_i32_0 = arith.constant 0 : i32
    %c0_i32_1 = arith.constant 0 : i32
    %c0_i32_2 = arith.constant 0 : i32
    return %c0_i32, %c0_i32_0, %c0_i32_1 : i32, i32, i32
  }
  func.func @transform_19(%arg0: i32) -> (i32, i32, i32) {
    %c0_i32 = arith.constant 0 : i32
    %c0_i32_0 = arith.constant 0 : i32
    %c0_i32_1 = arith.constant 0 : i32
    %c0_i32_2 = arith.constant 0 : i32
    return %c0_i32, %c0_i32_0, %c0_i32_1 : i32, i32, i32
  }
  func.func @transform_20(%arg0: i32) -> (i32, i32, i32) {
    %c0_i32 = arith.constant 0 : i32
    %c0_i32_0 = arith.constant 0 : i32
    %c0_i32_1 = arith.constant 0 : i32
    %c0_i32_2 = arith.constant 0 : i32
    return %c0_i32, %c0_i32_0, %c0_i32_1 : i32, i32, i32
  }
  func.func @transform_21(%arg0: i32) -> (i32, i32) {
    %c0_i32 = arith.constant 0 : i32
    %c0_i32_0 = arith.constant 0 : i32
    %c0_i32_1 = arith.constant 0 : i32
    return %c0_i32, %c0_i32_0 : i32, i32
  }
  func.func @transform_22(%arg0: i32) -> (i32, i32) {
    %c0_i32 = arith.constant 0 : i32
    %c0_i32_0 = arith.constant 0 : i32
    %c0_i32_1 = arith.constant 0 : i32
    return %c0_i32, %c0_i32_0 : i32, i32
  }
  func.func @transform_23(%arg0: i32) -> (i32, i32) {
    %c0_i32 = arith.constant 0 : i32
    %c0_i32_0 = arith.constant 0 : i32
    %c0_i32_1 = arith.constant 0 : i32
    return %c0_i32, %c0_i32_0 : i32, i32
  }
  func.func @transform_24(%arg0: i32) -> (i32, i32) {
    %c0_i32 = arith.constant 0 : i32
    %c0_i32_0 = arith.constant 0 : i32
    %c0_i32_1 = arith.constant 0 : i32
    return %c0_i32, %c0_i32_0 : i32, i32
  }
  func.func @transform_25(%arg0: i32) -> (i32, i32) {
    %c0_i32 = arith.constant 0 : i32
    %c0_i32_0 = arith.constant 0 : i32
    %c0_i32_1 = arith.constant 0 : i32
    return %c0_i32, %c0_i32_0 : i32, i32
  }
  func.func @transform_26(%arg0: i32) -> (i32, i32) {
    %c0_i32 = arith.constant 0 : i32
    %c0_i32_0 = arith.constant 0 : i32
    %c0_i32_1 = arith.constant 0 : i32
    return %c0_i32, %c0_i32_0 : i32, i32
  }
  func.func @transform_27(%arg0: i32) -> (i32, i32, i32) {
    %c0_i32 = arith.constant 0 : i32
    %c0_i32_0 = arith.constant 0 : i32
    %c0_i32_1 = arith.constant 0 : i32
    return %arg0, %c0_i32, %c0_i32_0 : i32, i32, i32
  }
}

</mosaic_0001>

<llo_original>
// kernel: tpu_custom_call.1
$region0: #{tpu_custom_call.1}
  #allocation0 [shape = 'u32[]', space=smem, size = 0x4, offset = 0x4, fixed_abs, tag = 'smem constant byte address 0x4 - core index']
  #allocation1 [shape = 'u32[72,128]{1,0:T(1,128)}', space=vmem, size = 0x9000, scoped, tag = 'internal scratch']
  %s0 = inlined_call_operand.vmem [shape: f32[2,8,512], index: 0, kind: input, shape index: {}]
  %s1 = inlined_call_operand.vmem [shape: s32[2,8,1], index: 1, kind: input, shape index: {}]
  %s2 = inlined_call_operand.vmem [shape: s32[2,8,1], index: 2, kind: input, shape index: {}]
  %s3 = inlined_call_operand.vmem [shape: s32[2,1,8], index: 3, kind: input, shape index: {}]
  %s4 = inlined_call_operand.vmem [shape: f32[512,64], index: 4, kind: input, shape index: {}]
  %s5 = inlined_call_operand.vmem [shape: f32[1,64], index: 5, kind: input, shape index: {}]
  %s6 = inlined_call_operand.vmem [shape: f32[8,64], index: 6, kind: input, shape index: {}]
  %s7 = inlined_call_operand.vmem [shape: f32[8,64], index: 7, kind: input, shape index: {}]
  %s8 = inlined_call_operand.vmem [shape: f32[8,64], index: 8, kind: input, shape index: {}]
  %s9 = inlined_call_operand.vmem [shape: f32[3,64,192], index: 9, kind: input, shape index: {}]
  %s10 = inlined_call_operand.vmem [shape: f32[3,1,192], index: 10, kind: input, shape index: {}]
  %s11 = inlined_call_operand.vmem [shape: f32[3,64,64], index: 11, kind: input, shape index: {}]
  %s12 = inlined_call_operand.vmem [shape: f32[3,1,64], index: 12, kind: input, shape index: {}]
  %s13 = inlined_call_operand.vmem [shape: f32[3,1,64], index: 13, kind: input, shape index: {}]
  %s14 = inlined_call_operand.vmem [shape: f32[3,1,64], index: 14, kind: input, shape index: {}]
  %s15 = inlined_call_operand.vmem [shape: f32[3,64,1024], index: 15, kind: input, shape index: {}]
  %s16 = inlined_call_operand.vmem [shape: f32[3,1,1024], index: 16, kind: input, shape index: {}]
  %s17 = inlined_call_operand.vmem [shape: f32[3,1024,64], index: 17, kind: input, shape index: {}]
  %s18 = inlined_call_operand.vmem [shape: f32[3,1,64], index: 18, kind: input, shape index: {}]
  %s19 = inlined_call_operand.vmem [shape: f32[3,1,64], index: 19, kind: input, shape index: {}]
  %s20 = inlined_call_operand.vmem [shape: f32[3,1,64], index: 20, kind: input, shape index: {}]
  %s21 = inlined_call_operand.vmem [shape: f32[64,64], index: 21, kind: input, shape index: {}]
  %s22 = inlined_call_operand.vmem [shape: f32[1,64], index: 22, kind: input, shape index: {}]
  %s23 = inlined_call_operand.vmem [shape: f32[64,64], index: 23, kind: input, shape index: {}]
  %s24 = inlined_call_operand.vmem [shape: f32[1,64], index: 24, kind: input, shape index: {}]
  %s25 = inlined_call_operand.vmem [shape: f32[64,128], index: 25, kind: input, shape index: {}]
  %s26 = inlined_call_operand.vmem [shape: f32[1,128], index: 26, kind: input, shape index: {}]
  %s27 = inlined_call_operand.hbm [shape: f32[2,8,128], index: 27, kind: output, shape index: {}]
  %s28 = sld [smem:[#allocation0]]
  $region118: #{tpu_custom_call.1} parent=0
    _
  %s30 = ssub.s32 1, %s28
  %s31 = scalar_select 0, %s30, %s28
  $region1: #{tpu_custom_call.1} parent=0
    #allocation2 [shape = 'u8[8192]{0}', space=vmem, size = 0x2000, scoped, tag = 'output window, operand 0, single buffered']
    #allocation3 [shape = 's32[1]{0}', space=sflag, size = 0x4, scoped, tag = 'scoped memory for tpu_custom_call.1']
    %32 = vsyncpa [#allocation3], 0
    // Predicated region
    $region2: #{tpu_custom_call.1} parent=1 // pred_check
      _
    $region3: #{tpu_custom_call.1} parent=1 // pred_check_branch
      %34 = sbr.rel (0) target = $region5
    $region4: #{tpu_custom_call.1} parent=1 // pred_region
      _
    $region5: #{tpu_custom_call.1} parent=1 // pred_fallthru
      _
    // Predicated region
    $region6: #{tpu_custom_call.1} parent=1 // pred_check
      _
    $region7: #{tpu_custom_call.1} parent=1 // pred_check_branch
      %36 = sbr.rel (0) target = $region9
    $region8: #{tpu_custom_call.1} parent=1 // pred_region
      _
    $region9: #{tpu_custom_call.1} parent=1 // pred_fallthru
      _
    // Predicated region
    $region10: #{tpu_custom_call.1} parent=1 // pred_check
      _
    $region11: #{tpu_custom_call.1} parent=1 // pred_check_branch
      %38 = sbr.rel (0) target = $region13
    $region12: #{tpu_custom_call.1} parent=1 // pred_region
      _
    $region13: #{tpu_custom_call.1} parent=1 // pred_fallthru
      _
    // Predicated region
    $region14: #{tpu_custom_call.1} parent=1 // pred_check
      _
    $region15: #{tpu_custom_call.1} parent=1 // pred_check_branch
      %40 = sbr.rel (0) target = $region17
    $region16: #{tpu_custom_call.1} parent=1 // pred_region
      _
    $region17: #{tpu_custom_call.1} parent=1 // pred_fallthru
      _
    // Predicated region
    $region18: #{tpu_custom_call.1} parent=1 // pred_check
      _
    $region19: #{tpu_custom_call.1} parent=1 // pred_check_branch
      %42 = sbr.rel (0) target = $region21
    $region20: #{tpu_custom_call.1} parent=1 // pred_region
      _
    $region21: #{tpu_custom_call.1} parent=1 // pred_fallthru
      _
    // Predicated region
    $region22: #{tpu_custom_call.1} parent=1 // pred_check
      _
    $region23: #{tpu_custom_call.1} parent=1 // pred_check_branch
      %44 = sbr.rel (0) target = $region25
    $region24: #{tpu_custom_call.1} parent=1 // pred_region
      _
    $region25: #{tpu_custom_call.1} parent=1 // pred_fallthru
      _
    // Predicated region
    $region26: #{tpu_custom_call.1} parent=1 // pred_check
      _
    $region27: #{tpu_custom_call.1} parent=1 // pred_check_branch
      %46 = sbr.rel (0) target = $region29
    $region28: #{tpu_custom_call.1} parent=1 // pred_region
      _
    $region29: #{tpu_custom_call.1} parent=1 // pred_fallthru
      _
    // Predicated region
    $region30: #{tpu_custom_call.1} parent=1 // pred_check
      _
    $region31: #{tpu_custom_call.1} parent=1 // pred_check_branch
      %48 = sbr.rel (0) target = $region33
    $region32: #{tpu_custom_call.1} parent=1 // pred_region
      _
    $region33: #{tpu_custom_call.1} parent=1 // pred_fallthru
      _
    // Predicated region
    $region34: #{tpu_custom_call.1} parent=1 // pred_check
      _
    $region35: #{tpu_custom_call.1} parent=1 // pred_check_branch
      %50 = sbr.rel (0) target = $region37
    $region36: #{tpu_custom_call.1} parent=1 // pred_region
      _
    $region37: #{tpu_custom_call.1} parent=1 // pred_fallthru
      _
    // Predicated region
    $region38: #{tpu_custom_call.1} parent=1 // pred_check
      _
    $region39: #{tpu_custom_call.1} parent=1 // pred_check_branch
      %52 = sbr.rel (0) target = $region41
    $region40: #{tpu_custom_call.1} parent=1 // pred_region
      _
    $region41: #{tpu_custom_call.1} parent=1 // pred_fallthru
      _
    // Predicated region
    $region42: #{tpu_custom_call.1} parent=1 // pred_check
      _
    $region43: #{tpu_custom_call.1} parent=1 // pred_check_branch
      %54 = sbr.rel (0) target = $region45
    $region44: #{tpu_custom_call.1} parent=1 // pred_region
      _
    $region45: #{tpu_custom_call.1} parent=1 // pred_fallthru
      _
    // Predicated region
    $region46: #{tpu_custom_call.1} parent=1 // pred_check
      _
    $region47: #{tpu_custom_call.1} parent=1 // pred_check_branch
      %56 = sbr.rel (0) target = $region49
    $region48: #{tpu_custom_call.1} parent=1 // pred_region
      _
    $region49: #{tpu_custom_call.1} parent=1 // pred_fallthru
      _
    // Predicated region
    $region50: #{tpu_custom_call.1} parent=1 // pred_check
      _
    $region51: #{tpu_custom_call.1} parent=1 // pred_check_branch
      %58 = sbr.rel (0) target = $region53
    $region52: #{tpu_custom_call.1} parent=1 // pred_region
      _
    $region53: #{tpu_custom_call.1} parent=1 // pred_fallthru
      _
    // Predicated region
    $region54: #{tpu_custom_call.1} parent=1 // pred_check
      _
    $region55: #{tpu_custom_call.1} parent=1 // pred_check_branch
      %60 = sbr.rel (0) target = $region57
    $region56: #{tpu_custom_call.1} parent=1 // pred_region
      _
    $region57: #{tpu_custom_call.1} parent=1 // pred_fallthru
      _
    // Predicated region
    $region58: #{tpu_custom_call.1} parent=1 // pred_check
      _
    $region59: #{tpu_custom_call.1} parent=1 // pred_check_branch
      %62 = sbr.rel (0) target = $region61
    $region60: #{tpu_custom_call.1} parent=1 // pred_region
      _
    $region61: #{tpu_custom_call.1} parent=1 // pred_fallthru
      _
    // Predicated region
    $region62: #{tpu_custom_call.1} parent=1 // pred_check
      _
    $region63: #{tpu_custom_call.1} parent=1 // pred_check_branch
      %64 = sbr.rel (0) target = $region65
    $region64: #{tpu_custom_call.1} parent=1 // pred_region
      _
    $region65: #{tpu_custom_call.1} parent=1 // pred_fallthru
      _
    // Predicated region
    $region66: #{tpu_custom_call.1} parent=1 // pred_check
      _
    $region67: #{tpu_custom_call.1} parent=1 // pred_check_branch
      %66 = sbr.rel (0) target = $region69
    $region68: #{tpu_custom_call.1} parent=1 // pred_region
      _
    $region69: #{tpu_custom_call.1} parent=1 // pred_fallthru
      _
    // Predicated region
    $region70: #{tpu_custom_call.1} parent=1 // pred_check
      _
    $region71: #{tpu_custom_call.1} parent=1 // pred_check_branch
      %68 = sbr.rel (0) target = $region73
    $region72: #{tpu_custom_call.1} parent=1 // pred_region
      _
    $region73: #{tpu_custom_call.1} parent=1 // pred_fallthru
      _
    // Predicated region
    $region74: #{tpu_custom_call.1} parent=1 // pred_check
      _
    $region75: #{tpu_custom_call.1} parent=1 // pred_check_branch
      %70 = sbr.rel (0) target = $region77
    $region76: #{tpu_custom_call.1} parent=1 // pred_region
      _
    $region77: #{tpu_custom_call.1} parent=1 // pred_fallthru
      _
    // Predicated region
    $region78: #{tpu_custom_call.1} parent=1 // pred_check
      _
    $region79: #{tpu_custom_call.1} parent=1 // pred_check_branch
      %72 = sbr.rel (0) target = $region81
    $region80: #{tpu_custom_call.1} parent=1 // pred_region
      _
    $region81: #{tpu_custom_call.1} parent=1 // pred_fallthru
      _
    // Predicated region
    $region82: #{tpu_custom_call.1} parent=1 // pred_check
      _
    $region83: #{tpu_custom_call.1} parent=1 // pred_check_branch
      %74 = sbr.rel (0) target = $region85
    $region84: #{tpu_custom_call.1} parent=1 // pred_region
      _
    $region85: #{tpu_custom_call.1} parent=1 // pred_fallthru
      _
    // Predicated region
    $region86: #{tpu_custom_call.1} parent=1 // pred_check
      _
    $region87: #{tpu_custom_call.1} parent=1 // pred_check_branch
      %76 = sbr.rel (0) target = $region89
    $region88: #{tpu_custom_call.1} parent=1 // pred_region
      _
    $region89: #{tpu_custom_call.1} parent=1 // pred_fallthru
      _
    // Predicated region
    $region90: #{tpu_custom_call.1} parent=1 // pred_check
      _
    $region91: #{tpu_custom_call.1} parent=1 // pred_check_branch
      %78 = sbr.rel (0) target = $region93
    $region92: #{tpu_custom_call.1} parent=1 // pred_region
      _
    $region93: #{tpu_custom_call.1} parent=1 // pred_fallthru
      _
    // Predicated region
    $region94: #{tpu_custom_call.1} parent=1 // pred_check
      _
    $region95: #{tpu_custom_call.1} parent=1 // pred_check_branch
      %80 = sbr.rel (0) target = $region97
    $region96: #{tpu_custom_call.1} parent=1 // pred_region
      _
    $region97: #{tpu_custom_call.1} parent=1 // pred_fallthru
      _
    // Predicated region
    $region98: #{tpu_custom_call.1} parent=1 // pred_check
      _
    $region99: #{tpu_custom_call.1} parent=1 // pred_check_branch
      %82 = sbr.rel (0) target = $region101
    $region100: #{tpu_custom_call.1} parent=1 // pred_region
      _
    $region101: #{tpu_custom_call.1} parent=1 // pred_fallthru
      _
    // Predicated region
    $region102: #{tpu_custom_call.1} parent=1 // pred_check
      _
    $region103: #{tpu_custom_call.1} parent=1 // pred_check_branch
      %84 = sbr.rel (0) target = $region105
    $region104: #{tpu_custom_call.1} parent=1 // pred_region
      _
    $region105: #{tpu_custom_call.1} parent=1 // pred_fallthru
      _
    // Predicated region
    $region106: #{tpu_custom_call.1} parent=1 // pred_check
      _
    $region107: #{tpu_custom_call.1} parent=1 // pred_check_branch
      %86 = sbr.rel (0) target = $region109
    $region108: #{tpu_custom_call.1} parent=1 // pred_region
      _
    $region109: #{tpu_custom_call.1} parent=1 // pred_fallthru
      _
    %v87 = vld [vmem:[%s0] sm:$0xff]
    %v88 = vld [vmem:[%s0 + $0x8] sm:$0xff]
    %v89 = vld [vmem:[%s0 + $0x10] sm:$0xff]
    %v90 = vld [vmem:[%s0 + $0x18] sm:$0xff]
    %v91 = vld [vmem:[%s0 + $0x20] sm:$0xff]
    %v92 = vld [vmem:[%s0 + $0x28] sm:$0xff]
    %v93 = vld [vmem:[%s0 + $0x30] sm:$0xff]
    %v94 = vld [vmem:[%s0 + $0x38] sm:$0xff]
    %v95 = vld [vmem:[%s4] sm:$0xff]
    %v96 = vld [vmem:[%s4 + $0x8] sm:$0xff]
    %v97 = vld [vmem:[%s4 + $0x10] sm:$0xff]
    %v98 = vld [vmem:[%s4 + $0x18] sm:$0xff]
    %v99 = vld [vmem:[%s4 + $0x20] sm:$0xff]
    %v100 = vld [vmem:[%s4 + $0x28] sm:$0xff]
    %v101 = vld [vmem:[%s4 + $0x30] sm:$0xff]
    %v102 = vld [vmem:[%s4 + $0x38] sm:$0xff]
    %v103 = vld [vmem:[%s4 + $0x40] sm:$0xff]
    %v104 = vld [vmem:[%s4 + $0x48] sm:$0xff]
    %v105 = vld [vmem:[%s4 + $0x50] sm:$0xff]
    %v106 = vld [vmem:[%s4 + $0x58] sm:$0xff]
    %v107 = vld [vmem:[%s4 + $0x60] sm:$0xff]
    %v108 = vld [vmem:[%s4 + $0x68] sm:$0xff]
    %v109 = vld [vmem:[%s4 + $0x70] sm:$0xff]
    %v110 = vld [vmem:[%s4 + $0x78] sm:$0xff]
    %v111 = vld [vmem:[%s4 + $0x80] sm:$0xff]
    %v112 = vld [vmem:[%s4 + $0x88] sm:$0xff]
    %v113 = vld [vmem:[%s4 + $0x90] sm:$0xff]
    %v114 = vld [vmem:[%s4 + $0x98] sm:$0xff]
    %v115 = vld [vmem:[%s4 + $0xa0] sm:$0xff]
    %v116 = vld [vmem:[%s4 + $0xa8] sm:$0xff]
    %v117 = vld [vmem:[%s4 + $0xb0] sm:$0xff]
    %v118 = vld [vmem:[%s4 + $0xb8] sm:$0xff]
    %v119 = vld [vmem:[%s4 + $0xc0] sm:$0xff]
    %v120 = vld [vmem:[%s4 + $0xc8] sm:$0xff]
    %v121 = vld [vmem:[%s4 + $0xd0] sm:$0xff]
    %v122 = vld [vmem:[%s4 + $0xd8] sm:$0xff]
    %v123 = vld [vmem:[%s4 + $0xe0] sm:$0xff]
    %v124 = vld [vmem:[%s4 + $0xe8] sm:$0xff]
    %v125 = vld [vmem:[%s4 + $0xf0] sm:$0xff]
    %v126 = vld [vmem:[%s4 + $0xf8] sm:$0xff]
    %v127 = vld [vmem:[%s4 + $0x100] sm:$0xff]
    %v128 = vld [vmem:[%s4 + $0x108] sm:$0xff]
    %v129 = vld [vmem:[%s4 + $0x110] sm:$0xff]
    %v130 = vld [vmem:[%s4 + $0x118] sm:$0xff]
    %v131 = vld [vmem:[%s4 + $0x120] sm:$0xff]
    %v132 = vld [vmem:[%s4 + $0x128] sm:$0xff]
    %v133 = vld [vmem:[%s4 + $0x130] sm:$0xff]
    %v134 = vld [vmem:[%s4 + $0x138] sm:$0xff]
    %v135 = vld [vmem:[%s4 + $0x140] sm:$0xff]
    %v136 = vld [vmem:[%s4 + $0x148] sm:$0xff]
    %v137 = vld [vmem:[%s4 + $0x150] sm:$0xff]
    %v138 = vld [vmem:[%s4 + $0x158] sm:$0xff]
    %v139 = vld [vmem:[%s4 + $0x160] sm:$0xff]
    %v140 = vld [vmem:[%s4 + $0x168] sm:$0xff]
    %v141 = vld [vmem:[%s4 + $0x170] sm:$0xff]
    %v142 = vld [vmem:[%s4 + $0x178] sm:$0xff]
    %v143 = vld [vmem:[%s4 + $0x180] sm:$0xff]
    %v144 = vld [vmem:[%s4 + $0x188] sm:$0xff]
    %v145 = vld [vmem:[%s4 + $0x190] sm:$0xff]
    %v146 = vld [vmem:[%s4 + $0x198] sm:$0xff]
    %v147 = vld [vmem:[%s4 + $0x1a0] sm:$0xff]
    %v148 = vld [vmem:[%s4 + $0x1a8] sm:$0xff]
    %v149 = vld [vmem:[%s4 + $0x1b0] sm:$0xff]
    %v150 = vld [vmem:[%s4 + $0x1b8] sm:$0xff]
    %v151 = vld [vmem:[%s4 + $0x1c0] sm:$0xff]
    %v152 = vld [vmem:[%s4 + $0x1c8] sm:$0xff]
    %v153 = vld [vmem:[%s4 + $0x1d0] sm:$0xff]
    %v154 = vld [vmem:[%s4 + $0x1d8] sm:$0xff]
    %v155 = vld [vmem:[%s4 + $0x1e0] sm:$0xff]
    %v156 = vld [vmem:[%s4 + $0x1e8] sm:$0xff]
    %v157 = vld [vmem:[%s4 + $0x1f0] sm:$0xff]
    %v158 = vld [vmem:[%s4 + $0x1f8] sm:$0xff]
    %v159 = vld [vmem:[%s5] sm:$0x1]
    %v161 = vperm.slane %v159, 0
    %163 = vmatpush.msra.mxu0 %v110
    %164 = vmatpush.msra.mxu0 %v109
    %165 = vmatpush.msra.mxu0 %v108
    %166 = vmatpush.msra.mxu0 %v107
    %167 = vmatpush.msra.mxu0 %v106
    %168 = vmatpush.msra.mxu0 %v105
    %169 = vmatpush.msra.mxu0 %v104
    %170 = vmatpush.msra.mxu0 %v103
    %171 = vmatpush.msra.mxu0 %v102
    %172 = vmatpush.msra.mxu0 %v101
    %173 = vmatpush.msra.mxu0 %v100
    %174 = vmatpush.msra.mxu0 %v99
    %175 = vmatpush.msra.mxu0 %v98
    %176 = vmatpush.msra.mxu0 %v97
    %177 = vmatpush.msra.mxu0 %v96
    %178 = vmatpush.msra.mxu0 %v95
    %179 = vmatmul.f32.gmra.mxu0 %v87
    %v180 = vpop.f32.mrf.mxu0
    %v181 = vadd.f32 %v161, %v180
    %182 = vmatmul.f32.gmra.mxu0 %v91
    %v183 = vpop.f32.mrf.mxu0
    %v184 = vadd.f32 %v161, %v183
    %185 = vdwg.mxu0
    %186 = vmatpush.msra.mxu0 %v126
    %187 = vmatpush.msra.mxu0 %v125
    %188 = vmatpush.msra.mxu0 %v124
    %189 = vmatpush.msra.mxu0 %v123
    %190 = vmatpush.msra.mxu0 %v122
    %191 = vmatpush.msra.mxu0 %v121
    %192 = vmatpush.msra.mxu0 %v120
    %193 = vmatpush.msra.mxu0 %v119
    %194 = vmatpush.msra.mxu0 %v118
    %195 = vmatpush.msra.mxu0 %v117
    %196 = vmatpush.msra.mxu0 %v116
    %197 = vmatpush.msra.mxu0 %v115
    %198 = vmatpush.msra.mxu0 %v114
    %199 = vmatpush.msra.mxu0 %v113
    %200 = vmatpush.msra.mxu0 %v112
    %201 = vmatpush.msra.mxu0 %v111
    %202 = vmatmul.f32.gmra.mxu0 %v88
    %v203 = vpop.f32.mrf.mxu0
    %v204 = vadd.f32 %v181, %v203
    %205 = vmatmul.f32.gmra.mxu0 %v92
    %v206 = vpop.f32.mrf.mxu0
    %v207 = vadd.f32 %v184, %v206
    %208 = vdwg.mxu0
    %209 = vmatpush.msra.mxu0 %v142
    %210 = vmatpush.msra.mxu0 %v141
    %211 = vmatpush.msra.mxu0 %v140
    %212 = vmatpush.msra.mxu0 %v139
    %213 = vmatpush.msra.mxu0 %v138
    %214 = vmatpush.msra.mxu0 %v137
    %215 = vmatpush.msra.mxu0 %v136
    %216 = vmatpush.msra.mxu0 %v135
    %217 = vmatpush.msra.mxu0 %v134
    %218 = vmatpush.msra.mxu0 %v133
    %219 = vmatpush.msra.mxu0 %v132
    %220 = vmatpush.msra.mxu0 %v131
    %221 = vmatpush.msra.mxu0 %v130
    %222 = vmatpush.msra.mxu0 %v129
    %223 = vmatpush.msra.mxu0 %v128
    %224 = vmatpush.msra.mxu0 %v127
    %225 = vmatmul.f32.gmra.mxu0 %v89
    %v226 = vpop.f32.mrf.mxu0
    %v227 = vadd.f32 %v204, %v226
    %228 = vmatmul.f32.gmra.mxu0 %v93
    %v229 = vpop.f32.mrf.mxu0
    %v230 = vadd.f32 %v207, %v229
    %231 = vdwg.mxu0
    %232 = vmatpush.msra.mxu0 %v158
    %233 = vmatpush.msra.mxu0 %v157
    %234 = vmatpush.msra.mxu0 %v156
    %235 = vmatpush.msra.mxu0 %v155
    %236 = vmatpush.msra.mxu0 %v154
    %237 = vmatpush.msra.mxu0 %v153
    %238 = vmatpush.msra.mxu0 %v152
    %239 = vmatpush.msra.mxu0 %v151
    %240 = vmatpush.msra.mxu0 %v150
    %241 = vmatpush.msra.mxu0 %v149
    %242 = vmatpush.msra.mxu0 %v148
    %243 = vmatpush.msra.mxu0 %v147
    %244 = vmatpush.msra.mxu0 %v146
    %245 = vmatpush.msra.mxu0 %v145
    %246 = vmatpush.msra.mxu0 %v144
    %247 = vmatpush.msra.mxu0 %v143
    %248 = vmatmul.f32.gmra.mxu0 %v90
    %v249 = vpop.f32.mrf.mxu0
    %v250 = vadd.f32 %v227, %v249
    %251 = vmatmul.f32.gmra.mxu0 %v94
    %v252 = vpop.f32.mrf.mxu0
    %v253 = vadd.f32 %v230, %v252
    %254 = vdwg.mxu0
    %v255 = vlaneseq
    %v256 = vand.u32 %v255, 127
    %v257 = vld [vmem:[%s1] sm:$0xff]
    %v258 = vld [vmem:[%s1 + $0x8] sm:$0xff]
    %259 = vset.pattern.permute.xlu0 0
    %260 = vperm.xlu0 %259, %v257
    %v261 = vpop.permute.xlu0 %260
    %262 = vset.pattern.permute.xlu0 0
    %263 = vperm.xlu0 %262, %v258
    %v264 = vpop.permute.xlu0 %263
    %vm265 = vcmp.eq.s32.totalorder %v261, %v256
    %vm266 = vcmp.eq.s32.totalorder %v264, %v256
    %v267 = vsel %vm265, 1, 0
    %v268 = vsel %vm266, 1, 0
    %v269 = vcvt.s32.f32 %v267
    %v270 = vcvt.s32.f32 %v268
    %v271 = vld [vmem:[%s2] sm:$0xff]
    %v272 = vld [vmem:[%s2 + $0x8] sm:$0xff]
    %273 = vset.pattern.permute.xlu0 0
    %274 = vperm.xlu0 %273, %v271
    %v275 = vpop.permute.xlu0 %274
    %276 = vset.pattern.permute.xlu0 0
    %277 = vperm.xlu0 %276, %v272
    %v278 = vpop.permute.xlu0 %277
    %vm279 = vcmp.eq.s32.totalorder %v275, %v256
    %vm280 = vcmp.eq.s32.totalorder %v278, %v256
    %v281 = vsel %vm279, 1, 0
    %v282 = vsel %vm280, 1, 0
    %v283 = vcvt.s32.f32 %v281
    %v284 = vcvt.s32.f32 %v282
    %v285 = vld [vmem:[%s6] sm:$0xff]
    %vm286 = vcmask 64512
    %v288 = vsel %vm286, %v269, 0
    %v291 = vsel %vm286, %v270, 0
    %293 = vmatpush.msra.mxu0 0.0
    %294 = vmatpush.msra.mxu0 0.0
    %295 = vmatpush.msra.mxu0 0.0
    %296 = vmatpush.msra.mxu0 0.0
    %297 = vmatpush.msra.mxu0 0.0
    %298 = vmatpush.msra.mxu0 0.0
    %299 = vmatpush.msra.mxu0 0.0
    %300 = vmatpush.msra.mxu0 0.0
    %301 = vmatpush.msra.mxu0 0.0
    %302 = vmatpush.msra.mxu0 0.0
    %303 = vmatpush.msra.mxu0 0.0
    %304 = vmatpush.msra.mxu0 0.0
    %305 = vmatpush.msra.mxu0 0.0
    %306 = vmatpush.msra.mxu0 0.0
    %307 = vmatpush.msra.mxu0 0.0
    %308 = vmatpush.msra.mxu0 %v285
    %309 = vmatmul.f32.gmra.mxu0 %v288
    %v310 = vpop.f32.mrf.mxu0
    %v311 = vadd.f32 0.0, %v310
    %312 = vmatmul.f32.gmra.mxu0 %v291
    %v313 = vpop.f32.mrf.mxu0
    %v314 = vadd.f32 0.0, %v313
    %315 = vdwg.mxu0
    %v316 = vadd.f32 %v250, %v311
    %v317 = vadd.f32 %v253, %v314
    %v318 = vld [vmem:[%s7] sm:$0xff]
    %v320 = vsel %vm286, %v283, 0
    %v323 = vsel %vm286, %v284, 0
    %325 = vmatpush.msra.mxu0 0.0
    %326 = vmatpush.msra.mxu0 0.0
    %327 = vmatpush.msra.mxu0 0.0
    %328 = vmatpush.msra.mxu0 0.0
    %329 = vmatpush.msra.mxu0 0.0
    %330 = vmatpush.msra.mxu0 0.0
    %331 = vmatpush.msra.mxu0 0.0
    %332 = vmatpush.msra.mxu0 0.0
    %333 = vmatpush.msra.mxu0 0.0
    %334 = vmatpush.msra.mxu0 0.0
    %335 = vmatpush.msra.mxu0 0.0
    %336 = vmatpush.msra.mxu0 0.0
    %337 = vmatpush.msra.mxu0 0.0
    %338 = vmatpush.msra.mxu0 0.0
    %339 = vmatpush.msra.mxu0 0.0
    %340 = vmatpush.msra.mxu0 %v318
    %341 = vmatmul.f32.gmra.mxu0 %v320
    %v342 = vpop.f32.mrf.mxu0
    %v343 = vadd.f32 0.0, %v342
    %344 = vmatmul.f32.gmra.mxu0 %v323
    %v345 = vpop.f32.mrf.mxu0
    %v346 = vadd.f32 0.0, %v345
    %347 = vdwg.mxu0
    %v348 = vadd.f32 %v316, %v343
    %v349 = vadd.f32 %v317, %v346
    %v350 = vld [vmem:[%s8] sm:$0xff]
    %v351 = vadd.f32 %v348, %v350
    %v352 = vadd.f32 %v349, %v350
    %v353 = vld [vmem:[%s3] sm:$0x1]
    %v354 = vld [vmem:[%s3 + $0x1] sm:$0x1]
    %vm355 = vcmp.ne.s32.totalorder %v353, 0
    %vm356 = vcmp.ne.s32.totalorder %v354, 0
    %v357 = vsel %vm355, -1e+30, 0.0
    %v358 = vsel %vm356, -1e+30, 0.0
    %v359 = vld [vmem:[%s9] sm:$0xff]
    %v360 = vld [vmem:[%s9 + $0x8] sm:$0xff]
    %v361 = vld [vmem:[%s9 + $0x10] sm:$0xff]
    %v362 = vld [vmem:[%s9 + $0x18] sm:$0xff]
    %v363 = vld [vmem:[%s9 + $0x20] sm:$0xff]
    %v364 = vld [vmem:[%s9 + $0x28] sm:$0xff]
    %v365 = vld [vmem:[%s9 + $0x30] sm:$0xff]
    %v366 = vld [vmem:[%s9 + $0x38] sm:$0xff]
    %v367 = vld [vmem:[%s9 + $0x40] sm:$0xff]
    %v368 = vld [vmem:[%s9 + $0x48] sm:$0xff]
    %v369 = vld [vmem:[%s9 + $0x50] sm:$0xff]
    %v370 = vld [vmem:[%s9 + $0x58] sm:$0xff]
    %v371 = vld [vmem:[%s9 + $0x60] sm:$0xff]
    %v372 = vld [vmem:[%s9 + $0x68] sm:$0xff]
    %v373 = vld [vmem:[%s9 + $0x70] sm:$0xff]
    %v374 = vld [vmem:[%s9 + $0x78] sm:$0xff]
    %v375 = vld [vmem:[%s10] sm:$0x3]
    %v377 = vperm.slane %v375, 0
    %v378 = vperm.slane %v375, 1
    %vm381 = vcmask 523264
    %v383 = vsel %vm381, %v351, 0
    %v386 = vsel %vm381, %v352, 0
    %388 = vmatpush.msra.mxu0 0.0
    %389 = vmatpush.msra.mxu0 0.0
    %390 = vmatpush.msra.mxu0 0.0
    %391 = vmatpush.msra.mxu0 0.0
    %392 = vmatpush.msra.mxu0 0.0
    %393 = vmatpush.msra.mxu0 0.0
    %394 = vmatpush.msra.mxu0 0.0
    %395 = vmatpush.msra.mxu0 0.0
    %396 = vmatpush.msra.mxu0 %v373
    %397 = vmatpush.msra.mxu0 %v371
    %398 = vmatpush.msra.mxu0 %v369
    %399 = vmatpush.msra.mxu0 %v367
    %400 = vmatpush.msra.mxu0 %v365
    %401 = vmatpush.msra.mxu0 %v363
    %402 = vmatpush.msra.mxu0 %v361
    %403 = vmatpush.msra.mxu0 %v359
    %404 = vmatmul.f32.gmra.mxu0 %v383
    %v405 = vpop.f32.mrf.mxu0
    %v406 = vadd.f32 %v377, %v405
    %407 = vmatmul.f32.gmra.mxu0 %v386
    %v408 = vpop.f32.mrf.mxu0
    %v409 = vadd.f32 %v377, %v408
    %410 = vdwg.mxu0
    %411 = vmatpush.msra.mxu0 0.0
    %412 = vmatpush.msra.mxu0 0.0
    %413 = vmatpush.msra.mxu0 0.0
    %414 = vmatpush.msra.mxu0 0.0
    %415 = vmatpush.msra.mxu0 0.0
    %416 = vmatpush.msra.mxu0 0.0
    %417 = vmatpush.msra.mxu0 0.0
    %418 = vmatpush.msra.mxu0 0.0
    %419 = vmatpush.msra.mxu0 %v374
    %420 = vmatpush.msra.mxu0 %v372
    %421 = vmatpush.msra.mxu0 %v370
    %422 = vmatpush.msra.mxu0 %v368
    %423 = vmatpush.msra.mxu0 %v366
    %424 = vmatpush.msra.mxu0 %v364
    %425 = vmatpush.msra.mxu0 %v362
    %426 = vmatpush.msra.mxu0 %v360
    %427 = vmatmul.f32.gmra.mxu0 %v383
    %v428 = vpop.f32.mrf.mxu0
    %v429 = vadd.f32 %v378, %v428
    %430 = vmatmul.f32.gmra.mxu0 %v386
    %v431 = vpop.f32.mrf.mxu0
    %v432 = vadd.f32 %v378, %v431
    %433 = vdwg.mxu0
    %435 = vrot.lane.b32.xlu0 %v406, 64
    %v436 = vpop.permute.xlu0 %435
    %vm437 = vcmask 261120
    %v438 = vsel %vm437, %v406, 0
    %v440 = vsel %vm437, %v436, 0
    %442 = vmatpush.xpose.msra.mxu0 0.0
    %443 = vmatpush.xpose.msra.mxu0 0.0
    %444 = vmatpush.xpose.msra.mxu0 0.0
    %445 = vmatpush.xpose.msra.mxu0 0.0
    %446 = vmatpush.xpose.msra.mxu0 0.0
    %447 = vmatpush.xpose.msra.mxu0 0.0
    %448 = vmatpush.xpose.msra.mxu0 0.0
    %449 = vmatpush.xpose.msra.mxu0 0.0
    %450 = vmatpush.xpose.msra.mxu0 0.0
    %451 = vmatpush.xpose.msra.mxu0 0.0
    %452 = vmatpush.xpose.msra.mxu0 0.0
    %453 = vmatpush.xpose.msra.mxu0 0.0
    %454 = vmatpush.xpose.msra.mxu0 0.0
    %455 = vmatpush.xpose.msra.mxu0 0.0
    %456 = vmatpush.xpose.msra.mxu0 0.0
    %457 = vmatpush.xpose.msra.mxu0 %v440
    %458 = vmatmul.f32.gmra.mxu0 %v438
    %v459 = vpop.f32.mrf.mxu0
    %v460 = vadd.f32 0.0, %v459
    %461 = vdwg.mxu0
    %463 = vrot.lane.b32.xlu0 %v409, 64
    %v464 = vpop.permute.xlu0 %463
    %v465 = vsel %vm437, %v409, 0
    %v467 = vsel %vm437, %v464, 0
    %469 = vmatpush.xpose.msra.mxu0 0.0
    %470 = vmatpush.xpose.msra.mxu0 0.0
    %471 = vmatpush.xpose.msra.mxu0 0.0
    %472 = vmatpush.xpose.msra.mxu0 0.0
    %473 = vmatpush.xpose.msra.mxu0 0.0
    %474 = vmatpush.xpose.msra.mxu0 0.0
    %475 = vmatpush.xpose.msra.mxu0 0.0
    %476 = vmatpush.xpose.msra.mxu0 0.0
    %477 = vmatpush.xpose.msra.mxu0 0.0
    %478 = vmatpush.xpose.msra.mxu0 0.0
    %479 = vmatpush.xpose.msra.mxu0 0.0
    %480 = vmatpush.xpose.msra.mxu0 0.0
    %481 = vmatpush.xpose.msra.mxu0 0.0
    %482 = vmatpush.xpose.msra.mxu0 0.0
    %483 = vmatpush.xpose.msra.mxu0 0.0
    %484 = vmatpush.xpose.msra.mxu0 %v467
    %485 = vmatmul.f32.gmra.mxu0 %v465
    %v486 = vpop.f32.mrf.mxu0
    %v487 = vadd.f32 0.0, %v486
    %488 = vdwg.mxu0
    %v489 = vmul.f32 %v460, 0.17677669
    %v490 = vmul.f32 %v487, 0.17677669
    %v493 = vperm.slane %v357, 0
    %v494 = vperm.slane %v358, 0
    %v497 = vadd.f32 %v489, %v493
    %v498 = vadd.f32 %v490, %v494
    %v499 = vsel %vm286, %v497, -inf
    %500 = vmax.xlane.f32.xlu0 %v499
    %v501 = vpop.xlane.xlu0 %500
    %v502 = vsel %vm286, %v498, -inf
    %503 = vmax.xlane.f32.xlu0 %v502
    %v504 = vpop.xlane.xlu0 %503
    %v505 = vsub.f32 %v497, %v501
    %v506 = vsub.f32 %v498, %v504
    %v507 = vmul.f32 %v505, 1.442695
    %v508 = vpow.pop %v507
    %v509 = vmul.f32 %v506, 1.442695
    %v510 = vpow.pop %v509
    %v511 = vsel %vm286, %v508, 0.0
    %512 = vadd.xlane.f32.xlu0 %v511
    %v513 = vpop.xlane.xlu0 %512
    %v514 = vsel %vm286, %v510, 0.0
    %515 = vadd.xlane.f32.xlu0 %v514
    %v516 = vpop.xlane.xlu0 %515
    %v517 = vrcp.pop %v513
    %v518 = vrcp.pop %v516
    %v519 = vmul.f32 %v508, %v517
    %v520 = vmul.f32 %v510, %v518
    %v522 = vsel %vm286, %v519, 0
    %524 = vmatpush.msra.mxu0 0.0
    %525 = vmatpush.msra.mxu0 0.0
    %526 = vmatpush.msra.mxu0 0.0
    %527 = vmatpush.msra.mxu0 0.0
    %528 = vmatpush.msra.mxu0 0.0
    %529 = vmatpush.msra.mxu0 0.0
    %530 = vmatpush.msra.mxu0 0.0
    %531 = vmatpush.msra.mxu0 0.0
    %532 = vmatpush.msra.mxu0 0.0
    %533 = vmatpush.msra.mxu0 0.0
    %534 = vmatpush.msra.mxu0 0.0
    %535 = vmatpush.msra.mxu0 0.0
    %536 = vmatpush.msra.mxu0 0.0
    %537 = vmatpush.msra.mxu0 0.0
    %538 = vmatpush.msra.mxu0 0.0
    %539 = vmatpush.msra.mxu0 %v429
    %540 = vmatmul.f32.gmra.mxu0 %v522
    %v541 = vpop.f32.mrf.mxu0
    %v542 = vadd.f32 0.0, %v541
    %543 = vdwg.mxu0
    %v545 = vsel %vm286, %v520, 0
    %547 = vmatpush.msra.mxu0 0.0
    %548 = vmatpush.msra.mxu0 0.0
    %549 = vmatpush.msra.mxu0 0.0
    %550 = vmatpush.msra.mxu0 0.0
    %551 = vmatpush.msra.mxu0 0.0
    %552 = vmatpush.msra.mxu0 0.0
    %553 = vmatpush.msra.mxu0 0.0
    %554 = vmatpush.msra.mxu0 0.0
    %555 = vmatpush.msra.mxu0 0.0
    %556 = vmatpush.msra.mxu0 0.0
    %557 = vmatpush.msra.mxu0 0.0
    %558 = vmatpush.msra.mxu0 0.0
    %559 = vmatpush.msra.mxu0 0.0
    %560 = vmatpush.msra.mxu0 0.0
    %561 = vmatpush.msra.mxu0 0.0
    %562 = vmatpush.msra.mxu0 %v432
    %563 = vmatmul.f32.gmra.mxu0 %v545
    %v564 = vpop.f32.mrf.mxu0
    %v565 = vadd.f32 0.0, %v564
    %566 = vdwg.mxu0
    %567 = vrot.lane.b32.xlu0 %v406, 96
    %v568 = vpop.permute.xlu0 %567
    %569 = vrot.lane.b32.xlu0 %v406, 32
    %v570 = vpop.permute.xlu0 %569
    %v571 = vsel %vm437, %v568, 0
    %v573 = vsel %vm437, %v570, 0
    %575 = vmatpush.xpose.msra.mxu0 0.0
    %576 = vmatpush.xpose.msra.mxu0 0.0
    %577 = vmatpush.xpose.msra.mxu0 0.0
    %578 = vmatpush.xpose.msra.mxu0 0.0
    %579 = vmatpush.xpose.msra.mxu0 0.0
    %580 = vmatpush.xpose.msra.mxu0 0.0
    %581 = vmatpush.xpose.msra.mxu0 0.0
    %582 = vmatpush.xpose.msra.mxu0 0.0
    %583 = vmatpush.xpose.msra.mxu0 0.0
    %584 = vmatpush.xpose.msra.mxu0 0.0
    %585 = vmatpush.xpose.msra.mxu0 0.0
    %586 = vmatpush.xpose.msra.mxu0 0.0
    %587 = vmatpush.xpose.msra.mxu0 0.0
    %588 = vmatpush.xpose.msra.mxu0 0.0
    %589 = vmatpush.xpose.msra.mxu0 0.0
    %590 = vmatpush.xpose.msra.mxu0 %v573
    %591 = vmatmul.f32.gmra.mxu0 %v571
    %v592 = vpop.f32.mrf.mxu0
    %v593 = vadd.f32 0.0, %v592
    %594 = vdwg.mxu0
    %595 = vrot.lane.b32.xlu0 %v409, 96
    %v596 = vpop.permute.xlu0 %595
    %597 = vrot.lane.b32.xlu0 %v409, 32
    %v598 = vpop.permute.xlu0 %597
    %v599 = vsel %vm437, %v596, 0
    %v601 = vsel %vm437, %v598, 0
    %603 = vmatpush.xpose.msra.mxu0 0.0
    %604 = vmatpush.xpose.msra.mxu0 0.0
    %605 = vmatpush.xpose.msra.mxu0 0.0
    %606 = vmatpush.xpose.msra.mxu0 0.0
    %607 = vmatpush.xpose.msra.mxu0 0.0
    %608 = vmatpush.xpose.msra.mxu0 0.0
    %609 = vmatpush.xpose.msra.mxu0 0.0
    %610 = vmatpush.xpose.msra.mxu0 0.0
    %611 = vmatpush.xpose.msra.mxu0 0.0
    %612 = vmatpush.xpose.msra.mxu0 0.0
    %613 = vmatpush.xpose.msra.mxu0 0.0
    %614 = vmatpush.xpose.msra.mxu0 0.0
    %615 = vmatpush.xpose.msra.mxu0 0.0
    %616 = vmatpush.xpose.msra.mxu0 0.0
    %617 = vmatpush.xpose.msra.mxu0 0.0
    %618 = vmatpush.xpose.msra.mxu0 %v601
    %619 = vmatmul.f32.gmra.mxu0 %v599
    %v620 = vpop.f32.mrf.mxu0
    %v621 = vadd.f32 0.0, %v620
    %622 = vdwg.mxu0
    %v623 = vmul.f32 %v593, 0.17677669
    %v624 = vmul.f32 %v621, 0.17677669
    %v625 = vadd.f32 %v623, %v493
    %v626 = vadd.f32 %v624, %v494
    %v627 = vsel %vm286, %v625, -inf
    %628 = vmax.xlane.f32.xlu0 %v627
    %v629 = vpop.xlane.xlu0 %628
    %v630 = vsel %vm286, %v626, -inf
    %631 = vmax.xlane.f32.xlu0 %v630
    %v632 = vpop.xlane.xlu0 %631
    %v633 = vsub.f32 %v625, %v629
    %v634 = vsub.f32 %v626, %v632
    %v635 = vmul.f32 %v633, 1.442695
    %v636 = vpow.pop %v635
    %v637 = vmul.f32 %v634, 1.442695
    %v638 = vpow.pop %v637
    %v639 = vsel %vm286, %v636, 0.0
    %640 = vadd.xlane.f32.xlu0 %v639
    %v641 = vpop.xlane.xlu0 %640
    %v642 = vsel %vm286, %v638, 0.0
    %643 = vadd.xlane.f32.xlu0 %v642
    %v644 = vpop.xlane.xlu0 %643
    %v645 = vrcp.pop %v641
    %v646 = vrcp.pop %v644
    %v647 = vmul.f32 %v636, %v645
    %v648 = vmul.f32 %v638, %v646
    %650 = vrot.lane.b32.xlu0 %v429, 96
    %v651 = vpop.permute.xlu0 %650
    %v654 = vsel %vm286, %v647, 0
    %656 = vmatpush.msra.mxu0 0.0
    %657 = vmatpush.msra.mxu0 0.0
    %658 = vmatpush.msra.mxu0 0.0
    %659 = vmatpush.msra.mxu0 0.0
    %660 = vmatpush.msra.mxu0 0.0
    %661 = vmatpush.msra.mxu0 0.0
    %662 = vmatpush.msra.mxu0 0.0
    %663 = vmatpush.msra.mxu0 0.0
    %664 = vmatpush.msra.mxu0 0.0
    %665 = vmatpush.msra.mxu0 0.0
    %666 = vmatpush.msra.mxu0 0.0
    %667 = vmatpush.msra.mxu0 0.0
    %668 = vmatpush.msra.mxu0 0.0
    %669 = vmatpush.msra.mxu0 0.0
    %670 = vmatpush.msra.mxu0 0.0
    %671 = vmatpush.msra.mxu0 %v651
    %672 = vmatmul.f32.gmra.mxu0 %v654
    %v673 = vpop.f32.mrf.mxu0
    %v674 = vadd.f32 0.0, %v673
    %675 = vdwg.mxu0
    %677 = vrot.lane.b32.xlu0 %v432, 96
    %v678 = vpop.permute.xlu0 %677
    %v681 = vsel %vm286, %v648, 0
    %683 = vmatpush.msra.mxu0 0.0
    %684 = vmatpush.msra.mxu0 0.0
    %685 = vmatpush.msra.mxu0 0.0
    %686 = vmatpush.msra.mxu0 0.0
    %687 = vmatpush.msra.mxu0 0.0
    %688 = vmatpush.msra.mxu0 0.0
    %689 = vmatpush.msra.mxu0 0.0
    %690 = vmatpush.msra.mxu0 0.0
    %691 = vmatpush.msra.mxu0 0.0
    %692 = vmatpush.msra.mxu0 0.0
    %693 = vmatpush.msra.mxu0 0.0
    %694 = vmatpush.msra.mxu0 0.0
    %695 = vmatpush.msra.mxu0 0.0
    %696 = vmatpush.msra.mxu0 0.0
    %697 = vmatpush.msra.mxu0 0.0
    %698 = vmatpush.msra.mxu0 %v678
    %699 = vmatmul.f32.gmra.mxu0 %v681
    %v700 = vpop.f32.mrf.mxu0
    %v701 = vadd.f32 0.0, %v700
    %702 = vdwg.mxu0
    %705 = vrot.lane.b32.xlu0 %v674, 32
    %v706 = vpop.permute.xlu0 %705
    %707 = vrot.lane.b32.xlu0 %v701, 32
    %v708 = vpop.permute.xlu0 %707
    %v711 = vsel %vm437, %v542, %v706
    %v712 = vsel %vm437, %v565, %v708
    %v713 = vld [vmem:[%s11] sm:$0xff]
    %v714 = vld [vmem:[%s11 + $0x8] sm:$0xff]
    %v715 = vld [vmem:[%s11 + $0x10] sm:$0xff]
    %v716 = vld [vmem:[%s11 + $0x18] sm:$0xff]
    %v717 = vld [vmem:[%s11 + $0x20] sm:$0xff]
    %v718 = vld [vmem:[%s11 + $0x28] sm:$0xff]
    %v719 = vld [vmem:[%s11 + $0x30] sm:$0xff]
    %v720 = vld [vmem:[%s11 + $0x38] sm:$0xff]
    %v721 = vld [vmem:[%s12] sm:$0x1]
    %v723 = vperm.slane %v721, 0
    %v726 = vsel %vm381, %v711, 0
    %v729 = vsel %vm381, %v712, 0
    %731 = vmatpush.msra.mxu0 0.0
    %732 = vmatpush.msra.mxu0 0.0
    %733 = vmatpush.msra.mxu0 0.0
    %734 = vmatpush.msra.mxu0 0.0
    %735 = vmatpush.msra.mxu0 0.0
    %736 = vmatpush.msra.mxu0 0.0
    %737 = vmatpush.msra.mxu0 0.0
    %738 = vmatpush.msra.mxu0 0.0
    %739 = vmatpush.msra.mxu0 %v720
    %740 = vmatpush.msra.mxu0 %v719
    %741 = vmatpush.msra.mxu0 %v718
    %742 = vmatpush.msra.mxu0 %v717
    %743 = vmatpush.msra.mxu0 %v716
    %744 = vmatpush.msra.mxu0 %v715
    %745 = vmatpush.msra.mxu0 %v714
    %746 = vmatpush.msra.mxu0 %v713
    %747 = vmatmul.f32.gmra.mxu0 %v726
    %v748 = vpop.f32.mrf.mxu0
    %v749 = vadd.f32 %v723, %v748
    %750 = vmatmul.f32.gmra.mxu0 %v729
    %v751 = vpop.f32.mrf.mxu0
    %v752 = vadd.f32 %v723, %v751
    %753 = vdwg.mxu0
    %v754 = vadd.f32 %v351, %v749
    %v755 = vadd.f32 %v352, %v752
    %v756 = vld [vmem:[%s13] sm:$0x1]
    %v757 = vld [vmem:[%s14] sm:$0x1]
    %v758 = vsel %vm381, %v754, 0.0
    %759 = vadd.xlane.f32.xlu0 %v758
    %v760 = vpop.xlane.xlu0 %759
    %v761 = vsel %vm381, %v755, 0.0
    %762 = vadd.xlane.f32.xlu0 %v761
    %v763 = vpop.xlane.xlu0 %762
    %v764 = vrcp.pop 64.0
    %v765 = vmul.f32 64.0, %v764
    %v766 = vsub.f32 1.0, %v765
    %v767 = vmul.f32 %v764, %v766
    %v768 = vadd.f32 %v764, %v767
    %vm769 = vweird.f32 %v764
    %v770 = vsel %vm769, %v764, %v768
    %v771 = vmul.f32 %v760, %v770
    %v772 = vmul.f32 %v763, %v770
    %v773 = vsub.f32 %v754, %v771
    %v774 = vsub.f32 %v755, %v772
    %v775 = vmul.f32 %v773, %v773
    %v776 = vmul.f32 %v774, %v774
    %v777 = vsel %vm381, %v775, 0.0
    %778 = vadd.xlane.f32.xlu0 %v777
    %v779 = vpop.xlane.xlu0 %778
    %v780 = vsel %vm381, %v776, 0.0
    %781 = vadd.xlane.f32.xlu0 %v780
    %v782 = vpop.xlane.xlu0 %781
    %v783 = vmul.f32 %v779, %v770
    %v784 = vmul.f32 %v782, %v770
    %v785 = vadd.f32 %v783, 1e-05
    %v786 = vadd.f32 %v784, 1e-05
    %v787 = vrsqrt.pop %v785
    %v788 = vmul.f32 %v787, %v785
    %v789 = vmul.f32 %v788, %v787
    %v790 = vmul.f32 0.5, %v789
    %v791 = vsub.f32 1.5, %v790
    %v792 = vmul.f32 %v787, %v791
    %vm793 = vweird.f32 %v785
    %vm794 = vweird.f32 %v787
    %vm795 = vmor %vm793, %vm794
    %v796 = vsel %vm795, %v787, %v792
    %v797 = vrsqrt.pop %v786
    %v798 = vmul.f32 %v797, %v786
    %v799 = vmul.f32 %v798, %v797
    %v800 = vmul.f32 0.5, %v799
    %v801 = vsub.f32 1.5, %v800
    %v802 = vmul.f32 %v797, %v801
    %vm803 = vweird.f32 %v786
    %vm804 = vweird.f32 %v797
    %vm805 = vmor %vm803, %vm804
    %v806 = vsel %vm805, %v797, %v802
    %v807 = vmul.f32 %v773, %v796
    %v808 = vmul.f32 %v774, %v806
    %v810 = vperm.slane %v756, 0
    %v812 = vmul.f32 %v807, %v810
    %v813 = vmul.f32 %v808, %v810
    %v815 = vperm.slane %v757, 0
    %v817 = vadd.f32 %v812, %v815
    %v818 = vadd.f32 %v813, %v815
    %v819 = vld [vmem:[%s15] sm:$0xff]
    %v820 = vld [vmem:[%s15 + $0x8] sm:$0xff]
    %v821 = vld [vmem:[%s15 + $0x10] sm:$0xff]
    %v822 = vld [vmem:[%s15 + $0x18] sm:$0xff]
    %v823 = vld [vmem:[%s15 + $0x20] sm:$0xff]
    %v824 = vld [vmem:[%s15 + $0x28] sm:$0xff]
    %v825 = vld [vmem:[%s15 + $0x30] sm:$0xff]
    %v826 = vld [vmem:[%s15 + $0x38] sm:$0xff]
    %v827 = vld [vmem:[%s15 + $0x40] sm:$0xff]
    %v828 = vld [vmem:[%s15 + $0x48] sm:$0xff]
    %v829 = vld [vmem:[%s15 + $0x50] sm:$0xff]
    %v830 = vld [vmem:[%s15 + $0x58] sm:$0xff]
    %v831 = vld [vmem:[%s15 + $0x60] sm:$0xff]
    %v832 = vld [vmem:[%s15 + $0x68] sm:$0xff]
    %v833 = vld [vmem:[%s15 + $0x70] sm:$0xff]
    %v834 = vld [vmem:[%s15 + $0x78] sm:$0xff]
    %v835 = vld [vmem:[%s15 + $0x80] sm:$0xff]
    %v836 = vld [vmem:[%s15 + $0x88] sm:$0xff]
    %v837 = vld [vmem:[%s15 + $0x90] sm:$0xff]
    %v838 = vld [vmem:[%s15 + $0x98] sm:$0xff]
    %v839 = vld [vmem:[%s15 + $0xa0] sm:$0xff]
    %v840 = vld [vmem:[%s15 + $0xa8] sm:$0xff]
    %v841 = vld [vmem:[%s15 + $0xb0] sm:$0xff]
    %v842 = vld [vmem:[%s15 + $0xb8] sm:$0xff]
    %v843 = vld [vmem:[%s15 + $0xc0] sm:$0xff]
    %v844 = vld [vmem:[%s15 + $0xc8] sm:$0xff]
    %v845 = vld [vmem:[%s15 + $0xd0] sm:$0xff]
    %v846 = vld [vmem:[%s15 + $0xd8] sm:$0xff]
    %v847 = vld [vmem:[%s15 + $0xe0] sm:$0xff]
    %v848 = vld [vmem:[%s15 + $0xe8] sm:$0xff]
    %v849 = vld [vmem:[%s15 + $0xf0] sm:$0xff]
    %v850 = vld [vmem:[%s15 + $0xf8] sm:$0xff]
    %v851 = vld [vmem:[%s15 + $0x100] sm:$0xff]
    %v852 = vld [vmem:[%s15 + $0x108] sm:$0xff]
    %v853 = vld [vmem:[%s15 + $0x110] sm:$0xff]
    %v854 = vld [vmem:[%s15 + $0x118] sm:$0xff]
    %v855 = vld [vmem:[%s15 + $0x120] sm:$0xff]
    %v856 = vld [vmem:[%s15 + $0x128] sm:$0xff]
    %v857 = vld [vmem:[%s15 + $0x130] sm:$0xff]
    %v858 = vld [vmem:[%s15 + $0x138] sm:$0xff]
    %v859 = vld [vmem:[%s15 + $0x140] sm:$0xff]
    %v860 = vld [vmem:[%s15 + $0x148] sm:$0xff]
    %v861 = vld [vmem:[%s15 + $0x150] sm:$0xff]
    %v862 = vld [vmem:[%s15 + $0x158] sm:$0xff]
    %v863 = vld [vmem:[%s15 + $0x160] sm:$0xff]
    %v864 = vld [vmem:[%s15 + $0x168] sm:$0xff]
    %v865 = vld [vmem:[%s15 + $0x170] sm:$0xff]
    %v866 = vld [vmem:[%s15 + $0x178] sm:$0xff]
    %v867 = vld [vmem:[%s15 + $0x180] sm:$0xff]
    %v868 = vld [vmem:[%s15 + $0x188] sm:$0xff]
    %v869 = vld [vmem:[%s15 + $0x190] sm:$0xff]
    %v870 = vld [vmem:[%s15 + $0x198] sm:$0xff]
    %v871 = vld [vmem:[%s15 + $0x1a0] sm:$0xff]
    %v872 = vld [vmem:[%s15 + $0x1a8] sm:$0xff]
    %v873 = vld [vmem:[%s15 + $0x1b0] sm:$0xff]
    %v874 = vld [vmem:[%s15 + $0x1b8] sm:$0xff]
    %v875 = vld [vmem:[%s15 + $0x1c0] sm:$0xff]
    %v876 = vld [vmem:[%s15 + $0x1c8] sm:$0xff]
    %v877 = vld [vmem:[%s15 + $0x1d0] sm:$0xff]
    %v878 = vld [vmem:[%s15 + $0x1d8] sm:$0xff]
    %v879 = vld [vmem:[%s15 + $0x1e0] sm:$0xff]
    %v880 = vld [vmem:[%s15 + $0x1e8] sm:$0xff]
    %v881 = vld [vmem:[%s15 + $0x1f0] sm:$0xff]
    %v882 = vld [vmem:[%s15 + $0x1f8] sm:$0xff]
    %v883 = vld [vmem:[%s16] sm:$0xff]
    %v885 = vperm.slane %v883, 0
    %v886 = vperm.slane %v883, 1
    %v887 = vperm.slane %v883, 2
    %v888 = vperm.slane %v883, 3
    %v889 = vperm.slane %v883, 4
    %v890 = vperm.slane %v883, 5
    %v891 = vperm.slane %v883, 6
    %v892 = vperm.slane %v883, 7
    %v902 = vsel %vm381, %v817, 0
    %v905 = vsel %vm381, %v818, 0
    %907 = vmatpush.msra.mxu0 0.0
    %908 = vmatpush.msra.mxu0 0.0
    %909 = vmatpush.msra.mxu0 0.0
    %910 = vmatpush.msra.mxu0 0.0
    %911 = vmatpush.msra.mxu0 0.0
    %912 = vmatpush.msra.mxu0 0.0
    %913 = vmatpush.msra.mxu0 0.0
    %914 = vmatpush.msra.mxu0 0.0
    %915 = vmatpush.msra.mxu0 %v875
    %916 = vmatpush.msra.mxu0 %v867
    %917 = vmatpush.msra.mxu0 %v859
    %918 = vmatpush.msra.mxu0 %v851
    %919 = vmatpush.msra.mxu0 %v843
    %920 = vmatpush.msra.mxu0 %v835
    %921 = vmatpush.msra.mxu0 %v827
    %922 = vmatpush.msra.mxu0 %v819
    %923 = vmatmul.f32.gmra.mxu0 %v902
    %v924 = vpop.f32.mrf.mxu0
    %v925 = vadd.f32 %v885, %v924
    %926 = vmatmul.f32.gmra.mxu0 %v905
    %v927 = vpop.f32.mrf.mxu0
    %v928 = vadd.f32 %v885, %v927
    %929 = vdwg.mxu0
    %930 = vmatpush.msra.mxu0 0.0
    %931 = vmatpush.msra.mxu0 0.0
    %932 = vmatpush.msra.mxu0 0.0
    %933 = vmatpush.msra.mxu0 0.0
    %934 = vmatpush.msra.mxu0 0.0
    %935 = vmatpush.msra.mxu0 0.0
    %936 = vmatpush.msra.mxu0 0.0
    %937 = vmatpush.msra.mxu0 0.0
    %938 = vmatpush.msra.mxu0 %v876
    %939 = vmatpush.msra.mxu0 %v868
    %940 = vmatpush.msra.mxu0 %v860
    %941 = vmatpush.msra.mxu0 %v852
    %942 = vmatpush.msra.mxu0 %v844
    %943 = vmatpush.msra.mxu0 %v836
    %944 = vmatpush.msra.mxu0 %v828
    %945 = vmatpush.msra.mxu0 %v820
    %946 = vmatmul.f32.gmra.mxu0 %v902
    %v947 = vpop.f32.mrf.mxu0
    %v948 = vadd.f32 %v886, %v947
    %949 = vmatmul.f32.gmra.mxu0 %v905
    %v950 = vpop.f32.mrf.mxu0
    %v951 = vadd.f32 %v886, %v950
    %952 = vdwg.mxu0
    %953 = vmatpush.msra.mxu0 0.0
    %954 = vmatpush.msra.mxu0 0.0
    %955 = vmatpush.msra.mxu0 0.0
    %956 = vmatpush.msra.mxu0 0.0
    %957 = vmatpush.msra.mxu0 0.0
    %958 = vmatpush.msra.mxu0 0.0
    %959 = vmatpush.msra.mxu0 0.0
    %960 = vmatpush.msra.mxu0 0.0
    %961 = vmatpush.msra.mxu0 %v877
    %962 = vmatpush.msra.mxu0 %v869
    %963 = vmatpush.msra.mxu0 %v861
    %964 = vmatpush.msra.mxu0 %v853
    %965 = vmatpush.msra.mxu0 %v845
    %966 = vmatpush.msra.mxu0 %v837
    %967 = vmatpush.msra.mxu0 %v829
    %968 = vmatpush.msra.mxu0 %v821
    %969 = vmatmul.f32.gmra.mxu0 %v902
    %v970 = vpop.f32.mrf.mxu0
    %v971 = vadd.f32 %v887, %v970
    %972 = vmatmul.f32.gmra.mxu0 %v905
    %v973 = vpop.f32.mrf.mxu0
    %v974 = vadd.f32 %v887, %v973
    %975 = vdwg.mxu0
    %976 = vmatpush.msra.mxu0 0.0
    %977 = vmatpush.msra.mxu0 0.0
    %978 = vmatpush.msra.mxu0 0.0
    %979 = vmatpush.msra.mxu0 0.0
    %980 = vmatpush.msra.mxu0 0.0
    %981 = vmatpush.msra.mxu0 0.0
    %982 = vmatpush.msra.mxu0 0.0
    %983 = vmatpush.msra.mxu0 0.0
    %984 = vmatpush.msra.mxu0 %v878
    %985 = vmatpush.msra.mxu0 %v870
    %986 = vmatpush.msra.mxu0 %v862
    %987 = vmatpush.msra.mxu0 %v854
    %988 = vmatpush.msra.mxu0 %v846
    %989 = vmatpush.msra.mxu0 %v838
    %990 = vmatpush.msra.mxu0 %v830
    %991 = vmatpush.msra.mxu0 %v822
    %992 = vmatmul.f32.gmra.mxu0 %v902
    %v993 = vpop.f32.mrf.mxu0
    %v994 = vadd.f32 %v888, %v993
    %995 = vmatmul.f32.gmra.mxu0 %v905
    %v996 = vpop.f32.mrf.mxu0
    %v997 = vadd.f32 %v888, %v996
    %998 = vdwg.mxu0
    %999 = vmatpush.msra.mxu0 0.0
    %1000 = vmatpush.msra.mxu0 0.0
    %1001 = vmatpush.msra.mxu0 0.0
    %1002 = vmatpush.msra.mxu0 0.0
    %1003 = vmatpush.msra.mxu0 0.0
    %1004 = vmatpush.msra.mxu0 0.0
    %1005 = vmatpush.msra.mxu0 0.0
    %1006 = vmatpush.msra.mxu0 0.0
    %1007 = vmatpush.msra.mxu0 %v879
    %1008 = vmatpush.msra.mxu0 %v871
    %1009 = vmatpush.msra.mxu0 %v863
    %1010 = vmatpush.msra.mxu0 %v855
    %1011 = vmatpush.msra.mxu0 %v847
    %1012 = vmatpush.msra.mxu0 %v839
    %1013 = vmatpush.msra.mxu0 %v831
    %1014 = vmatpush.msra.mxu0 %v823
    %1015 = vmatmul.f32.gmra.mxu0 %v902
    %v1016 = vpop.f32.mrf.mxu0
    %v1017 = vadd.f32 %v889, %v1016
    %1018 = vmatmul.f32.gmra.mxu0 %v905
    %v1019 = vpop.f32.mrf.mxu0
    %v1020 = vadd.f32 %v889, %v1019
    %1021 = vdwg.mxu0
    %1022 = vmatpush.msra.mxu0 0.0
    %1023 = vmatpush.msra.mxu0 0.0
    %1024 = vmatpush.msra.mxu0 0.0
    %1025 = vmatpush.msra.mxu0 0.0
    %1026 = vmatpush.msra.mxu0 0.0
    %1027 = vmatpush.msra.mxu0 0.0
    %1028 = vmatpush.msra.mxu0 0.0
    %1029 = vmatpush.msra.mxu0 0.0
    %1030 = vmatpush.msra.mxu0 %v880
    %1031 = vmatpush.msra.mxu0 %v872
    %1032 = vmatpush.msra.mxu0 %v864
    %1033 = vmatpush.msra.mxu0 %v856
    %1034 = vmatpush.msra.mxu0 %v848
    %1035 = vmatpush.msra.mxu0 %v840
    %1036 = vmatpush.msra.mxu0 %v832
    %1037 = vmatpush.msra.mxu0 %v824
    %1038 = vmatmul.f32.gmra.mxu0 %v902
    %v1039 = vpop.f32.mrf.mxu0
    %v1040 = vadd.f32 %v890, %v1039
    %1041 = vmatmul.f32.gmra.mxu0 %v905
    %v1042 = vpop.f32.mrf.mxu0
    %v1043 = vadd.f32 %v890, %v1042
    %1044 = vdwg.mxu0
    %1045 = vmatpush.msra.mxu0 0.0
    %1046 = vmatpush.msra.mxu0 0.0
    %1047 = vmatpush.msra.mxu0 0.0
    %1048 = vmatpush.msra.mxu0 0.0
    %1049 = vmatpush.msra.mxu0 0.0
    %1050 = vmatpush.msra.mxu0 0.0
    %1051 = vmatpush.msra.mxu0 0.0
    %1052 = vmatpush.msra.mxu0 0.0
    %1053 = vmatpush.msra.mxu0 %v881
    %1054 = vmatpush.msra.mxu0 %v873
    %1055 = vmatpush.msra.mxu0 %v865
    %1056 = vmatpush.msra.mxu0 %v857
    %1057 = vmatpush.msra.mxu0 %v849
    %1058 = vmatpush.msra.mxu0 %v841
    %1059 = vmatpush.msra.mxu0 %v833
    %1060 = vmatpush.msra.mxu0 %v825
    %1061 = vmatmul.f32.gmra.mxu0 %v902
    %v1062 = vpop.f32.mrf.mxu0
    %v1063 = vadd.f32 %v891, %v1062
    %1064 = vmatmul.f32.gmra.mxu0 %v905
    %v1065 = vpop.f32.mrf.mxu0
    %v1066 = vadd.f32 %v891, %v1065
    %1067 = vdwg.mxu0
    %1068 = vmatpush.msra.mxu0 0.0
    %1069 = vmatpush.msra.mxu0 0.0
    %1070 = vmatpush.msra.mxu0 0.0
    %1071 = vmatpush.msra.mxu0 0.0
    %1072 = vmatpush.msra.mxu0 0.0
    %1073 = vmatpush.msra.mxu0 0.0
    %1074 = vmatpush.msra.mxu0 0.0
    %1075 = vmatpush.msra.mxu0 0.0
    %1076 = vmatpush.msra.mxu0 %v882
    %1077 = vmatpush.msra.mxu0 %v874
    %1078 = vmatpush.msra.mxu0 %v866
    %1079 = vmatpush.msra.mxu0 %v858
    %1080 = vmatpush.msra.mxu0 %v850
    %1081 = vmatpush.msra.mxu0 %v842
    %1082 = vmatpush.msra.mxu0 %v834
    %1083 = vmatpush.msra.mxu0 %v826
    %1084 = vmatmul.f32.gmra.mxu0 %v902
    %v1085 = vpop.f32.mrf.mxu0
    %v1086 = vadd.f32 %v892, %v1085
    %1087 = vmatmul.f32.gmra.mxu0 %v905
    %v1088 = vpop.f32.mrf.mxu0
    %v1089 = vadd.f32 %v892, %v1088
    %1090 = vdwg.mxu0
    %v1091 = vmax.f32 %v925, 0.0
    %v1092 = vmax.f32 %v948, 0.0
    %v1093 = vmax.f32 %v971, 0.0
    %v1094 = vmax.f32 %v994, 0.0
    %v1095 = vmax.f32 %v1017, 0.0
    %v1096 = vmax.f32 %v1040, 0.0
    %v1097 = vmax.f32 %v1063, 0.0
    %v1098 = vmax.f32 %v1086, 0.0
    %v1099 = vmax.f32 %v928, 0.0
    %v1100 = vmax.f32 %v951, 0.0
    %v1101 = vmax.f32 %v974, 0.0
    %v1102 = vmax.f32 %v997, 0.0
    %v1103 = vmax.f32 %v1020, 0.0
    %v1104 = vmax.f32 %v1043, 0.0
    %v1105 = vmax.f32 %v1066, 0.0
    %v1106 = vmax.f32 %v1089, 0.0
    %v1107 = vld [vmem:[%s17] sm:$0xff]
    %v1108 = vld [vmem:[%s17 + $0x8] sm:$0xff]
    %v1109 = vld [vmem:[%s17 + $0x10] sm:$0xff]
    %v1110 = vld [vmem:[%s17 + $0x18] sm:$0xff]
    %v1111 = vld [vmem:[%s17 + $0x20] sm:$0xff]
    %v1112 = vld [vmem:[%s17 + $0x28] sm:$0xff]
    %v1113 = vld [vmem:[%s17 + $0x30] sm:$0xff]
    %v1114 = vld [vmem:[%s17 + $0x38] sm:$0xff]
    %v1115 = vld [vmem:[%s17 + $0x40] sm:$0xff]
    %v1116 = vld [vmem:[%s17 + $0x48] sm:$0xff]
    %v1117 = vld [vmem:[%s17 + $0x50] sm:$0xff]
    %v1118 = vld [vmem:[%s17 + $0x58] sm:$0xff]
    %v1119 = vld [vmem:[%s17 + $0x60] sm:$0xff]
    %v1120 = vld [vmem:[%s17 + $0x68] sm:$0xff]
    %v1121 = vld [vmem:[%s17 + $0x70] sm:$0xff]
    %v1122 = vld [vmem:[%s17 + $0x78] sm:$0xff]
    %v1123 = vld [vmem:[%s17 + $0x80] sm:$0xff]
    %v1124 = vld [vmem:[%s17 + $0x88] sm:$0xff]
    %v1125 = vld [vmem:[%s17 + $0x90] sm:$0xff]
    %v1126 = vld [vmem:[%s17 + $0x98] sm:$0xff]
    %v1127 = vld [vmem:[%s17 + $0xa0] sm:$0xff]
    %v1128 = vld [vmem:[%s17 + $0xa8] sm:$0xff]
    %v1129 = vld [vmem:[%s17 + $0xb0] sm:$0xff]
    %v1130 = vld [vmem:[%s17 + $0xb8] sm:$0xff]
    %v1131 = vld [vmem:[%s17 + $0xc0] sm:$0xff]
    %v1132 = vld [vmem:[%s17 + $0xc8] sm:$0xff]
    %v1133 = vld [vmem:[%s17 + $0xd0] sm:$0xff]
    %v1134 = vld [vmem:[%s17 + $0xd8] sm:$0xff]
    %v1135 = vld [vmem:[%s17 + $0xe0] sm:$0xff]
    %v1136 = vld [vmem:[%s17 + $0xe8] sm:$0xff]
    %v1137 = vld [vmem:[%s17 + $0xf0] sm:$0xff]
    %v1138 = vld [vmem:[%s17 + $0xf8] sm:$0xff]
    %v1139 = vld [vmem:[%s17 + $0x100] sm:$0xff]
    %v1140 = vld [vmem:[%s17 + $0x108] sm:$0xff]
    %v1141 = vld [vmem:[%s17 + $0x110] sm:$0xff]
    %v1142 = vld [vmem:[%s17 + $0x118] sm:$0xff]
    %v1143 = vld [vmem:[%s17 + $0x120] sm:$0xff]
    %v1144 = vld [vmem:[%s17 + $0x128] sm:$0xff]
    %v1145 = vld [vmem:[%s17 + $0x130] sm:$0xff]
    %v1146 = vld [vmem:[%s17 + $0x138] sm:$0xff]
    %v1147 = vld [vmem:[%s17 + $0x140] sm:$0xff]
    %v1148 = vld [vmem:[%s17 + $0x148] sm:$0xff]
    %v1149 = vld [vmem:[%s17 + $0x150] sm:$0xff]
    %v1150 = vld [vmem:[%s17 + $0x158] sm:$0xff]
    %v1151 = vld [vmem:[%s17 + $0x160] sm:$0xff]
    %v1152 = vld [vmem:[%s17 + $0x168] sm:$0xff]
    %v1153 = vld [vmem:[%s17 + $0x170] sm:$0xff]
    %v1154 = vld [vmem:[%s17 + $0x178] sm:$0xff]
    %v1155 = vld [vmem:[%s17 + $0x180] sm:$0xff]
    %v1156 = vld [vmem:[%s17 + $0x188] sm:$0xff]
    %v1157 = vld [vmem:[%s17 + $0x190] sm:$0xff]
    %v1158 = vld [vmem:[%s17 + $0x198] sm:$0xff]
    %v1159 = vld [vmem:[%s17 + $0x1a0] sm:$0xff]
    %v1160 = vld [vmem:[%s17 + $0x1a8] sm:$0xff]
    %v1161 = vld [vmem:[%s17 + $0x1b0] sm:$0xff]
    %v1162 = vld [vmem:[%s17 + $0x1b8] sm:$0xff]
    %v1163 = vld [vmem:[%s17 + $0x1c0] sm:$0xff]
    %v1164 = vld [vmem:[%s17 + $0x1c8] sm:$0xff]
    %v1165 = vld [vmem:[%s17 + $0x1d0] sm:$0xff]
    %v1166 = vld [vmem:[%s17 + $0x1d8] sm:$0xff]
    %v1167 = vld [vmem:[%s17 + $0x1e0] sm:$0xff]
    %v1168 = vld [vmem:[%s17 + $0x1e8] sm:$0xff]
    %v1169 = vld [vmem:[%s17 + $0x1f0] sm:$0xff]
    %v1170 = vld [vmem:[%s17 + $0x1f8] sm:$0xff]
    %v1171 = vld [vmem:[%s17 + $0x200] sm:$0xff]
    %v1172 = vld [vmem:[%s17 + $0x208] sm:$0xff]
    %v1173 = vld [vmem:[%s17 + $0x210] sm:$0xff]
    %v1174 = vld [vmem:[%s17 + $0x218] sm:$0xff]
    %v1175 = vld [vmem:[%s17 + $0x220] sm:$0xff]
    %v1176 = vld [vmem:[%s17 + $0x228] sm:$0xff]
    %v1177 = vld [vmem:[%s17 + $0x230] sm:$0xff]
    %v1178 = vld [vmem:[%s17 + $0x238] sm:$0xff]
    %v1179 = vld [vmem:[%s17 + $0x240] sm:$0xff]
    %v1180 = vld [vmem:[%s17 + $0x248] sm:$0xff]
    %v1181 = vld [vmem:[%s17 + $0x250] sm:$0xff]
    %v1182 = vld [vmem:[%s17 + $0x258] sm:$0xff]
    %v1183 = vld [vmem:[%s17 + $0x260] sm:$0xff]
    %v1184 = vld [vmem:[%s17 + $0x268] sm:$0xff]
    %v1185 = vld [vmem:[%s17 + $0x270] sm:$0xff]
    %v1186 = vld [vmem:[%s17 + $0x278] sm:$0xff]
    %v1187 = vld [vmem:[%s17 + $0x280] sm:$0xff]
    %v1188 = vld [vmem:[%s17 + $0x288] sm:$0xff]
    %v1189 = vld [vmem:[%s17 + $0x290] sm:$0xff]
    %v1190 = vld [vmem:[%s17 + $0x298] sm:$0xff]
    %v1191 = vld [vmem:[%s17 + $0x2a0] sm:$0xff]
    %v1192 = vld [vmem:[%s17 + $0x2a8] sm:$0xff]
    %v1193 = vld [vmem:[%s17 + $0x2b0] sm:$0xff]
    %v1194 = vld [vmem:[%s17 + $0x2b8] sm:$0xff]
    %v1195 = vld [vmem:[%s17 + $0x2c0] sm:$0xff]
    %v1196 = vld [vmem:[%s17 + $0x2c8] sm:$0xff]
    %v1197 = vld [vmem:[%s17 + $0x2d0] sm:$0xff]
    %v1198 = vld [vmem:[%s17 + $0x2d8] sm:$0xff]
    %v1199 = vld [vmem:[%s17 + $0x2e0] sm:$0xff]
    %v1200 = vld [vmem:[%s17 + $0x2e8] sm:$0xff]
    %v1201 = vld [vmem:[%s17 + $0x2f0] sm:$0xff]
    %v1202 = vld [vmem:[%s17 + $0x2f8] sm:$0xff]
    %v1203 = vld [vmem:[%s17 + $0x300] sm:$0xff]
    %v1204 = vld [vmem:[%s17 + $0x308] sm:$0xff]
    %v1205 = vld [vmem:[%s17 + $0x310] sm:$0xff]
    %v1206 = vld [vmem:[%s17 + $0x318] sm:$0xff]
    %v1207 = vld [vmem:[%s17 + $0x320] sm:$0xff]
    %v1208 = vld [vmem:[%s17 + $0x328] sm:$0xff]
    %v1209 = vld [vmem:[%s17 + $0x330] sm:$0xff]
    %v1210 = vld [vmem:[%s17 + $0x338] sm:$0xff]
    %v1211 = vld [vmem:[%s17 + $0x340] sm:$0xff]
    %v1212 = vld [vmem:[%s17 + $0x348] sm:$0xff]
    %v1213 = vld [vmem:[%s17 + $0x350] sm:$0xff]
    %v1214 = vld [vmem:[%s17 + $0x358] sm:$0xff]
    %v1215 = vld [vmem:[%s17 + $0x360] sm:$0xff]
    %v1216 = vld [vmem:[%s17 + $0x368] sm:$0xff]
    %v1217 = vld [vmem:[%s17 + $0x370] sm:$0xff]
    %v1218 = vld [vmem:[%s17 + $0x378] sm:$0xff]
    %v1219 = vld [vmem:[%s17 + $0x380] sm:$0xff]
    %v1220 = vld [vmem:[%s17 + $0x388] sm:$0xff]
    %v1221 = vld [vmem:[%s17 + $0x390] sm:$0xff]
    %v1222 = vld [vmem:[%s17 + $0x398] sm:$0xff]
    %v1223 = vld [vmem:[%s17 + $0x3a0] sm:$0xff]
    %v1224 = vld [vmem:[%s17 + $0x3a8] sm:$0xff]
    %v1225 = vld [vmem:[%s17 + $0x3b0] sm:$0xff]
    %v1226 = vld [vmem:[%s17 + $0x3b8] sm:$0xff]
    %v1227 = vld [vmem:[%s17 + $0x3c0] sm:$0xff]
    %v1228 = vld [vmem:[%s17 + $0x3c8] sm:$0xff]
    %v1229 = vld [vmem:[%s17 + $0x3d0] sm:$0xff]
    %v1230 = vld [vmem:[%s17 + $0x3d8] sm:$0xff]
    %v1231 = vld [vmem:[%s17 + $0x3e0] sm:$0xff]
    %v1232 = vld [vmem:[%s17 + $0x3e8] sm:$0xff]
    %v1233 = vld [vmem:[%s17 + $0x3f0] sm:$0xff]
    %v1234 = vld [vmem:[%s17 + $0x3f8] sm:$0xff]
    %v1235 = vld [vmem:[%s18] sm:$0x1]
    %v1237 = vperm.slane %v1235, 0
    %1239 = vmatpush.msra.mxu0 %v1122
    %1240 = vmatpush.msra.mxu0 %v1121
    %1241 = vmatpush.msra.mxu0 %v1120
    %1242 = vmatpush.msra.mxu0 %v1119
    %1243 = vmatpush.msra.mxu0 %v1118
    %1244 = vmatpush.msra.mxu0 %v1117
    %1245 = vmatpush.msra.mxu0 %v1116
    %1246 = vmatpush.msra.mxu0 %v1115
    %1247 = vmatpush.msra.mxu0 %v1114
    %1248 = vmatpush.msra.mxu0 %v1113
    %1249 = vmatpush.msra.mxu0 %v1112
    %1250 = vmatpush.msra.mxu0 %v1111
    %1251 = vmatpush.msra.mxu0 %v1110
    %1252 = vmatpush.msra.mxu0 %v1109
    %1253 = vmatpush.msra.mxu0 %v1108
    %1254 = vmatpush.msra.mxu0 %v1107
    %1255 = vmatmul.f32.gmra.mxu0 %v1091
    %v1256 = vpop.f32.mrf.mxu0
    %v1257 = vadd.f32 %v1237, %v1256
    %1258 = vmatmul.f32.gmra.mxu0 %v1099
    %v1259 = vpop.f32.mrf.mxu0
    %v1260 = vadd.f32 %v1237, %v1259
    %1261 = vdwg.mxu0
    %1262 = vmatpush.msra.mxu0 %v1138
    %1263 = vmatpush.msra.mxu0 %v1137
    %1264 = vmatpush.msra.mxu0 %v1136
    %1265 = vmatpush.msra.mxu0 %v1135
    %1266 = vmatpush.msra.mxu0 %v1134
    %1267 = vmatpush.msra.mxu0 %v1133
    %1268 = vmatpush.msra.mxu0 %v1132
    %1269 = vmatpush.msra.mxu0 %v1131
    %1270 = vmatpush.msra.mxu0 %v1130
    %1271 = vmatpush.msra.mxu0 %v1129
    %1272 = vmatpush.msra.mxu0 %v1128
    %1273 = vmatpush.msra.mxu0 %v1127
    %1274 = vmatpush.msra.mxu0 %v1126
    %1275 = vmatpush.msra.mxu0 %v1125
    %1276 = vmatpush.msra.mxu0 %v1124
    %1277 = vmatpush.msra.mxu0 %v1123
    %1278 = vmatmul.f32.gmra.mxu0 %v1092
    %v1279 = vpop.f32.mrf.mxu0
    %v1280 = vadd.f32 %v1257, %v1279
    %1281 = vmatmul.f32.gmra.mxu0 %v1100
    %v1282 = vpop.f32.mrf.mxu0
    %v1283 = vadd.f32 %v1260, %v1282
    %1284 = vdwg.mxu0
    %1285 = vmatpush.msra.mxu0 %v1154
    %1286 = vmatpush.msra.mxu0 %v1153
    %1287 = vmatpush.msra.mxu0 %v1152
    %1288 = vmatpush.msra.mxu0 %v1151
    %1289 = vmatpush.msra.mxu0 %v1150
    %1290 = vmatpush.msra.mxu0 %v1149
    %1291 = vmatpush.msra.mxu0 %v1148
    %1292 = vmatpush.msra.mxu0 %v1147
    %1293 = vmatpush.msra.mxu0 %v1146
    %1294 = vmatpush.msra.mxu0 %v1145
    %1295 = vmatpush.msra.mxu0 %v1144
    %1296 = vmatpush.msra.mxu0 %v1143
    %1297 = vmatpush.msra.mxu0 %v1142
    %1298 = vmatpush.msra.mxu0 %v1141
    %1299 = vmatpush.msra.mxu0 %v1140
    %1300 = vmatpush.msra.mxu0 %v1139
    %1301 = vmatmul.f32.gmra.mxu0 %v1093
    %v1302 = vpop.f32.mrf.mxu0
    %v1303 = vadd.f32 %v1280, %v1302
    %1304 = vmatmul.f32.gmra.mxu0 %v1101
    %v1305 = vpop.f32.mrf.mxu0
    %v1306 = vadd.f32 %v1283, %v1305
    %1307 = vdwg.mxu0
    %1308 = vmatpush.msra.mxu0 %v1170
    %1309 = vmatpush.msra.mxu0 %v1169
    %1310 = vmatpush.msra.mxu0 %v1168
    %1311 = vmatpush.msra.mxu0 %v1167
    %1312 = vmatpush.msra.mxu0 %v1166
    %1313 = vmatpush.msra.mxu0 %v1165
    %1314 = vmatpush.msra.mxu0 %v1164
    %1315 = vmatpush.msra.mxu0 %v1163
    %1316 = vmatpush.msra.mxu0 %v1162
    %1317 = vmatpush.msra.mxu0 %v1161
    %1318 = vmatpush.msra.mxu0 %v1160
    %1319 = vmatpush.msra.mxu0 %v1159
    %1320 = vmatpush.msra.mxu0 %v1158
    %1321 = vmatpush.msra.mxu0 %v1157
    %1322 = vmatpush.msra.mxu0 %v1156
    %1323 = vmatpush.msra.mxu0 %v1155
    %1324 = vmatmul.f32.gmra.mxu0 %v1094
    %v1325 = vpop.f32.mrf.mxu0
    %v1326 = vadd.f32 %v1303, %v1325
    %1327 = vmatmul.f32.gmra.mxu0 %v1102
    %v1328 = vpop.f32.mrf.mxu0
    %v1329 = vadd.f32 %v1306, %v1328
    %1330 = vdwg.mxu0
    %1331 = vmatpush.msra.mxu0 %v1186
    %1332 = vmatpush.msra.mxu0 %v1185
    %1333 = vmatpush.msra.mxu0 %v1184
    %1334 = vmatpush.msra.mxu0 %v1183
    %1335 = vmatpush.msra.mxu0 %v1182
    %1336 = vmatpush.msra.mxu0 %v1181
    %1337 = vmatpush.msra.mxu0 %v1180
    %1338 = vmatpush.msra.mxu0 %v1179
    %1339 = vmatpush.msra.mxu0 %v1178
    %1340 = vmatpush.msra.mxu0 %v1177
    %1341 = vmatpush.msra.mxu0 %v1176
    %1342 = vmatpush.msra.mxu0 %v1175
    %1343 = vmatpush.msra.mxu0 %v1174
    %1344 = vmatpush.msra.mxu0 %v1173
    %1345 = vmatpush.msra.mxu0 %v1172
    %1346 = vmatpush.msra.mxu0 %v1171
    %1347 = vmatmul.f32.gmra.mxu0 %v1095
    %v1348 = vpop.f32.mrf.mxu0
    %v1349 = vadd.f32 %v1326, %v1348
    %1350 = vmatmul.f32.gmra.mxu0 %v1103
    %v1351 = vpop.f32.mrf.mxu0
    %v1352 = vadd.f32 %v1329, %v1351
    %1353 = vdwg.mxu0
    %1354 = vmatpush.msra.mxu0 %v1202
    %1355 = vmatpush.msra.mxu0 %v1201
    %1356 = vmatpush.msra.mxu0 %v1200
    %1357 = vmatpush.msra.mxu0 %v1199
    %1358 = vmatpush.msra.mxu0 %v1198
    %1359 = vmatpush.msra.mxu0 %v1197
    %1360 = vmatpush.msra.mxu0 %v1196
    %1361 = vmatpush.msra.mxu0 %v1195
    %1362 = vmatpush.msra.mxu0 %v1194
    %1363 = vmatpush.msra.mxu0 %v1193
    %1364 = vmatpush.msra.mxu0 %v1192
    %1365 = vmatpush.msra.mxu0 %v1191
    %1366 = vmatpush.msra.mxu0 %v1190
    %1367 = vmatpush.msra.mxu0 %v1189
    %1368 = vmatpush.msra.mxu0 %v1188
    %1369 = vmatpush.msra.mxu0 %v1187
    %1370 = vmatmul.f32.gmra.mxu0 %v1096
    %v1371 = vpop.f32.mrf.mxu0
    %v1372 = vadd.f32 %v1349, %v1371
    %1373 = vmatmul.f32.gmra.mxu0 %v1104
    %v1374 = vpop.f32.mrf.mxu0
    %v1375 = vadd.f32 %v1352, %v1374
    %1376 = vdwg.mxu0
    %1377 = vmatpush.msra.mxu0 %v1218
    %1378 = vmatpush.msra.mxu0 %v1217
    %1379 = vmatpush.msra.mxu0 %v1216
    %1380 = vmatpush.msra.mxu0 %v1215
    %1381 = vmatpush.msra.mxu0 %v1214
    %1382 = vmatpush.msra.mxu0 %v1213
    %1383 = vmatpush.msra.mxu0 %v1212
    %1384 = vmatpush.msra.mxu0 %v1211
    %1385 = vmatpush.msra.mxu0 %v1210
    %1386 = vmatpush.msra.mxu0 %v1209
    %1387 = vmatpush.msra.mxu0 %v1208
    %1388 = vmatpush.msra.mxu0 %v1207
    %1389 = vmatpush.msra.mxu0 %v1206
    %1390 = vmatpush.msra.mxu0 %v1205
    %1391 = vmatpush.msra.mxu0 %v1204
    %1392 = vmatpush.msra.mxu0 %v1203
    %1393 = vmatmul.f32.gmra.mxu0 %v1097
    %v1394 = vpop.f32.mrf.mxu0
    %v1395 = vadd.f32 %v1372, %v1394
    %1396 = vmatmul.f32.gmra.mxu0 %v1105
    %v1397 = vpop.f32.mrf.mxu0
    %v1398 = vadd.f32 %v1375, %v1397
    %1399 = vdwg.mxu0
    %1400 = vmatpush.msra.mxu0 %v1234
    %1401 = vmatpush.msra.mxu0 %v1233
    %1402 = vmatpush.msra.mxu0 %v1232
    %1403 = vmatpush.msra.mxu0 %v1231
    %1404 = vmatpush.msra.mxu0 %v1230
    %1405 = vmatpush.msra.mxu0 %v1229
    %1406 = vmatpush.msra.mxu0 %v1228
    %1407 = vmatpush.msra.mxu0 %v1227
    %1408 = vmatpush.msra.mxu0 %v1226
    %1409 = vmatpush.msra.mxu0 %v1225
    %1410 = vmatpush.msra.mxu0 %v1224
    %1411 = vmatpush.msra.mxu0 %v1223
    %1412 = vmatpush.msra.mxu0 %v1222
    %1413 = vmatpush.msra.mxu0 %v1221
    %1414 = vmatpush.msra.mxu0 %v1220
    %1415 = vmatpush.msra.mxu0 %v1219
    %1416 = vmatmul.f32.gmra.mxu0 %v1098
    %v1417 = vpop.f32.mrf.mxu0
    %v1418 = vadd.f32 %v1395, %v1417
    %1419 = vmatmul.f32.gmra.mxu0 %v1106
    %v1420 = vpop.f32.mrf.mxu0
    %v1421 = vadd.f32 %v1398, %v1420
    %1422 = vdwg.mxu0
    %v1423 = vadd.f32 %v817, %v1418
    %v1424 = vadd.f32 %v818, %v1421
    %v1425 = vld [vmem:[%s19] sm:$0x1]
    %v1426 = vld [vmem:[%s20] sm:$0x1]
    %v1427 = vsel %vm381, %v1423, 0.0
    %1428 = vadd.xlane.f32.xlu0 %v1427
    %v1429 = vpop.xlane.xlu0 %1428
    %v1430 = vsel %vm381, %v1424, 0.0
    %1431 = vadd.xlane.f32.xlu0 %v1430
    %v1432 = vpop.xlane.xlu0 %1431
    %v1433 = vmul.f32 %v1429, %v770
    %v1434 = vmul.f32 %v1432, %v770
    %v1435 = vsub.f32 %v1423, %v1433
    %v1436 = vsub.f32 %v1424, %v1434
    %v1437 = vmul.f32 %v1435, %v1435
    %v1438 = vmul.f32 %v1436, %v1436
    %v1439 = vsel %vm381, %v1437, 0.0
    %1440 = vadd.xlane.f32.xlu0 %v1439
    %v1441 = vpop.xlane.xlu0 %1440
    %v1442 = vsel %vm381, %v1438, 0.0
    %1443 = vadd.xlane.f32.xlu0 %v1442
    %v1444 = vpop.xlane.xlu0 %1443
    %v1445 = vmul.f32 %v1441, %v770
    %v1446 = vmul.f32 %v1444, %v770
    %v1447 = vadd.f32 %v1445, 1e-05
    %v1448 = vadd.f32 %v1446, 1e-05
    %v1449 = vrsqrt.pop %v1447
    %v1450 = vmul.f32 %v1449, %v1447
    %v1451 = vmul.f32 %v1450, %v1449
    %v1452 = vmul.f32 0.5, %v1451
    %v1453 = vsub.f32 1.5, %v1452
    %v1454 = vmul.f32 %v1449, %v1453
    %vm1455 = vweird.f32 %v1447
    %vm1456 = vweird.f32 %v1449
    %vm1457 = vmor %vm1455, %vm1456
    %v1458 = vsel %vm1457, %v1449, %v1454
    %v1459 = vrsqrt.pop %v1448
    %v1460 = vmul.f32 %v1459, %v1448
    %v1461 = vmul.f32 %v1460, %v1459
    %v1462 = vmul.f32 0.5, %v1461
    %v1463 = vsub.f32 1.5, %v1462
    %v1464 = vmul.f32 %v1459, %v1463
    %vm1465 = vweird.f32 %v1448
    %vm1466 = vweird.f32 %v1459
    %vm1467 = vmor %vm1465, %vm1466
    %v1468 = vsel %vm1467, %v1459, %v1464
    %v1469 = vmul.f32 %v1435, %v1458
    %v1470 = vmul.f32 %v1436, %v1468
    %v1472 = vperm.slane %v1425, 0
    %v1474 = vmul.f32 %v1469, %v1472
    %v1475 = vmul.f32 %v1470, %v1472
    %v1477 = vperm.slane %v1426, 0
    %v1479 = vadd.f32 %v1474, %v1477
    %v1480 = vadd.f32 %v1475, %v1477
    %s1481 = scalar_lea.vmem %s9, 128
    %v1482 = vld [vmem:[%s1481] sm:$0xff]
    %v1483 = vld [vmem:[%s1481 + $0x8] sm:$0xff]
    %v1484 = vld [vmem:[%s1481 + $0x10] sm:$0xff]
    %v1485 = vld [vmem:[%s1481 + $0x18] sm:$0xff]
    %v1486 = vld [vmem:[%s1481 + $0x20] sm:$0xff]
    %v1487 = vld [vmem:[%s1481 + $0x28] sm:$0xff]
    %v1488 = vld [vmem:[%s1481 + $0x30] sm:$0xff]
    %v1489 = vld [vmem:[%s1481 + $0x38] sm:$0xff]
    %v1490 = vld [vmem:[%s1481 + $0x40] sm:$0xff]
    %v1491 = vld [vmem:[%s1481 + $0x48] sm:$0xff]
    %v1492 = vld [vmem:[%s1481 + $0x50] sm:$0xff]
    %v1493 = vld [vmem:[%s1481 + $0x58] sm:$0xff]
    %v1494 = vld [vmem:[%s1481 + $0x60] sm:$0xff]
    %v1495 = vld [vmem:[%s1481 + $0x68] sm:$0xff]
    %v1496 = vld [vmem:[%s1481 + $0x70] sm:$0xff]
    %v1497 = vld [vmem:[%s1481 + $0x78] sm:$0xff]
    %s1498 = scalar_lea.vmem %s10, 2
    %v1499 = vld [vmem:[%s1498] sm:$0x3]
    %v1501 = vperm.slane %v1499, 0
    %v1502 = vperm.slane %v1499, 1
    %v1506 = vsel %vm381, %v1479, 0
    %v1509 = vsel %vm381, %v1480, 0
    %1511 = vmatpush.msra.mxu0 0.0
    %1512 = vmatpush.msra.mxu0 0.0
    %1513 = vmatpush.msra.mxu0 0.0
    %1514 = vmatpush.msra.mxu0 0.0
    %1515 = vmatpush.msra.mxu0 0.0
    %1516 = vmatpush.msra.mxu0 0.0
    %1517 = vmatpush.msra.mxu0 0.0
    %1518 = vmatpush.msra.mxu0 0.0
    %1519 = vmatpush.msra.mxu0 %v1496
    %1520 = vmatpush.msra.mxu0 %v1494
    %1521 = vmatpush.msra.mxu0 %v1492
    %1522 = vmatpush.msra.mxu0 %v1490
    %1523 = vmatpush.msra.mxu0 %v1488
    %1524 = vmatpush.msra.mxu0 %v1486
    %1525 = vmatpush.msra.mxu0 %v1484
    %1526 = vmatpush.msra.mxu0 %v1482
    %1527 = vmatmul.f32.gmra.mxu0 %v1506
    %v1528 = vpop.f32.mrf.mxu0
    %v1529 = vadd.f32 %v1501, %v1528
    %1530 = vmatmul.f32.gmra.mxu0 %v1509
    %v1531 = vpop.f32.mrf.mxu0
    %v1532 = vadd.f32 %v1501, %v1531
    %1533 = vdwg.mxu0
    %1534 = vmatpush.msra.mxu0 0.0
    %1535 = vmatpush.msra.mxu0 0.0
    %1536 = vmatpush.msra.mxu0 0.0
    %1537 = vmatpush.msra.mxu0 0.0
    %1538 = vmatpush.msra.mxu0 0.0
    %1539 = vmatpush.msra.mxu0 0.0
    %1540 = vmatpush.msra.mxu0 0.0
    %1541 = vmatpush.msra.mxu0 0.0
    %1542 = vmatpush.msra.mxu0 %v1497
    %1543 = vmatpush.msra.mxu0 %v1495
    %1544 = vmatpush.msra.mxu0 %v1493
    %1545 = vmatpush.msra.mxu0 %v1491
    %1546 = vmatpush.msra.mxu0 %v1489
    %1547 = vmatpush.msra.mxu0 %v1487
    %1548 = vmatpush.msra.mxu0 %v1485
    %1549 = vmatpush.msra.mxu0 %v1483
    %1550 = vmatmul.f32.gmra.mxu0 %v1506
    %v1551 = vpop.f32.mrf.mxu0
    %v1552 = vadd.f32 %v1502, %v1551
    %1553 = vmatmul.f32.gmra.mxu0 %v1509
    %v1554 = vpop.f32.mrf.mxu0
    %v1555 = vadd.f32 %v1502, %v1554
    %1556 = vdwg.mxu0
    %1558 = vrot.lane.b32.xlu0 %v1529, 64
    %v1559 = vpop.permute.xlu0 %1558
    %v1560 = vsel %vm437, %v1529, 0
    %v1562 = vsel %vm437, %v1559, 0
    %1564 = vmatpush.xpose.msra.mxu0 0.0
    %1565 = vmatpush.xpose.msra.mxu0 0.0
    %1566 = vmatpush.xpose.msra.mxu0 0.0
    %1567 = vmatpush.xpose.msra.mxu0 0.0
    %1568 = vmatpush.xpose.msra.mxu0 0.0
    %1569 = vmatpush.xpose.msra.mxu0 0.0
    %1570 = vmatpush.xpose.msra.mxu0 0.0
    %1571 = vmatpush.xpose.msra.mxu0 0.0
    %1572 = vmatpush.xpose.msra.mxu0 0.0
    %1573 = vmatpush.xpose.msra.mxu0 0.0
    %1574 = vmatpush.xpose.msra.mxu0 0.0
    %1575 = vmatpush.xpose.msra.mxu0 0.0
    %1576 = vmatpush.xpose.msra.mxu0 0.0
    %1577 = vmatpush.xpose.msra.mxu0 0.0
    %1578 = vmatpush.xpose.msra.mxu0 0.0
    %1579 = vmatpush.xpose.msra.mxu0 %v1562
    %1580 = vmatmul.f32.gmra.mxu0 %v1560
    %v1581 = vpop.f32.mrf.mxu0
    %v1582 = vadd.f32 0.0, %v1581
    %1583 = vdwg.mxu0
    %1585 = vrot.lane.b32.xlu0 %v1532, 64
    %v1586 = vpop.permute.xlu0 %1585
    %v1587 = vsel %vm437, %v1532, 0
    %v1589 = vsel %vm437, %v1586, 0
    %1591 = vmatpush.xpose.msra.mxu0 0.0
    %1592 = vmatpush.xpose.msra.mxu0 0.0
    %1593 = vmatpush.xpose.msra.mxu0 0.0
    %1594 = vmatpush.xpose.msra.mxu0 0.0
    %1595 = vmatpush.xpose.msra.mxu0 0.0
    %1596 = vmatpush.xpose.msra.mxu0 0.0
    %1597 = vmatpush.xpose.msra.mxu0 0.0
    %1598 = vmatpush.xpose.msra.mxu0 0.0
    %1599 = vmatpush.xpose.msra.mxu0 0.0
    %1600 = vmatpush.xpose.msra.mxu0 0.0
    %1601 = vmatpush.xpose.msra.mxu0 0.0
    %1602 = vmatpush.xpose.msra.mxu0 0.0
    %1603 = vmatpush.xpose.msra.mxu0 0.0
    %1604 = vmatpush.xpose.msra.mxu0 0.0
    %1605 = vmatpush.xpose.msra.mxu0 0.0
    %1606 = vmatpush.xpose.msra.mxu0 %v1589
    %1607 = vmatmul.f32.gmra.mxu0 %v1587
    %v1608 = vpop.f32.mrf.mxu0
    %v1609 = vadd.f32 0.0, %v1608
    %1610 = vdwg.mxu0
    %v1611 = vmul.f32 %v1582, 0.17677669
    %v1612 = vmul.f32 %v1609, 0.17677669
    %v1613 = vadd.f32 %v1611, %v493
    %v1614 = vadd.f32 %v1612, %v494
    %v1615 = vsel %vm286, %v1613, -inf
    %1616 = vmax.xlane.f32.xlu0 %v1615
    %v1617 = vpop.xlane.xlu0 %1616
    %v1618 = vsel %vm286, %v1614, -inf
    %1619 = vmax.xlane.f32.xlu0 %v1618
    %v1620 = vpop.xlane.xlu0 %1619
    %v1621 = vsub.f32 %v1613, %v1617
    %v1622 = vsub.f32 %v1614, %v1620
    %v1623 = vmul.f32 %v1621, 1.442695
    %v1624 = vpow.pop %v1623
    %v1625 = vmul.f32 %v1622, 1.442695
    %v1626 = vpow.pop %v1625
    %v1627 = vsel %vm286, %v1624, 0.0
    %1628 = vadd.xlane.f32.xlu0 %v1627
    %v1629 = vpop.xlane.xlu0 %1628
    %v1630 = vsel %vm286, %v1626, 0.0
    %1631 = vadd.xlane.f32.xlu0 %v1630
    %v1632 = vpop.xlane.xlu0 %1631
    %v1633 = vrcp.pop %v1629
    %v1634 = vrcp.pop %v1632
    %v1635 = vmul.f32 %v1624, %v1633
    %v1636 = vmul.f32 %v1626, %v1634
    %v1638 = vsel %vm286, %v1635, 0
    %1640 = vmatpush.msra.mxu0 0.0
    %1641 = vmatpush.msra.mxu0 0.0
    %1642 = vmatpush.msra.mxu0 0.0
    %1643 = vmatpush.msra.mxu0 0.0
    %1644 = vmatpush.msra.mxu0 0.0
    %1645 = vmatpush.msra.mxu0 0.0
    %1646 = vmatpush.msra.mxu0 0.0
    %1647 = vmatpush.msra.mxu0 0.0
    %1648 = vmatpush.msra.mxu0 0.0
    %1649 = vmatpush.msra.mxu0 0.0
    %1650 = vmatpush.msra.mxu0 0.0
    %1651 = vmatpush.msra.mxu0 0.0
    %1652 = vmatpush.msra.mxu0 0.0
    %1653 = vmatpush.msra.mxu0 0.0
    %1654 = vmatpush.msra.mxu0 0.0
    %1655 = vmatpush.msra.mxu0 %v1552
    %1656 = vmatmul.f32.gmra.mxu0 %v1638
    %v1657 = vpop.f32.mrf.mxu0
    %v1658 = vadd.f32 0.0, %v1657
    %1659 = vdwg.mxu0
    %v1661 = vsel %vm286, %v1636, 0
    %1663 = vmatpush.msra.mxu0 0.0
    %1664 = vmatpush.msra.mxu0 0.0
    %1665 = vmatpush.msra.mxu0 0.0
    %1666 = vmatpush.msra.mxu0 0.0
    %1667 = vmatpush.msra.mxu0 0.0
    %1668 = vmatpush.msra.mxu0 0.0
    %1669 = vmatpush.msra.mxu0 0.0
    %1670 = vmatpush.msra.mxu0 0.0
    %1671 = vmatpush.msra.mxu0 0.0
    %1672 = vmatpush.msra.mxu0 0.0
    %1673 = vmatpush.msra.mxu0 0.0
    %1674 = vmatpush.msra.mxu0 0.0
    %1675 = vmatpush.msra.mxu0 0.0
    %1676 = vmatpush.msra.mxu0 0.0
    %1677 = vmatpush.msra.mxu0 0.0
    %1678 = vmatpush.msra.mxu0 %v1555
    %1679 = vmatmul.f32.gmra.mxu0 %v1661
    %v1680 = vpop.f32.mrf.mxu0
    %v1681 = vadd.f32 0.0, %v1680
    %1682 = vdwg.mxu0
    %1683 = vrot.lane.b32.xlu0 %v1529, 96
    %v1684 = vpop.permute.xlu0 %1683
    %1685 = vrot.lane.b32.xlu0 %v1529, 32
    %v1686 = vpop.permute.xlu0 %1685
    %v1687 = vsel %vm437, %v1684, 0
    %v1689 = vsel %vm437, %v1686, 0
    %1691 = vmatpush.xpose.msra.mxu0 0.0
    %1692 = vmatpush.xpose.msra.mxu0 0.0
    %1693 = vmatpush.xpose.msra.mxu0 0.0
    %1694 = vmatpush.xpose.msra.mxu0 0.0
    %1695 = vmatpush.xpose.msra.mxu0 0.0
    %1696 = vmatpush.xpose.msra.mxu0 0.0
    %1697 = vmatpush.xpose.msra.mxu0 0.0
    %1698 = vmatpush.xpose.msra.mxu0 0.0
    %1699 = vmatpush.xpose.msra.mxu0 0.0
    %1700 = vmatpush.xpose.msra.mxu0 0.0
    %1701 = vmatpush.xpose.msra.mxu0 0.0
    %1702 = vmatpush.xpose.msra.mxu0 0.0
    %1703 = vmatpush.xpose.msra.mxu0 0.0
    %1704 = vmatpush.xpose.msra.mxu0 0.0
    %1705 = vmatpush.xpose.msra.mxu0 0.0
    %1706 = vmatpush.xpose.msra.mxu0 %v1689
    %1707 = vmatmul.f32.gmra.mxu0 %v1687
    %v1708 = vpop.f32.mrf.mxu0
    %v1709 = vadd.f32 0.0, %v1708
    %1710 = vdwg.mxu0
    %1711 = vrot.lane.b32.xlu0 %v1532, 96
    %v1712 = vpop.permute.xlu0 %1711
    %1713 = vrot.lane.b32.xlu0 %v1532, 32
    %v1714 = vpop.permute.xlu0 %1713
    %v1715 = vsel %vm437, %v1712, 0
    %v1717 = vsel %vm437, %v1714, 0
    %1719 = vmatpush.xpose.msra.mxu0 0.0
    %1720 = vmatpush.xpose.msra.mxu0 0.0
    %1721 = vmatpush.xpose.msra.mxu0 0.0
    %1722 = vmatpush.xpose.msra.mxu0 0.0
    %1723 = vmatpush.xpose.msra.mxu0 0.0
    %1724 = vmatpush.xpose.msra.mxu0 0.0
    %1725 = vmatpush.xpose.msra.mxu0 0.0
    %1726 = vmatpush.xpose.msra.mxu0 0.0
    %1727 = vmatpush.xpose.msra.mxu0 0.0
    %1728 = vmatpush.xpose.msra.mxu0 0.0
    %1729 = vmatpush.xpose.msra.mxu0 0.0
    %1730 = vmatpush.xpose.msra.mxu0 0.0
    %1731 = vmatpush.xpose.msra.mxu0 0.0
    %1732 = vmatpush.xpose.msra.mxu0 0.0
    %1733 = vmatpush.xpose.msra.mxu0 0.0
    %1734 = vmatpush.xpose.msra.mxu0 %v1717
    %1735 = vmatmul.f32.gmra.mxu0 %v1715
    %v1736 = vpop.f32.mrf.mxu0
    %v1737 = vadd.f32 0.0, %v1736
    %1738 = vdwg.mxu0
    %v1739 = vmul.f32 %v1709, 0.17677669
    %v1740 = vmul.f32 %v1737, 0.17677669
    %v1741 = vadd.f32 %v1739, %v493
    %v1742 = vadd.f32 %v1740, %v494
    %v1743 = vsel %vm286, %v1741, -inf
    %1744 = vmax.xlane.f32.xlu0 %v1743
    %v1745 = vpop.xlane.xlu0 %1744
    %v1746 = vsel %vm286, %v1742, -inf
    %1747 = vmax.xlane.f32.xlu0 %v1746
    %v1748 = vpop.xlane.xlu0 %1747
    %v1749 = vsub.f32 %v1741, %v1745
    %v1750 = vsub.f32 %v1742, %v1748
    %v1751 = vmul.f32 %v1749, 1.442695
    %v1752 = vpow.pop %v1751
    %v1753 = vmul.f32 %v1750, 1.442695
    %v1754 = vpow.pop %v1753
    %v1755 = vsel %vm286, %v1752, 0.0
    %1756 = vadd.xlane.f32.xlu0 %v1755
    %v1757 = vpop.xlane.xlu0 %1756
    %v1758 = vsel %vm286, %v1754, 0.0
    %1759 = vadd.xlane.f32.xlu0 %v1758
    %v1760 = vpop.xlane.xlu0 %1759
    %v1761 = vrcp.pop %v1757
    %v1762 = vrcp.pop %v1760
    %v1763 = vmul.f32 %v1752, %v1761
    %v1764 = vmul.f32 %v1754, %v1762
    %1766 = vrot.lane.b32.xlu0 %v1552, 96
    %v1767 = vpop.permute.xlu0 %1766
    %v1770 = vsel %vm286, %v1763, 0
    %1772 = vmatpush.msra.mxu0 0.0
    %1773 = vmatpush.msra.mxu0 0.0
    %1774 = vmatpush.msra.mxu0 0.0
    %1775 = vmatpush.msra.mxu0 0.0
    %1776 = vmatpush.msra.mxu0 0.0
    %1777 = vmatpush.msra.mxu0 0.0
    %1778 = vmatpush.msra.mxu0 0.0
    %1779 = vmatpush.msra.mxu0 0.0
    %1780 = vmatpush.msra.mxu0 0.0
    %1781 = vmatpush.msra.mxu0 0.0
    %1782 = vmatpush.msra.mxu0 0.0
    %1783 = vmatpush.msra.mxu0 0.0
    %1784 = vmatpush.msra.mxu0 0.0
    %1785 = vmatpush.msra.mxu0 0.0
    %1786 = vmatpush.msra.mxu0 0.0
    %1787 = vmatpush.msra.mxu0 %v1767
    %1788 = vmatmul.f32.gmra.mxu0 %v1770
    %v1789 = vpop.f32.mrf.mxu0
    %v1790 = vadd.f32 0.0, %v1789
    %1791 = vdwg.mxu0
    %1793 = vrot.lane.b32.xlu0 %v1555, 96
    %v1794 = vpop.permute.xlu0 %1793
    %v1797 = vsel %vm286, %v1764, 0
    %1799 = vmatpush.msra.mxu0 0.0
    %1800 = vmatpush.msra.mxu0 0.0
    %1801 = vmatpush.msra.mxu0 0.0
    %1802 = vmatpush.msra.mxu0 0.0
    %1803 = vmatpush.msra.mxu0 0.0
    %1804 = vmatpush.msra.mxu0 0.0
    %1805 = vmatpush.msra.mxu0 0.0
    %1806 = vmatpush.msra.mxu0 0.0
    %1807 = vmatpush.msra.mxu0 0.0
    %1808 = vmatpush.msra.mxu0 0.0
    %1809 = vmatpush.msra.mxu0 0.0
    %1810 = vmatpush.msra.mxu0 0.0
    %1811 = vmatpush.msra.mxu0 0.0
    %1812 = vmatpush.msra.mxu0 0.0
    %1813 = vmatpush.msra.mxu0 0.0
    %1814 = vmatpush.msra.mxu0 %v1794
    %1815 = vmatmul.f32.gmra.mxu0 %v1797
    %v1816 = vpop.f32.mrf.mxu0
    %v1817 = vadd.f32 0.0, %v1816
    %1818 = vdwg.mxu0
    %1821 = vrot.lane.b32.xlu0 %v1790, 32
    %v1822 = vpop.permute.xlu0 %1821
    %1823 = vrot.lane.b32.xlu0 %v1817, 32
    %v1824 = vpop.permute.xlu0 %1823
    %v1827 = vsel %vm437, %v1658, %v1822
    %v1828 = vsel %vm437, %v1681, %v1824
    %s1829 = scalar_lea.vmem %s11, 64
    %v1830 = vld [vmem:[%s1829] sm:$0xff]
    %v1831 = vld [vmem:[%s1829 + $0x8] sm:$0xff]
    %v1832 = vld [vmem:[%s1829 + $0x10] sm:$0xff]
    %v1833 = vld [vmem:[%s1829 + $0x18] sm:$0xff]
    %v1834 = vld [vmem:[%s1829 + $0x20] sm:$0xff]
    %v1835 = vld [vmem:[%s1829 + $0x28] sm:$0xff]
    %v1836 = vld [vmem:[%s1829 + $0x30] sm:$0xff]
    %v1837 = vld [vmem:[%s1829 + $0x38] sm:$0xff]
    %s1838 = scalar_lea.vmem %s12, 1
    %v1839 = vld [vmem:[%s1838] sm:$0x1]
    %v1841 = vperm.slane %v1839, 0
    %v1844 = vsel %vm381, %v1827, 0
    %v1847 = vsel %vm381, %v1828, 0
    %1849 = vmatpush.msra.mxu0 0.0
    %1850 = vmatpush.msra.mxu0 0.0
    %1851 = vmatpush.msra.mxu0 0.0
    %1852 = vmatpush.msra.mxu0 0.0
    %1853 = vmatpush.msra.mxu0 0.0
    %1854 = vmatpush.msra.mxu0 0.0
    %1855 = vmatpush.msra.mxu0 0.0
    %1856 = vmatpush.msra.mxu0 0.0
    %1857 = vmatpush.msra.mxu0 %v1837
    %1858 = vmatpush.msra.mxu0 %v1836
    %1859 = vmatpush.msra.mxu0 %v1835
    %1860 = vmatpush.msra.mxu0 %v1834
    %1861 = vmatpush.msra.mxu0 %v1833
    %1862 = vmatpush.msra.mxu0 %v1832
    %1863 = vmatpush.msra.mxu0 %v1831
    %1864 = vmatpush.msra.mxu0 %v1830
    %1865 = vmatmul.f32.gmra.mxu0 %v1844
    %v1866 = vpop.f32.mrf.mxu0
    %v1867 = vadd.f32 %v1841, %v1866
    %1868 = vmatmul.f32.gmra.mxu0 %v1847
    %v1869 = vpop.f32.mrf.mxu0
    %v1870 = vadd.f32 %v1841, %v1869
    %1871 = vdwg.mxu0
    %v1872 = vadd.f32 %v1479, %v1867
    %v1873 = vadd.f32 %v1480, %v1870
    %s1874 = scalar_lea.vmem %s13, 1
    %v1875 = vld [vmem:[%s1874] sm:$0x1]
    %s1876 = scalar_lea.vmem %s14, 1
    %v1877 = vld [vmem:[%s1876] sm:$0x1]
    %v1878 = vsel %vm381, %v1872, 0.0
    %1879 = vadd.xlane.f32.xlu0 %v1878
    %v1880 = vpop.xlane.xlu0 %1879
    %v1881 = vsel %vm381, %v1873, 0.0
    %1882 = vadd.xlane.f32.xlu0 %v1881
    %v1883 = vpop.xlane.xlu0 %1882
    %v1884 = vmul.f32 %v1880, %v770
    %v1885 = vmul.f32 %v1883, %v770
    %v1886 = vsub.f32 %v1872, %v1884
    %v1887 = vsub.f32 %v1873, %v1885
    %v1888 = vmul.f32 %v1886, %v1886
    %v1889 = vmul.f32 %v1887, %v1887
    %v1890 = vsel %vm381, %v1888, 0.0
    %1891 = vadd.xlane.f32.xlu0 %v1890
    %v1892 = vpop.xlane.xlu0 %1891
    %v1893 = vsel %vm381, %v1889, 0.0
    %1894 = vadd.xlane.f32.xlu0 %v1893
    %v1895 = vpop.xlane.xlu0 %1894
    %v1896 = vmul.f32 %v1892, %v770
    %v1897 = vmul.f32 %v1895, %v770
    %v1898 = vadd.f32 %v1896, 1e-05
    %v1899 = vadd.f32 %v1897, 1e-05
    %v1900 = vrsqrt.pop %v1898
    %v1901 = vmul.f32 %v1900, %v1898
    %v1902 = vmul.f32 %v1901, %v1900
    %v1903 = vmul.f32 0.5, %v1902
    %v1904 = vsub.f32 1.5, %v1903
    %v1905 = vmul.f32 %v1900, %v1904
    %vm1906 = vweird.f32 %v1898
    %vm1907 = vweird.f32 %v1900
    %vm1908 = vmor %vm1906, %vm1907
    %v1909 = vsel %vm1908, %v1900, %v1905
    %v1910 = vrsqrt.pop %v1899
    %v1911 = vmul.f32 %v1910, %v1899
    %v1912 = vmul.f32 %v1911, %v1910
    %v1913 = vmul.f32 0.5, %v1912
    %v1914 = vsub.f32 1.5, %v1913
    %v1915 = vmul.f32 %v1910, %v1914
    %vm1916 = vweird.f32 %v1899
    %vm1917 = vweird.f32 %v1910
    %vm1918 = vmor %vm1916, %vm1917
    %v1919 = vsel %vm1918, %v1910, %v1915
    %v1920 = vmul.f32 %v1886, %v1909
    %v1921 = vmul.f32 %v1887, %v1919
    %v1923 = vperm.slane %v1875, 0
    %v1925 = vmul.f32 %v1920, %v1923
    %v1926 = vmul.f32 %v1921, %v1923
    %v1928 = vperm.slane %v1877, 0
    %v1930 = vadd.f32 %v1925, %v1928
    %v1931 = vadd.f32 %v1926, %v1928
    %s1932 = scalar_lea.vmem %s15, 512
    %v1933 = vld [vmem:[%s1932] sm:$0xff]
    %v1934 = vld [vmem:[%s1932 + $0x8] sm:$0xff]
    %v1935 = vld [vmem:[%s1932 + $0x10] sm:$0xff]
    %v1936 = vld [vmem:[%s1932 + $0x18] sm:$0xff]
    %v1937 = vld [vmem:[%s1932 + $0x20] sm:$0xff]
    %v1938 = vld [vmem:[%s1932 + $0x28] sm:$0xff]
    %v1939 = vld [vmem:[%s1932 + $0x30] sm:$0xff]
    %v1940 = vld [vmem:[%s1932 + $0x38] sm:$0xff]
    %v1941 = vld [vmem:[%s1932 + $0x40] sm:$0xff]
    %v1942 = vld [vmem:[%s1932 + $0x48] sm:$0xff]
    %v1943 = vld [vmem:[%s1932 + $0x50] sm:$0xff]
    %v1944 = vld [vmem:[%s1932 + $0x58] sm:$0xff]
    %v1945 = vld [vmem:[%s1932 + $0x60] sm:$0xff]
    %v1946 = vld [vmem:[%s1932 + $0x68] sm:$0xff]
    %v1947 = vld [vmem:[%s1932 + $0x70] sm:$0xff]
    %v1948 = vld [vmem:[%s1932 + $0x78] sm:$0xff]
    %v1949 = vld [vmem:[%s1932 + $0x80] sm:$0xff]
    %v1950 = vld [vmem:[%s1932 + $0x88] sm:$0xff]
    %v1951 = vld [vmem:[%s1932 + $0x90] sm:$0xff]
    %v1952 = vld [vmem:[%s1932 + $0x98] sm:$0xff]
    %v1953 = vld [vmem:[%s1932 + $0xa0] sm:$0xff]
    %v1954 = vld [vmem:[%s1932 + $0xa8] sm:$0xff]
    %v1955 = vld [vmem:[%s1932 + $0xb0] sm:$0xff]
    %v1956 = vld [vmem:[%s1932 + $0xb8] sm:$0xff]
    %v1957 = vld [vmem:[%s1932 + $0xc0] sm:$0xff]
    %v1958 = vld [vmem:[%s1932 + $0xc8] sm:$0xff]
    %v1959 = vld [vmem:[%s1932 + $0xd0] sm:$0xff]
    %v1960 = vld [vmem:[%s1932 + $0xd8] sm:$0xff]
    %v1961 = vld [vmem:[%s1932 + $0xe0] sm:$0xff]
    %v1962 = vld [vmem:[%s1932 + $0xe8] sm:$0xff]
    %v1963 = vld [vmem:[%s1932 + $0xf0] sm:$0xff]
    %v1964 = vld [vmem:[%s1932 + $0xf8] sm:$0xff]
    %v1965 = vld [vmem:[%s1932 + $0x100] sm:$0xff]
    %v1966 = vld [vmem:[%s1932 + $0x108] sm:$0xff]
    %v1967 = vld [vmem:[%s1932 + $0x110] sm:$0xff]
    %v1968 = vld [vmem:[%s1932 + $0x118] sm:$0xff]
    %v1969 = vld [vmem:[%s1932 + $0x120] sm:$0xff]
    %v1970 = vld [vmem:[%s1932 + $0x128] sm:$0xff]
    %v1971 = vld [vmem:[%s1932 + $0x130] sm:$0xff]
    %v1972 = vld [vmem:[%s1932 + $0x138] sm:$0xff]
    %v1973 = vld [vmem:[%s1932 + $0x140] sm:$0xff]
    %v1974 = vld [vmem:[%s1932 + $0x148] sm:$0xff]
    %v1975 = vld [vmem:[%s1932 + $0x150] sm:$0xff]
    %v1976 = vld [vmem:[%s1932 + $0x158] sm:$0xff]
    %v1977 = vld [vmem:[%s1932 + $0x160] sm:$0xff]
    %v1978 = vld [vmem:[%s1932 + $0x168] sm:$0xff]
    %v1979 = vld [vmem:[%s1932 + $0x170] sm:$0xff]
    %v1980 = vld [vmem:[%s1932 + $0x178] sm:$0xff]
    %v1981 = vld [vmem:[%s1932 + $0x180] sm:$0xff]
    %v1982 = vld [vmem:[%s1932 + $0x188] sm:$0xff]
    %v1983 = vld [vmem:[%s1932 + $0x190] sm:$0xff]
    %v1984 = vld [vmem:[%s1932 + $0x198] sm:$0xff]
    %v1985 = vld [vmem:[%s1932 + $0x1a0] sm:$0xff]
    %v1986 = vld [vmem:[%s1932 + $0x1a8] sm:$0xff]
    %v1987 = vld [vmem:[%s1932 + $0x1b0] sm:$0xff]
    %v1988 = vld [vmem:[%s1932 + $0x1b8] sm:$0xff]
    %v1989 = vld [vmem:[%s1932 + $0x1c0] sm:$0xff]
    %v1990 = vld [vmem:[%s1932 + $0x1c8] sm:$0xff]
    %v1991 = vld [vmem:[%s1932 + $0x1d0] sm:$0xff]
    %v1992 = vld [vmem:[%s1932 + $0x1d8] sm:$0xff]
    %v1993 = vld [vmem:[%s1932 + $0x1e0] sm:$0xff]
    %v1994 = vld [vmem:[%s1932 + $0x1e8] sm:$0xff]
    %v1995 = vld [vmem:[%s1932 + $0x1f0] sm:$0xff]
    %v1996 = vld [vmem:[%s1932 + $0x1f8] sm:$0xff]
    %s1997 = scalar_lea.vmem %s16, 8
    %v1998 = vld [vmem:[%s1997] sm:$0xff]
    %v2000 = vperm.slane %v1998, 0
    %v2001 = vperm.slane %v1998, 1
    %v2002 = vperm.slane %v1998, 2
    %v2003 = vperm.slane %v1998, 3
    %v2004 = vperm.slane %v1998, 4
    %v2005 = vperm.slane %v1998, 5
    %v2006 = vperm.slane %v1998, 6
    %v2007 = vperm.slane %v1998, 7
    %v2017 = vsel %vm381, %v1930, 0
    %v2020 = vsel %vm381, %v1931, 0
    %2022 = vmatpush.msra.mxu0 0.0
    %2023 = vmatpush.msra.mxu0 0.0
    %2024 = vmatpush.msra.mxu0 0.0
    %2025 = vmatpush.msra.mxu0 0.0
    %2026 = vmatpush.msra.mxu0 0.0
    %2027 = vmatpush.msra.mxu0 0.0
    %2028 = vmatpush.msra.mxu0 0.0
    %2029 = vmatpush.msra.mxu0 0.0
    %2030 = vmatpush.msra.mxu0 %v1989
    %2031 = vmatpush.msra.mxu0 %v1981
    %2032 = vmatpush.msra.mxu0 %v1973
    %2033 = vmatpush.msra.mxu0 %v1965
    %2034 = vmatpush.msra.mxu0 %v1957
    %2035 = vmatpush.msra.mxu0 %v1949
    %2036 = vmatpush.msra.mxu0 %v1941
    %2037 = vmatpush.msra.mxu0 %v1933
    %2038 = vmatmul.f32.gmra.mxu0 %v2017
    %v2039 = vpop.f32.mrf.mxu0
    %v2040 = vadd.f32 %v2000, %v2039
    %2041 = vmatmul.f32.gmra.mxu0 %v2020
    %v2042 = vpop.f32.mrf.mxu0
    %v2043 = vadd.f32 %v2000, %v2042
    %2044 = vdwg.mxu0
    %2045 = vmatpush.msra.mxu0 0.0
    %2046 = vmatpush.msra.mxu0 0.0
    %2047 = vmatpush.msra.mxu0 0.0
    %2048 = vmatpush.msra.mxu0 0.0
    %2049 = vmatpush.msra.mxu0 0.0
    %2050 = vmatpush.msra.mxu0 0.0
    %2051 = vmatpush.msra.mxu0 0.0
    %2052 = vmatpush.msra.mxu0 0.0
    %2053 = vmatpush.msra.mxu0 %v1990
    %2054 = vmatpush.msra.mxu0 %v1982
    %2055 = vmatpush.msra.mxu0 %v1974
    %2056 = vmatpush.msra.mxu0 %v1966
    %2057 = vmatpush.msra.mxu0 %v1958
    %2058 = vmatpush.msra.mxu0 %v1950
    %2059 = vmatpush.msra.mxu0 %v1942
    %2060 = vmatpush.msra.mxu0 %v1934
    %2061 = vmatmul.f32.gmra.mxu0 %v2017
    %v2062 = vpop.f32.mrf.mxu0
    %v2063 = vadd.f32 %v2001, %v2062
    %2064 = vmatmul.f32.gmra.mxu0 %v2020
    %v2065 = vpop.f32.mrf.mxu0
    %v2066 = vadd.f32 %v2001, %v2065
    %2067 = vdwg.mxu0
    %2068 = vmatpush.msra.mxu0 0.0
    %2069 = vmatpush.msra.mxu0 0.0
    %2070 = vmatpush.msra.mxu0 0.0
    %2071 = vmatpush.msra.mxu0 0.0
    %2072 = vmatpush.msra.mxu0 0.0
    %2073 = vmatpush.msra.mxu0 0.0
    %2074 = vmatpush.msra.mxu0 0.0
    %2075 = vmatpush.msra.mxu0 0.0
    %2076 = vmatpush.msra.mxu0 %v1991
    %2077 = vmatpush.msra.mxu0 %v1983
    %2078 = vmatpush.msra.mxu0 %v1975
    %2079 = vmatpush.msra.mxu0 %v1967
    %2080 = vmatpush.msra.mxu0 %v1959
    %2081 = vmatpush.msra.mxu0 %v1951
    %2082 = vmatpush.msra.mxu0 %v1943
    %2083 = vmatpush.msra.mxu0 %v1935
    %2084 = vmatmul.f32.gmra.mxu0 %v2017
    %v2085 = vpop.f32.mrf.mxu0
    %v2086 = vadd.f32 %v2002, %v2085
    %2087 = vmatmul.f32.gmra.mxu0 %v2020
    %v2088 = vpop.f32.mrf.mxu0
    %v2089 = vadd.f32 %v2002, %v2088
    %2090 = vdwg.mxu0
    %2091 = vmatpush.msra.mxu0 0.0
    %2092 = vmatpush.msra.mxu0 0.0
    %2093 = vmatpush.msra.mxu0 0.0
    %2094 = vmatpush.msra.mxu0 0.0
    %2095 = vmatpush.msra.mxu0 0.0
    %2096 = vmatpush.msra.mxu0 0.0
    %2097 = vmatpush.msra.mxu0 0.0
    %2098 = vmatpush.msra.mxu0 0.0
    %2099 = vmatpush.msra.mxu0 %v1992
    %2100 = vmatpush.msra.mxu0 %v1984
    %2101 = vmatpush.msra.mxu0 %v1976
    %2102 = vmatpush.msra.mxu0 %v1968
    %2103 = vmatpush.msra.mxu0 %v1960
    %2104 = vmatpush.msra.mxu0 %v1952
    %2105 = vmatpush.msra.mxu0 %v1944
    %2106 = vmatpush.msra.mxu0 %v1936
    %2107 = vmatmul.f32.gmra.mxu0 %v2017
    %v2108 = vpop.f32.mrf.mxu0
    %v2109 = vadd.f32 %v2003, %v2108
    %2110 = vmatmul.f32.gmra.mxu0 %v2020
    %v2111 = vpop.f32.mrf.mxu0
    %v2112 = vadd.f32 %v2003, %v2111
    %2113 = vdwg.mxu0
    %2114 = vmatpush.msra.mxu0 0.0
    %2115 = vmatpush.msra.mxu0 0.0
    %2116 = vmatpush.msra.mxu0 0.0
    %2117 = vmatpush.msra.mxu0 0.0
    %2118 = vmatpush.msra.mxu0 0.0
    %2119 = vmatpush.msra.mxu0 0.0
    %2120 = vmatpush.msra.mxu0 0.0
    %2121 = vmatpush.msra.mxu0 0.0
    %2122 = vmatpush.msra.mxu0 %v1993
    %2123 = vmatpush.msra.mxu0 %v1985
    %2124 = vmatpush.msra.mxu0 %v1977
    %2125 = vmatpush.msra.mxu0 %v1969
    %2126 = vmatpush.msra.mxu0 %v1961
    %2127 = vmatpush.msra.mxu0 %v1953
    %2128 = vmatpush.msra.mxu0 %v1945
    %2129 = vmatpush.msra.mxu0 %v1937
    %2130 = vmatmul.f32.gmra.mxu0 %v2017
    %v2131 = vpop.f32.mrf.mxu0
    %v2132 = vadd.f32 %v2004, %v2131
    %2133 = vmatmul.f32.gmra.mxu0 %v2020
    %v2134 = vpop.f32.mrf.mxu0
    %v2135 = vadd.f32 %v2004, %v2134
    %2136 = vdwg.mxu0
    %2137 = vmatpush.msra.mxu0 0.0
    %2138 = vmatpush.msra.mxu0 0.0
    %2139 = vmatpush.msra.mxu0 0.0
    %2140 = vmatpush.msra.mxu0 0.0
    %2141 = vmatpush.msra.mxu0 0.0
    %2142 = vmatpush.msra.mxu0 0.0
    %2143 = vmatpush.msra.mxu0 0.0
    %2144 = vmatpush.msra.mxu0 0.0
    %2145 = vmatpush.msra.mxu0 %v1994
    %2146 = vmatpush.msra.mxu0 %v1986
    %2147 = vmatpush.msra.mxu0 %v1978
    %2148 = vmatpush.msra.mxu0 %v1970
    %2149 = vmatpush.msra.mxu0 %v1962
    %2150 = vmatpush.msra.mxu0 %v1954
    %2151 = vmatpush.msra.mxu0 %v1946
    %2152 = vmatpush.msra.mxu0 %v1938
    %2153 = vmatmul.f32.gmra.mxu0 %v2017
    %v2154 = vpop.f32.mrf.mxu0
    %v2155 = vadd.f32 %v2005, %v2154
    %2156 = vmatmul.f32.gmra.mxu0 %v2020
    %v2157 = vpop.f32.mrf.mxu0
    %v2158 = vadd.f32 %v2005, %v2157
    %2159 = vdwg.mxu0
    %2160 = vmatpush.msra.mxu0 0.0
    %2161 = vmatpush.msra.mxu0 0.0
    %2162 = vmatpush.msra.mxu0 0.0
    %2163 = vmatpush.msra.mxu0 0.0
    %2164 = vmatpush.msra.mxu0 0.0
    %2165 = vmatpush.msra.mxu0 0.0
    %2166 = vmatpush.msra.mxu0 0.0
    %2167 = vmatpush.msra.mxu0 0.0
    %2168 = vmatpush.msra.mxu0 %v1995
    %2169 = vmatpush.msra.mxu0 %v1987
    %2170 = vmatpush.msra.mxu0 %v1979
    %2171 = vmatpush.msra.mxu0 %v1971
    %2172 = vmatpush.msra.mxu0 %v1963
    %2173 = vmatpush.msra.mxu0 %v1955
    %2174 = vmatpush.msra.mxu0 %v1947
    %2175 = vmatpush.msra.mxu0 %v1939
    %2176 = vmatmul.f32.gmra.mxu0 %v2017
    %v2177 = vpop.f32.mrf.mxu0
    %v2178 = vadd.f32 %v2006, %v2177
    %2179 = vmatmul.f32.gmra.mxu0 %v2020
    %v2180 = vpop.f32.mrf.mxu0
    %v2181 = vadd.f32 %v2006, %v2180
    %2182 = vdwg.mxu0
    %2183 = vmatpush.msra.mxu0 0.0
    %2184 = vmatpush.msra.mxu0 0.0
    %2185 = vmatpush.msra.mxu0 0.0
    %2186 = vmatpush.msra.mxu0 0.0
    %2187 = vmatpush.msra.mxu0 0.0
    %2188 = vmatpush.msra.mxu0 0.0
    %2189 = vmatpush.msra.mxu0 0.0
    %2190 = vmatpush.msra.mxu0 0.0
    %2191 = vmatpush.msra.mxu0 %v1996
    %2192 = vmatpush.msra.mxu0 %v1988
    %2193 = vmatpush.msra.mxu0 %v1980
    %2194 = vmatpush.msra.mxu0 %v1972
    %2195 = vmatpush.msra.mxu0 %v1964
    %2196 = vmatpush.msra.mxu0 %v1956
    %2197 = vmatpush.msra.mxu0 %v1948
    %2198 = vmatpush.msra.mxu0 %v1940
    %2199 = vmatmul.f32.gmra.mxu0 %v2017
    %v2200 = vpop.f32.mrf.mxu0
    %v2201 = vadd.f32 %v2007, %v2200
    %2202 = vmatmul.f32.gmra.mxu0 %v2020
    %v2203 = vpop.f32.mrf.mxu0
    %v2204 = vadd.f32 %v2007, %v2203
    %2205 = vdwg.mxu0
    %v2206 = vmax.f32 %v2040, 0.0
    %v2207 = vmax.f32 %v2063, 0.0
    %v2208 = vmax.f32 %v2086, 0.0
    %v2209 = vmax.f32 %v2109, 0.0
    %v2210 = vmax.f32 %v2132, 0.0
    %v2211 = vmax.f32 %v2155, 0.0
    %v2212 = vmax.f32 %v2178, 0.0
    %v2213 = vmax.f32 %v2201, 0.0
    %v2214 = vmax.f32 %v2043, 0.0
    %v2215 = vmax.f32 %v2066, 0.0
    %v2216 = vmax.f32 %v2089, 0.0
    %v2217 = vmax.f32 %v2112, 0.0
    %v2218 = vmax.f32 %v2135, 0.0
    %v2219 = vmax.f32 %v2158, 0.0
    %v2220 = vmax.f32 %v2181, 0.0
    %v2221 = vmax.f32 %v2204, 0.0
    %s2222 = scalar_lea.vmem %s17, 1024
    %v2223 = vld [vmem:[%s2222] sm:$0xff]
    %v2224 = vld [vmem:[%s2222 + $0x8] sm:$0xff]
    %v2225 = vld [vmem:[%s2222 + $0x10] sm:$0xff]
    %v2226 = vld [vmem:[%s2222 + $0x18] sm:$0xff]
    %v2227 = vld [vmem:[%s2222 + $0x20] sm:$0xff]
    %v2228 = vld [vmem:[%s2222 + $0x28] sm:$0xff]
    %v2229 = vld [vmem:[%s2222 + $0x30] sm:$0xff]
    %v2230 = vld [vmem:[%s2222 + $0x38] sm:$0xff]
    %v2231 = vld [vmem:[%s2222 + $0x40] sm:$0xff]
    %v2232 = vld [vmem:[%s2222 + $0x48] sm:$0xff]
    %v2233 = vld [vmem:[%s2222 + $0x50] sm:$0xff]
    %v2234 = vld [vmem:[%s2222 + $0x58] sm:$0xff]
    %v2235 = vld [vmem:[%s2222 + $0x60] sm:$0xff]
    %v2236 = vld [vmem:[%s2222 + $0x68] sm:$0xff]
    %v2237 = vld [vmem:[%s2222 + $0x70] sm:$0xff]
    %v2238 = vld [vmem:[%s2222 + $0x78] sm:$0xff]
    %v2239 = vld [vmem:[%s2222 + $0x80] sm:$0xff]
    %v2240 = vld [vmem:[%s2222 + $0x88] sm:$0xff]
    %v2241 = vld [vmem:[%s2222 + $0x90] sm:$0xff]
    %v2242 = vld [vmem:[%s2222 + $0x98] sm:$0xff]
    %v2243 = vld [vmem:[%s2222 + $0xa0] sm:$0xff]
    %v2244 = vld [vmem:[%s2222 + $0xa8] sm:$0xff]
    %v2245 = vld [vmem:[%s2222 + $0xb0] sm:$0xff]
    %v2246 = vld [vmem:[%s2222 + $0xb8] sm:$0xff]
    %v2247 = vld [vmem:[%s2222 + $0xc0] sm:$0xff]
    %v2248 = vld [vmem:[%s2222 + $0xc8] sm:$0xff]
    %v2249 = vld [vmem:[%s2222 + $0xd0] sm:$0xff]
    %v2250 = vld [vmem:[%s2222 + $0xd8] sm:$0xff]
    %v2251 = vld [vmem:[%s2222 + $0xe0] sm:$0xff]
    %v2252 = vld [vmem:[%s2222 + $0xe8] sm:$0xff]
    %v2253 = vld [vmem:[%s2222 + $0xf0] sm:$0xff]
    %v2254 = vld [vmem:[%s2222 + $0xf8] sm:$0xff]
    %v2255 = vld [vmem:[%s2222 + $0x100] sm:$0xff]
    %v2256 = vld [vmem:[%s2222 + $0x108] sm:$0xff]
    %v2257 = vld [vmem:[%s2222 + $0x110] sm:$0xff]
    %v2258 = vld [vmem:[%s2222 + $0x118] sm:$0xff]
    %v2259 = vld [vmem:[%s2222 + $0x120] sm:$0xff]
    %v2260 = vld [vmem:[%s2222 + $0x128] sm:$0xff]
    %v2261 = vld [vmem:[%s2222 + $0x130] sm:$0xff]
    %v2262 = vld [vmem:[%s2222 + $0x138] sm:$0xff]
    %v2263 = vld [vmem:[%s2222 + $0x140] sm:$0xff]
    %v2264 = vld [vmem:[%s2222 + $0x148] sm:$0xff]
    %v2265 = vld [vmem:[%s2222 + $0x150] sm:$0xff]
    %v2266 = vld [vmem:[%s2222 + $0x158] sm:$0xff]
    %v2267 = vld [vmem:[%s2222 + $0x160] sm:$0xff]
    %v2268 = vld [vmem:[%s2222 + $0x168] sm:$0xff]
    %v2269 = vld [vmem:[%s2222 + $0x170] sm:$0xff]
    %v2270 = vld [vmem:[%s2222 + $0x178] sm:$0xff]
    %v2271 = vld [vmem:[%s2222 + $0x180] sm:$0xff]
    %v2272 = vld [vmem:[%s2222 + $0x188] sm:$0xff]
    %v2273 = vld [vmem:[%s2222 + $0x190] sm:$0xff]
    %v2274 = vld [vmem:[%s2222 + $0x198] sm:$0xff]
    %v2275 = vld [vmem:[%s2222 + $0x1a0] sm:$0xff]
    %v2276 = vld [vmem:[%s2222 + $0x1a8] sm:$0xff]
    %v2277 = vld [vmem:[%s2222 + $0x1b0] sm:$0xff]
    %v2278 = vld [vmem:[%s2222 + $0x1b8] sm:$0xff]
    %v2279 = vld [vmem:[%s2222 + $0x1c0] sm:$0xff]
    %v2280 = vld [vmem:[%s2222 + $0x1c8] sm:$0xff]
    %v2281 = vld [vmem:[%s2222 + $0x1d0] sm:$0xff]
    %v2282 = vld [vmem:[%s2222 + $0x1d8] sm:$0xff]
    %v2283 = vld [vmem:[%s2222 + $0x1e0] sm:$0xff]
    %v2284 = vld [vmem:[%s2222 + $0x1e8] sm:$0xff]
    %v2285 = vld [vmem:[%s2222 + $0x1f0] sm:$0xff]
    %v2286 = vld [vmem:[%s2222 + $0x1f8] sm:$0xff]
    %v2287 = vld [vmem:[%s2222 + $0x200] sm:$0xff]
    %v2288 = vld [vmem:[%s2222 + $0x208] sm:$0xff]
    %v2289 = vld [vmem:[%s2222 + $0x210] sm:$0xff]
    %v2290 = vld [vmem:[%s2222 + $0x218] sm:$0xff]
    %v2291 = vld [vmem:[%s2222 + $0x220] sm:$0xff]
    %v2292 = vld [vmem:[%s2222 + $0x228] sm:$0xff]
    %v2293 = vld [vmem:[%s2222 + $0x230] sm:$0xff]
    %v2294 = vld [vmem:[%s2222 + $0x238] sm:$0xff]
    %v2295 = vld [vmem:[%s2222 + $0x240] sm:$0xff]
    %v2296 = vld [vmem:[%s2222 + $0x248] sm:$0xff]
    %v2297 = vld [vmem:[%s2222 + $0x250] sm:$0xff]
    %v2298 = vld [vmem:[%s2222 + $0x258] sm:$0xff]
    %v2299 = vld [vmem:[%s2222 + $0x260] sm:$0xff]
    %v2300 = vld [vmem:[%s2222 + $0x268] sm:$0xff]
    %v2301 = vld [vmem:[%s2222 + $0x270] sm:$0xff]
    %v2302 = vld [vmem:[%s2222 + $0x278] sm:$0xff]
    %v2303 = vld [vmem:[%s2222 + $0x280] sm:$0xff]
    %v2304 = vld [vmem:[%s2222 + $0x288] sm:$0xff]
    %v2305 = vld [vmem:[%s2222 + $0x290] sm:$0xff]
    %v2306 = vld [vmem:[%s2222 + $0x298] sm:$0xff]
    %v2307 = vld [vmem:[%s2222 + $0x2a0] sm:$0xff]
    %v2308 = vld [vmem:[%s2222 + $0x2a8] sm:$0xff]
    %v2309 = vld [vmem:[%s2222 + $0x2b0] sm:$0xff]
    %v2310 = vld [vmem:[%s2222 + $0x2b8] sm:$0xff]
    %v2311 = vld [vmem:[%s2222 + $0x2c0] sm:$0xff]
    %v2312 = vld [vmem:[%s2222 + $0x2c8] sm:$0xff]
    %v2313 = vld [vmem:[%s2222 + $0x2d0] sm:$0xff]
    %v2314 = vld [vmem:[%s2222 + $0x2d8] sm:$0xff]
    %v2315 = vld [vmem:[%s2222 + $0x2e0] sm:$0xff]
    %v2316 = vld [vmem:[%s2222 + $0x2e8] sm:$0xff]
    %v2317 = vld [vmem:[%s2222 + $0x2f0] sm:$0xff]
    %v2318 = vld [vmem:[%s2222 + $0x2f8] sm:$0xff]
    %v2319 = vld [vmem:[%s2222 + $0x300] sm:$0xff]
    %v2320 = vld [vmem:[%s2222 + $0x308] sm:$0xff]
    %v2321 = vld [vmem:[%s2222 + $0x310] sm:$0xff]
    %v2322 = vld [vmem:[%s2222 + $0x318] sm:$0xff]
    %v2323 = vld [vmem:[%s2222 + $0x320] sm:$0xff]
    %v2324 = vld [vmem:[%s2222 + $0x328] sm:$0xff]
    %v2325 = vld [vmem:[%s2222 + $0x330] sm:$0xff]
    %v2326 = vld [vmem:[%s2222 + $0x338] sm:$0xff]
    %v2327 = vld [vmem:[%s2222 + $0x340] sm:$0xff]
    %v2328 = vld [vmem:[%s2222 + $0x348] sm:$0xff]
    %v2329 = vld [vmem:[%s2222 + $0x350] sm:$0xff]
    %v2330 = vld [vmem:[%s2222 + $0x358] sm:$0xff]
    %v2331 = vld [vmem:[%s2222 + $0x360] sm:$0xff]
    %v2332 = vld [vmem:[%s2222 + $0x368] sm:$0xff]
    %v2333 = vld [vmem:[%s2222 + $0x370] sm:$0xff]
    %v2334 = vld [vmem:[%s2222 + $0x378] sm:$0xff]
    %v2335 = vld [vmem:[%s2222 + $0x380] sm:$0xff]
    %v2336 = vld [vmem:[%s2222 + $0x388] sm:$0xff]
    %v2337 = vld [vmem:[%s2222 + $0x390] sm:$0xff]
    %v2338 = vld [vmem:[%s2222 + $0x398] sm:$0xff]
    %v2339 = vld [vmem:[%s2222 + $0x3a0] sm:$0xff]
    %v2340 = vld [vmem:[%s2222 + $0x3a8] sm:$0xff]
    %v2341 = vld [vmem:[%s2222 + $0x3b0] sm:$0xff]
    %v2342 = vld [vmem:[%s2222 + $0x3b8] sm:$0xff]
    %v2343 = vld [vmem:[%s2222 + $0x3c0] sm:$0xff]
    %v2344 = vld [vmem:[%s2222 + $0x3c8] sm:$0xff]
    %v2345 = vld [vmem:[%s2222 + $0x3d0] sm:$0xff]
    %v2346 = vld [vmem:[%s2222 + $0x3d8] sm:$0xff]
    %v2347 = vld [vmem:[%s2222 + $0x3e0] sm:$0xff]
    %v2348 = vld [vmem:[%s2222 + $0x3e8] sm:$0xff]
    %v2349 = vld [vmem:[%s2222 + $0x3f0] sm:$0xff]
    %v2350 = vld [vmem:[%s2222 + $0x3f8] sm:$0xff]
    %s2351 = scalar_lea.vmem %s18, 1
    %v2352 = vld [vmem:[%s2351] sm:$0x1]
    %v2354 = vperm.slane %v2352, 0
    %2356 = vmatpush.msra.mxu0 %v2238
    %2357 = vmatpush.msra.mxu0 %v2237
    %2358 = vmatpush.msra.mxu0 %v2236
    %2359 = vmatpush.msra.mxu0 %v2235
    %2360 = vmatpush.msra.mxu0 %v2234
    %2361 = vmatpush.msra.mxu0 %v2233
    %2362 = vmatpush.msra.mxu0 %v2232
    %2363 = vmatpush.msra.mxu0 %v2231
    %2364 = vmatpush.msra.mxu0 %v2230
    %2365 = vmatpush.msra.mxu0 %v2229
    %2366 = vmatpush.msra.mxu0 %v2228
    %2367 = vmatpush.msra.mxu0 %v2227
    %2368 = vmatpush.msra.mxu0 %v2226
    %2369 = vmatpush.msra.mxu0 %v2225
    %2370 = vmatpush.msra.mxu0 %v2224
    %2371 = vmatpush.msra.mxu0 %v2223
    %2372 = vmatmul.f32.gmra.mxu0 %v2206
    %v2373 = vpop.f32.mrf.mxu0
    %v2374 = vadd.f32 %v2354, %v2373
    %2375 = vmatmul.f32.gmra.mxu0 %v2214
    %v2376 = vpop.f32.mrf.mxu0
    %v2377 = vadd.f32 %v2354, %v2376
    %2378 = vdwg.mxu0
    %2379 = vmatpush.msra.mxu0 %v2254
    %2380 = vmatpush.msra.mxu0 %v2253
    %2381 = vmatpush.msra.mxu0 %v2252
    %2382 = vmatpush.msra.mxu0 %v2251
    %2383 = vmatpush.msra.mxu0 %v2250
    %2384 = vmatpush.msra.mxu0 %v2249
    %2385 = vmatpush.msra.mxu0 %v2248
    %2386 = vmatpush.msra.mxu0 %v2247
    %2387 = vmatpush.msra.mxu0 %v2246
    %2388 = vmatpush.msra.mxu0 %v2245
    %2389 = vmatpush.msra.mxu0 %v2244
    %2390 = vmatpush.msra.mxu0 %v2243
    %2391 = vmatpush.msra.mxu0 %v2242
    %2392 = vmatpush.msra.mxu0 %v2241
    %2393 = vmatpush.msra.mxu0 %v2240
    %2394 = vmatpush.msra.mxu0 %v2239
    %2395 = vmatmul.f32.gmra.mxu0 %v2207
    %v2396 = vpop.f32.mrf.mxu0
    %v2397 = vadd.f32 %v2374, %v2396
    %2398 = vmatmul.f32.gmra.mxu0 %v2215
    %v2399 = vpop.f32.mrf.mxu0
    %v2400 = vadd.f32 %v2377, %v2399
    %2401 = vdwg.mxu0
    %2402 = vmatpush.msra.mxu0 %v2270
    %2403 = vmatpush.msra.mxu0 %v2269
    %2404 = vmatpush.msra.mxu0 %v2268
    %2405 = vmatpush.msra.mxu0 %v2267
    %2406 = vmatpush.msra.mxu0 %v2266
    %2407 = vmatpush.msra.mxu0 %v2265
    %2408 = vmatpush.msra.mxu0 %v2264
    %2409 = vmatpush.msra.mxu0 %v2263
    %2410 = vmatpush.msra.mxu0 %v2262
    %2411 = vmatpush.msra.mxu0 %v2261
    %2412 = vmatpush.msra.mxu0 %v2260
    %2413 = vmatpush.msra.mxu0 %v2259
    %2414 = vmatpush.msra.mxu0 %v2258
    %2415 = vmatpush.msra.mxu0 %v2257
    %2416 = vmatpush.msra.mxu0 %v2256
    %2417 = vmatpush.msra.mxu0 %v2255
    %2418 = vmatmul.f32.gmra.mxu0 %v2208
    %v2419 = vpop.f32.mrf.mxu0
    %v2420 = vadd.f32 %v2397, %v2419
    %2421 = vmatmul.f32.gmra.mxu0 %v2216
    %v2422 = vpop.f32.mrf.mxu0
    %v2423 = vadd.f32 %v2400, %v2422
    %2424 = vdwg.mxu0
    %2425 = vmatpush.msra.mxu0 %v2286
    %2426 = vmatpush.msra.mxu0 %v2285
    %2427 = vmatpush.msra.mxu0 %v2284
    %2428 = vmatpush.msra.mxu0 %v2283
    %2429 = vmatpush.msra.mxu0 %v2282
    %2430 = vmatpush.msra.mxu0 %v2281
    %2431 = vmatpush.msra.mxu0 %v2280
    %2432 = vmatpush.msra.mxu0 %v2279
    %2433 = vmatpush.msra.mxu0 %v2278
    %2434 = vmatpush.msra.mxu0 %v2277
    %2435 = vmatpush.msra.mxu0 %v2276
    %2436 = vmatpush.msra.mxu0 %v2275
    %2437 = vmatpush.msra.mxu0 %v2274
    %2438 = vmatpush.msra.mxu0 %v2273
    %2439 = vmatpush.msra.mxu0 %v2272
    %2440 = vmatpush.msra.mxu0 %v2271
    %2441 = vmatmul.f32.gmra.mxu0 %v2209
    %v2442 = vpop.f32.mrf.mxu0
    %v2443 = vadd.f32 %v2420, %v2442
    %2444 = vmatmul.f32.gmra.mxu0 %v2217
    %v2445 = vpop.f32.mrf.mxu0
    %v2446 = vadd.f32 %v2423, %v2445
    %2447 = vdwg.mxu0
    %2448 = vmatpush.msra.mxu0 %v2302
    %2449 = vmatpush.msra.mxu0 %v2301
    %2450 = vmatpush.msra.mxu0 %v2300
    %2451 = vmatpush.msra.mxu0 %v2299
    %2452 = vmatpush.msra.mxu0 %v2298
    %2453 = vmatpush.msra.mxu0 %v2297
    %2454 = vmatpush.msra.mxu0 %v2296
    %2455 = vmatpush.msra.mxu0 %v2295
    %2456 = vmatpush.msra.mxu0 %v2294
    %2457 = vmatpush.msra.mxu0 %v2293
    %2458 = vmatpush.msra.mxu0 %v2292
    %2459 = vmatpush.msra.mxu0 %v2291
    %2460 = vmatpush.msra.mxu0 %v2290
    %2461 = vmatpush.msra.mxu0 %v2289
    %2462 = vmatpush.msra.mxu0 %v2288
    %2463 = vmatpush.msra.mxu0 %v2287
    %2464 = vmatmul.f32.gmra.mxu0 %v2210
    %v2465 = vpop.f32.mrf.mxu0
    %v2466 = vadd.f32 %v2443, %v2465
    %2467 = vmatmul.f32.gmra.mxu0 %v2218
    %v2468 = vpop.f32.mrf.mxu0
    %v2469 = vadd.f32 %v2446, %v2468
    %2470 = vdwg.mxu0
    %2471 = vmatpush.msra.mxu0 %v2318
    %2472 = vmatpush.msra.mxu0 %v2317
    %2473 = vmatpush.msra.mxu0 %v2316
    %2474 = vmatpush.msra.mxu0 %v2315
    %2475 = vmatpush.msra.mxu0 %v2314
    %2476 = vmatpush.msra.mxu0 %v2313
    %2477 = vmatpush.msra.mxu0 %v2312
    %2478 = vmatpush.msra.mxu0 %v2311
    %2479 = vmatpush.msra.mxu0 %v2310
    %2480 = vmatpush.msra.mxu0 %v2309
    %2481 = vmatpush.msra.mxu0 %v2308
    %2482 = vmatpush.msra.mxu0 %v2307
    %2483 = vmatpush.msra.mxu0 %v2306
    %2484 = vmatpush.msra.mxu0 %v2305
    %2485 = vmatpush.msra.mxu0 %v2304
    %2486 = vmatpush.msra.mxu0 %v2303
    %2487 = vmatmul.f32.gmra.mxu0 %v2211
    %v2488 = vpop.f32.mrf.mxu0
    %v2489 = vadd.f32 %v2466, %v2488
    %2490 = vmatmul.f32.gmra.mxu0 %v2219
    %v2491 = vpop.f32.mrf.mxu0
    %v2492 = vadd.f32 %v2469, %v2491
    %2493 = vdwg.mxu0
    %2494 = vmatpush.msra.mxu0 %v2334
    %2495 = vmatpush.msra.mxu0 %v2333
    %2496 = vmatpush.msra.mxu0 %v2332
    %2497 = vmatpush.msra.mxu0 %v2331
    %2498 = vmatpush.msra.mxu0 %v2330
    %2499 = vmatpush.msra.mxu0 %v2329
    %2500 = vmatpush.msra.mxu0 %v2328
    %2501 = vmatpush.msra.mxu0 %v2327
    %2502 = vmatpush.msra.mxu0 %v2326
    %2503 = vmatpush.msra.mxu0 %v2325
    %2504 = vmatpush.msra.mxu0 %v2324
    %2505 = vmatpush.msra.mxu0 %v2323
    %2506 = vmatpush.msra.mxu0 %v2322
    %2507 = vmatpush.msra.mxu0 %v2321
    %2508 = vmatpush.msra.mxu0 %v2320
    %2509 = vmatpush.msra.mxu0 %v2319
    %2510 = vmatmul.f32.gmra.mxu0 %v2212
    %v2511 = vpop.f32.mrf.mxu0
    %v2512 = vadd.f32 %v2489, %v2511
    %2513 = vmatmul.f32.gmra.mxu0 %v2220
    %v2514 = vpop.f32.mrf.mxu0
    %v2515 = vadd.f32 %v2492, %v2514
    %2516 = vdwg.mxu0
    %2517 = vmatpush.msra.mxu0 %v2350
    %2518 = vmatpush.msra.mxu0 %v2349
    %2519 = vmatpush.msra.mxu0 %v2348
    %2520 = vmatpush.msra.mxu0 %v2347
    %2521 = vmatpush.msra.mxu0 %v2346
    %2522 = vmatpush.msra.mxu0 %v2345
    %2523 = vmatpush.msra.mxu0 %v2344
    %2524 = vmatpush.msra.mxu0 %v2343
    %2525 = vmatpush.msra.mxu0 %v2342
    %2526 = vmatpush.msra.mxu0 %v2341
    %2527 = vmatpush.msra.mxu0 %v2340
    %2528 = vmatpush.msra.mxu0 %v2339
    %2529 = vmatpush.msra.mxu0 %v2338
    %2530 = vmatpush.msra.mxu0 %v2337
    %2531 = vmatpush.msra.mxu0 %v2336
    %2532 = vmatpush.msra.mxu0 %v2335
    %2533 = vmatmul.f32.gmra.mxu0 %v2213
    %v2534 = vpop.f32.mrf.mxu0
    %v2535 = vadd.f32 %v2512, %v2534
    %2536 = vmatmul.f32.gmra.mxu0 %v2221
    %v2537 = vpop.f32.mrf.mxu0
    %v2538 = vadd.f32 %v2515, %v2537
    %2539 = vdwg.mxu0
    %v2540 = vadd.f32 %v1930, %v2535
    %v2541 = vadd.f32 %v1931, %v2538
    %s2542 = scalar_lea.vmem %s19, 1
    %v2543 = vld [vmem:[%s2542] sm:$0x1]
    %s2544 = scalar_lea.vmem %s20, 1
    %v2545 = vld [vmem:[%s2544] sm:$0x1]
    %v2546 = vsel %vm381, %v2540, 0.0
    %2547 = vadd.xlane.f32.xlu0 %v2546
    %v2548 = vpop.xlane.xlu0 %2547
    %v2549 = vsel %vm381, %v2541, 0.0
    %2550 = vadd.xlane.f32.xlu0 %v2549
    %v2551 = vpop.xlane.xlu0 %2550
    %v2552 = vmul.f32 %v2548, %v770
    %v2553 = vmul.f32 %v2551, %v770
    %v2554 = vsub.f32 %v2540, %v2552
    %v2555 = vsub.f32 %v2541, %v2553
    %v2556 = vmul.f32 %v2554, %v2554
    %v2557 = vmul.f32 %v2555, %v2555
    %v2558 = vsel %vm381, %v2556, 0.0
    %2559 = vadd.xlane.f32.xlu0 %v2558
    %v2560 = vpop.xlane.xlu0 %2559
    %v2561 = vsel %vm381, %v2557, 0.0
    %2562 = vadd.xlane.f32.xlu0 %v2561
    %v2563 = vpop.xlane.xlu0 %2562
    %v2564 = vmul.f32 %v2560, %v770
    %v2565 = vmul.f32 %v2563, %v770
    %v2566 = vadd.f32 %v2564, 1e-05
    %v2567 = vadd.f32 %v2565, 1e-05
    %v2568 = vrsqrt.pop %v2566
    %v2569 = vmul.f32 %v2568, %v2566
    %v2570 = vmul.f32 %v2569, %v2568
    %v2571 = vmul.f32 0.5, %v2570
    %v2572 = vsub.f32 1.5, %v2571
    %v2573 = vmul.f32 %v2568, %v2572
    %vm2574 = vweird.f32 %v2566
    %vm2575 = vweird.f32 %v2568
    %vm2576 = vmor %vm2574, %vm2575
    %v2577 = vsel %vm2576, %v2568, %v2573
    %v2578 = vrsqrt.pop %v2567
    %v2579 = vmul.f32 %v2578, %v2567
    %v2580 = vmul.f32 %v2579, %v2578
    %v2581 = vmul.f32 0.5, %v2580
    %v2582 = vsub.f32 1.5, %v2581
    %v2583 = vmul.f32 %v2578, %v2582
    %vm2584 = vweird.f32 %v2567
    %vm2585 = vweird.f32 %v2578
    %vm2586 = vmor %vm2584, %vm2585
    %v2587 = vsel %vm2586, %v2578, %v2583
    %v2588 = vmul.f32 %v2554, %v2577
    %v2589 = vmul.f32 %v2555, %v2587
    %v2591 = vperm.slane %v2543, 0
    %v2593 = vmul.f32 %v2588, %v2591
    %v2594 = vmul.f32 %v2589, %v2591
    %v2596 = vperm.slane %v2545, 0
    %v2598 = vadd.f32 %v2593, %v2596
    %v2599 = vadd.f32 %v2594, %v2596
    %s2600 = scalar_lea.vmem %s9, 256
    %v2601 = vld [vmem:[%s2600] sm:$0xff]
    %v2602 = vld [vmem:[%s2600 + $0x8] sm:$0xff]
    %v2603 = vld [vmem:[%s2600 + $0x10] sm:$0xff]
    %v2604 = vld [vmem:[%s2600 + $0x18] sm:$0xff]
    %v2605 = vld [vmem:[%s2600 + $0x20] sm:$0xff]
    %v2606 = vld [vmem:[%s2600 + $0x28] sm:$0xff]
    %v2607 = vld [vmem:[%s2600 + $0x30] sm:$0xff]
    %v2608 = vld [vmem:[%s2600 + $0x38] sm:$0xff]
    %v2609 = vld [vmem:[%s2600 + $0x40] sm:$0xff]
    %v2610 = vld [vmem:[%s2600 + $0x48] sm:$0xff]
    %v2611 = vld [vmem:[%s2600 + $0x50] sm:$0xff]
    %v2612 = vld [vmem:[%s2600 + $0x58] sm:$0xff]
    %v2613 = vld [vmem:[%s2600 + $0x60] sm:$0xff]
    %v2614 = vld [vmem:[%s2600 + $0x68] sm:$0xff]
    %v2615 = vld [vmem:[%s2600 + $0x70] sm:$0xff]
    %v2616 = vld [vmem:[%s2600 + $0x78] sm:$0xff]
    %s2617 = scalar_lea.vmem %s10, 4
    %v2618 = vld [vmem:[%s2617] sm:$0x3]
    %v2620 = vperm.slane %v2618, 0
    %v2621 = vperm.slane %v2618, 1
    %v2625 = vsel %vm381, %v2598, 0
    %v2628 = vsel %vm381, %v2599, 0
    %2630 = vmatpush.msra.mxu0 0.0
    %2631 = vmatpush.msra.mxu0 0.0
    %2632 = vmatpush.msra.mxu0 0.0
    %2633 = vmatpush.msra.mxu0 0.0
    %2634 = vmatpush.msra.mxu0 0.0
    %2635 = vmatpush.msra.mxu0 0.0
    %2636 = vmatpush.msra.mxu0 0.0
    %2637 = vmatpush.msra.mxu0 0.0
    %2638 = vmatpush.msra.mxu0 %v2615
    %2639 = vmatpush.msra.mxu0 %v2613
    %2640 = vmatpush.msra.mxu0 %v2611
    %2641 = vmatpush.msra.mxu0 %v2609
    %2642 = vmatpush.msra.mxu0 %v2607
    %2643 = vmatpush.msra.mxu0 %v2605
    %2644 = vmatpush.msra.mxu0 %v2603
    %2645 = vmatpush.msra.mxu0 %v2601
    %2646 = vmatmul.f32.gmra.mxu0 %v2625
    %v2647 = vpop.f32.mrf.mxu0
    %v2648 = vadd.f32 %v2620, %v2647
    %2649 = vmatmul.f32.gmra.mxu0 %v2628
    %v2650 = vpop.f32.mrf.mxu0
    %v2651 = vadd.f32 %v2620, %v2650
    %2652 = vdwg.mxu0
    %2653 = vmatpush.msra.mxu0 0.0
    %2654 = vmatpush.msra.mxu0 0.0
    %2655 = vmatpush.msra.mxu0 0.0
    %2656 = vmatpush.msra.mxu0 0.0
    %2657 = vmatpush.msra.mxu0 0.0
    %2658 = vmatpush.msra.mxu0 0.0
    %2659 = vmatpush.msra.mxu0 0.0
    %2660 = vmatpush.msra.mxu0 0.0
    %2661 = vmatpush.msra.mxu0 %v2616
    %2662 = vmatpush.msra.mxu0 %v2614
    %2663 = vmatpush.msra.mxu0 %v2612
    %2664 = vmatpush.msra.mxu0 %v2610
    %2665 = vmatpush.msra.mxu0 %v2608
    %2666 = vmatpush.msra.mxu0 %v2606
    %2667 = vmatpush.msra.mxu0 %v2604
    %2668 = vmatpush.msra.mxu0 %v2602
    %2669 = vmatmul.f32.gmra.mxu0 %v2625
    %v2670 = vpop.f32.mrf.mxu0
    %v2671 = vadd.f32 %v2621, %v2670
    %2672 = vmatmul.f32.gmra.mxu0 %v2628
    %v2673 = vpop.f32.mrf.mxu0
    %v2674 = vadd.f32 %v2621, %v2673
    %2675 = vdwg.mxu0
    %2677 = vrot.lane.b32.xlu0 %v2648, 64
    %v2678 = vpop.permute.xlu0 %2677
    %v2679 = vsel %vm437, %v2648, 0
    %v2681 = vsel %vm437, %v2678, 0
    %2683 = vmatpush.xpose.msra.mxu0 0.0
    %2684 = vmatpush.xpose.msra.mxu0 0.0
    %2685 = vmatpush.xpose.msra.mxu0 0.0
    %2686 = vmatpush.xpose.msra.mxu0 0.0
    %2687 = vmatpush.xpose.msra.mxu0 0.0
    %2688 = vmatpush.xpose.msra.mxu0 0.0
    %2689 = vmatpush.xpose.msra.mxu0 0.0
    %2690 = vmatpush.xpose.msra.mxu0 0.0
    %2691 = vmatpush.xpose.msra.mxu0 0.0
    %2692 = vmatpush.xpose.msra.mxu0 0.0
    %2693 = vmatpush.xpose.msra.mxu0 0.0
    %2694 = vmatpush.xpose.msra.mxu0 0.0
    %2695 = vmatpush.xpose.msra.mxu0 0.0
    %2696 = vmatpush.xpose.msra.mxu0 0.0
    %2697 = vmatpush.xpose.msra.mxu0 0.0
    %2698 = vmatpush.xpose.msra.mxu0 %v2681
    %2699 = vmatmul.f32.gmra.mxu0 %v2679
    %v2700 = vpop.f32.mrf.mxu0
    %v2701 = vadd.f32 0.0, %v2700
    %2702 = vdwg.mxu0
    %2704 = vrot.lane.b32.xlu0 %v2651, 64
    %v2705 = vpop.permute.xlu0 %2704
    %v2706 = vsel %vm437, %v2651, 0
    %v2708 = vsel %vm437, %v2705, 0
    %2710 = vmatpush.xpose.msra.mxu0 0.0
    %2711 = vmatpush.xpose.msra.mxu0 0.0
    %2712 = vmatpush.xpose.msra.mxu0 0.0
    %2713 = vmatpush.xpose.msra.mxu0 0.0
    %2714 = vmatpush.xpose.msra.mxu0 0.0
    %2715 = vmatpush.xpose.msra.mxu0 0.0
    %2716 = vmatpush.xpose.msra.mxu0 0.0
    %2717 = vmatpush.xpose.msra.mxu0 0.0
    %2718 = vmatpush.xpose.msra.mxu0 0.0
    %2719 = vmatpush.xpose.msra.mxu0 0.0
    %2720 = vmatpush.xpose.msra.mxu0 0.0
    %2721 = vmatpush.xpose.msra.mxu0 0.0
    %2722 = vmatpush.xpose.msra.mxu0 0.0
    %2723 = vmatpush.xpose.msra.mxu0 0.0
    %2724 = vmatpush.xpose.msra.mxu0 0.0
    %2725 = vmatpush.xpose.msra.mxu0 %v2708
    %2726 = vmatmul.f32.gmra.mxu0 %v2706
    %v2727 = vpop.f32.mrf.mxu0
    %v2728 = vadd.f32 0.0, %v2727
    %2729 = vdwg.mxu0
    %v2730 = vmul.f32 %v2701, 0.17677669
    %v2731 = vmul.f32 %v2728, 0.17677669
    %v2732 = vadd.f32 %v2730, %v493
    %v2733 = vadd.f32 %v2731, %v494
    %v2734 = vsel %vm286, %v2732, -inf
    %2735 = vmax.xlane.f32.xlu0 %v2734
    %v2736 = vpop.xlane.xlu0 %2735
    %v2737 = vsel %vm286, %v2733, -inf
    %2738 = vmax.xlane.f32.xlu0 %v2737
    %v2739 = vpop.xlane.xlu0 %2738
    %v2740 = vsub.f32 %v2732, %v2736
    %v2741 = vsub.f32 %v2733, %v2739
    %v2742 = vmul.f32 %v2740, 1.442695
    %v2743 = vpow.pop %v2742
    %v2744 = vmul.f32 %v2741, 1.442695
    %v2745 = vpow.pop %v2744
    %v2746 = vsel %vm286, %v2743, 0.0
    %2747 = vadd.xlane.f32.xlu0 %v2746
    %v2748 = vpop.xlane.xlu0 %2747
    %v2749 = vsel %vm286, %v2745, 0.0
    %2750 = vadd.xlane.f32.xlu0 %v2749
    %v2751 = vpop.xlane.xlu0 %2750
    %v2752 = vrcp.pop %v2748
    %v2753 = vrcp.pop %v2751
    %v2754 = vmul.f32 %v2743, %v2752
    %v2755 = vmul.f32 %v2745, %v2753
    %v2757 = vsel %vm286, %v2754, 0
    %2759 = vmatpush.msra.mxu0 0.0
    %2760 = vmatpush.msra.mxu0 0.0
    %2761 = vmatpush.msra.mxu0 0.0
    %2762 = vmatpush.msra.mxu0 0.0
    %2763 = vmatpush.msra.mxu0 0.0
    %2764 = vmatpush.msra.mxu0 0.0
    %2765 = vmatpush.msra.mxu0 0.0
    %2766 = vmatpush.msra.mxu0 0.0
    %2767 = vmatpush.msra.mxu0 0.0
    %2768 = vmatpush.msra.mxu0 0.0
    %2769 = vmatpush.msra.mxu0 0.0
    %2770 = vmatpush.msra.mxu0 0.0
    %2771 = vmatpush.msra.mxu0 0.0
    %2772 = vmatpush.msra.mxu0 0.0
    %2773 = vmatpush.msra.mxu0 0.0
    %2774 = vmatpush.msra.mxu0 %v2671
    %2775 = vmatmul.f32.gmra.mxu0 %v2757
    %v2776 = vpop.f32.mrf.mxu0
    %v2777 = vadd.f32 0.0, %v2776
    %2778 = vdwg.mxu0
    %v2780 = vsel %vm286, %v2755, 0
    %2782 = vmatpush.msra.mxu0 0.0
    %2783 = vmatpush.msra.mxu0 0.0
    %2784 = vmatpush.msra.mxu0 0.0
    %2785 = vmatpush.msra.mxu0 0.0
    %2786 = vmatpush.msra.mxu0 0.0
    %2787 = vmatpush.msra.mxu0 0.0
    %2788 = vmatpush.msra.mxu0 0.0
    %2789 = vmatpush.msra.mxu0 0.0
    %2790 = vmatpush.msra.mxu0 0.0
    %2791 = vmatpush.msra.mxu0 0.0
    %2792 = vmatpush.msra.mxu0 0.0
    %2793 = vmatpush.msra.mxu0 0.0
    %2794 = vmatpush.msra.mxu0 0.0
    %2795 = vmatpush.msra.mxu0 0.0
    %2796 = vmatpush.msra.mxu0 0.0
    %2797 = vmatpush.msra.mxu0 %v2674
    %2798 = vmatmul.f32.gmra.mxu0 %v2780
    %v2799 = vpop.f32.mrf.mxu0
    %v2800 = vadd.f32 0.0, %v2799
    %2801 = vdwg.mxu0
    %2802 = vrot.lane.b32.xlu0 %v2648, 96
    %v2803 = vpop.permute.xlu0 %2802
    %2804 = vrot.lane.b32.xlu0 %v2648, 32
    %v2805 = vpop.permute.xlu0 %2804
    %v2806 = vsel %vm437, %v2803, 0
    %v2808 = vsel %vm437, %v2805, 0
    %2810 = vmatpush.xpose.msra.mxu0 0.0
    %2811 = vmatpush.xpose.msra.mxu0 0.0
    %2812 = vmatpush.xpose.msra.mxu0 0.0
    %2813 = vmatpush.xpose.msra.mxu0 0.0
    %2814 = vmatpush.xpose.msra.mxu0 0.0
    %2815 = vmatpush.xpose.msra.mxu0 0.0
    %2816 = vmatpush.xpose.msra.mxu0 0.0
    %2817 = vmatpush.xpose.msra.mxu0 0.0
    %2818 = vmatpush.xpose.msra.mxu0 0.0
    %2819 = vmatpush.xpose.msra.mxu0 0.0
    %2820 = vmatpush.xpose.msra.mxu0 0.0
    %2821 = vmatpush.xpose.msra.mxu0 0.0
    %2822 = vmatpush.xpose.msra.mxu0 0.0
    %2823 = vmatpush.xpose.msra.mxu0 0.0
    %2824 = vmatpush.xpose.msra.mxu0 0.0
    %2825 = vmatpush.xpose.msra.mxu0 %v2808
    %2826 = vmatmul.f32.gmra.mxu0 %v2806
    %v2827 = vpop.f32.mrf.mxu0
    %v2828 = vadd.f32 0.0, %v2827
    %2829 = vdwg.mxu0
    %2830 = vrot.lane.b32.xlu0 %v2651, 96
    %v2831 = vpop.permute.xlu0 %2830
    %2832 = vrot.lane.b32.xlu0 %v2651, 32
    %v2833 = vpop.permute.xlu0 %2832
    %v2834 = vsel %vm437, %v2831, 0
    %v2836 = vsel %vm437, %v2833, 0
    %2838 = vmatpush.xpose.msra.mxu0 0.0
    %2839 = vmatpush.xpose.msra.mxu0 0.0
    %2840 = vmatpush.xpose.msra.mxu0 0.0
    %2841 = vmatpush.xpose.msra.mxu0 0.0
    %2842 = vmatpush.xpose.msra.mxu0 0.0
    %2843 = vmatpush.xpose.msra.mxu0 0.0
    %2844 = vmatpush.xpose.msra.mxu0 0.0
    %2845 = vmatpush.xpose.msra.mxu0 0.0
    %2846 = vmatpush.xpose.msra.mxu0 0.0
    %2847 = vmatpush.xpose.msra.mxu0 0.0
    %2848 = vmatpush.xpose.msra.mxu0 0.0
    %2849 = vmatpush.xpose.msra.mxu0 0.0
    %2850 = vmatpush.xpose.msra.mxu0 0.0
    %2851 = vmatpush.xpose.msra.mxu0 0.0
    %2852 = vmatpush.xpose.msra.mxu0 0.0
    %2853 = vmatpush.xpose.msra.mxu0 %v2836
    %2854 = vmatmul.f32.gmra.mxu0 %v2834
    %v2855 = vpop.f32.mrf.mxu0
    %v2856 = vadd.f32 0.0, %v2855
    %2857 = vdwg.mxu0
    %v2858 = vmul.f32 %v2828, 0.17677669
    %v2859 = vmul.f32 %v2856, 0.17677669
    %v2860 = vadd.f32 %v2858, %v493
    %v2861 = vadd.f32 %v2859, %v494
    %v2862 = vsel %vm286, %v2860, -inf
    %2863 = vmax.xlane.f32.xlu0 %v2862
    %v2864 = vpop.xlane.xlu0 %2863
    %v2865 = vsel %vm286, %v2861, -inf
    %2866 = vmax.xlane.f32.xlu0 %v2865
    %v2867 = vpop.xlane.xlu0 %2866
    %v2868 = vsub.f32 %v2860, %v2864
    %v2869 = vsub.f32 %v2861, %v2867
    %v2870 = vmul.f32 %v2868, 1.442695
    %v2871 = vpow.pop %v2870
    %v2872 = vmul.f32 %v2869, 1.442695
    %v2873 = vpow.pop %v2872
    %v2874 = vsel %vm286, %v2871, 0.0
    %2875 = vadd.xlane.f32.xlu0 %v2874
    %v2876 = vpop.xlane.xlu0 %2875
    %v2877 = vsel %vm286, %v2873, 0.0
    %2878 = vadd.xlane.f32.xlu0 %v2877
    %v2879 = vpop.xlane.xlu0 %2878
    %v2880 = vrcp.pop %v2876
    %v2881 = vrcp.pop %v2879
    %v2882 = vmul.f32 %v2871, %v2880
    %v2883 = vmul.f32 %v2873, %v2881
    %2885 = vrot.lane.b32.xlu0 %v2671, 96
    %v2886 = vpop.permute.xlu0 %2885
    %v2889 = vsel %vm286, %v2882, 0
    %2891 = vmatpush.msra.mxu0 0.0
    %2892 = vmatpush.msra.mxu0 0.0
    %2893 = vmatpush.msra.mxu0 0.0
    %2894 = vmatpush.msra.mxu0 0.0
    %2895 = vmatpush.msra.mxu0 0.0
    %2896 = vmatpush.msra.mxu0 0.0
    %2897 = vmatpush.msra.mxu0 0.0
    %2898 = vmatpush.msra.mxu0 0.0
    %2899 = vmatpush.msra.mxu0 0.0
    %2900 = vmatpush.msra.mxu0 0.0
    %2901 = vmatpush.msra.mxu0 0.0
    %2902 = vmatpush.msra.mxu0 0.0
    %2903 = vmatpush.msra.mxu0 0.0
    %2904 = vmatpush.msra.mxu0 0.0
    %2905 = vmatpush.msra.mxu0 0.0
    %2906 = vmatpush.msra.mxu0 %v2886
    %2907 = vmatmul.f32.gmra.mxu0 %v2889
    %v2908 = vpop.f32.mrf.mxu0
    %v2909 = vadd.f32 0.0, %v2908
    %2910 = vdwg.mxu0
    %2912 = vrot.lane.b32.xlu0 %v2674, 96
    %v2913 = vpop.permute.xlu0 %2912
    %v2916 = vsel %vm286, %v2883, 0
    %2918 = vmatpush.msra.mxu0 0.0
    %2919 = vmatpush.msra.mxu0 0.0
    %2920 = vmatpush.msra.mxu0 0.0
    %2921 = vmatpush.msra.mxu0 0.0
    %2922 = vmatpush.msra.mxu0 0.0
    %2923 = vmatpush.msra.mxu0 0.0
    %2924 = vmatpush.msra.mxu0 0.0
    %2925 = vmatpush.msra.mxu0 0.0
    %2926 = vmatpush.msra.mxu0 0.0
    %2927 = vmatpush.msra.mxu0 0.0
    %2928 = vmatpush.msra.mxu0 0.0
    %2929 = vmatpush.msra.mxu0 0.0
    %2930 = vmatpush.msra.mxu0 0.0
    %2931 = vmatpush.msra.mxu0 0.0
    %2932 = vmatpush.msra.mxu0 0.0
    %2933 = vmatpush.msra.mxu0 %v2913
    %2934 = vmatmul.f32.gmra.mxu0 %v2916
    %v2935 = vpop.f32.mrf.mxu0
    %v2936 = vadd.f32 0.0, %v2935
    %2937 = vdwg.mxu0
    %2940 = vrot.lane.b32.xlu0 %v2909, 32
    %v2941 = vpop.permute.xlu0 %2940
    %2942 = vrot.lane.b32.xlu0 %v2936, 32
    %v2943 = vpop.permute.xlu0 %2942
    %v2946 = vsel %vm437, %v2777, %v2941
    %v2947 = vsel %vm437, %v2800, %v2943
    %s2948 = scalar_lea.vmem %s11, 128
    %v2949 = vld [vmem:[%s2948] sm:$0xff]
    %v2950 = vld [vmem:[%s2948 + $0x8] sm:$0xff]
    %v2951 = vld [vmem:[%s2948 + $0x10] sm:$0xff]
    %v2952 = vld [vmem:[%s2948 + $0x18] sm:$0xff]
    %v2953 = vld [vmem:[%s2948 + $0x20] sm:$0xff]
    %v2954 = vld [vmem:[%s2948 + $0x28] sm:$0xff]
    %v2955 = vld [vmem:[%s2948 + $0x30] sm:$0xff]
    %v2956 = vld [vmem:[%s2948 + $0x38] sm:$0xff]
    %s2957 = scalar_lea.vmem %s12, 2
    %v2958 = vld [vmem:[%s2957] sm:$0x1]
    %v2960 = vperm.slane %v2958, 0
    %v2963 = vsel %vm381, %v2946, 0
    %v2966 = vsel %vm381, %v2947, 0
    %2968 = vmatpush.msra.mxu0 0.0
    %2969 = vmatpush.msra.mxu0 0.0
    %2970 = vmatpush.msra.mxu0 0.0
    %2971 = vmatpush.msra.mxu0 0.0
    %2972 = vmatpush.msra.mxu0 0.0
    %2973 = vmatpush.msra.mxu0 0.0
    %2974 = vmatpush.msra.mxu0 0.0
    %2975 = vmatpush.msra.mxu0 0.0
    %2976 = vmatpush.msra.mxu0 %v2956
    %2977 = vmatpush.msra.mxu0 %v2955
    %2978 = vmatpush.msra.mxu0 %v2954
    %2979 = vmatpush.msra.mxu0 %v2953
    %2980 = vmatpush.msra.mxu0 %v2952
    %2981 = vmatpush.msra.mxu0 %v2951
    %2982 = vmatpush.msra.mxu0 %v2950
    %2983 = vmatpush.msra.mxu0 %v2949
    %2984 = vmatmul.f32.gmra.mxu0 %v2963
    %v2985 = vpop.f32.mrf.mxu0
    %v2986 = vadd.f32 %v2960, %v2985
    %2987 = vmatmul.f32.gmra.mxu0 %v2966
    %v2988 = vpop.f32.mrf.mxu0
    %v2989 = vadd.f32 %v2960, %v2988
    %2990 = vdwg.mxu0
    %v2991 = vadd.f32 %v2598, %v2986
    %v2992 = vadd.f32 %v2599, %v2989
    %s2993 = scalar_lea.vmem %s13, 2
    %v2994 = vld [vmem:[%s2993] sm:$0x1]
    %s2995 = scalar_lea.vmem %s14, 2
    %v2996 = vld [vmem:[%s2995] sm:$0x1]
    %v2997 = vsel %vm381, %v2991, 0.0
    %2998 = vadd.xlane.f32.xlu0 %v2997
    %v2999 = vpop.xlane.xlu0 %2998
    %v3000 = vsel %vm381, %v2992, 0.0
    %3001 = vadd.xlane.f32.xlu0 %v3000
    %v3002 = vpop.xlane.xlu0 %3001
    %v3003 = vmul.f32 %v2999, %v770
    %v3004 = vmul.f32 %v3002, %v770
    %v3005 = vsub.f32 %v2991, %v3003
    %v3006 = vsub.f32 %v2992, %v3004
    %v3007 = vmul.f32 %v3005, %v3005
    %v3008 = vmul.f32 %v3006, %v3006
    %v3009 = vsel %vm381, %v3007, 0.0
    %3010 = vadd.xlane.f32.xlu0 %v3009
    %v3011 = vpop.xlane.xlu0 %3010
    %v3012 = vsel %vm381, %v3008, 0.0
    %3013 = vadd.xlane.f32.xlu0 %v3012
    %v3014 = vpop.xlane.xlu0 %3013
    %v3015 = vmul.f32 %v3011, %v770
    %v3016 = vmul.f32 %v3014, %v770
    %v3017 = vadd.f32 %v3015, 1e-05
    %v3018 = vadd.f32 %v3016, 1e-05
    %v3019 = vrsqrt.pop %v3017
    %v3020 = vmul.f32 %v3019, %v3017
    %v3021 = vmul.f32 %v3020, %v3019
    %v3022 = vmul.f32 0.5, %v3021
    %v3023 = vsub.f32 1.5, %v3022
    %v3024 = vmul.f32 %v3019, %v3023
    %vm3025 = vweird.f32 %v3017
    %vm3026 = vweird.f32 %v3019
    %vm3027 = vmor %vm3025, %vm3026
    %v3028 = vsel %vm3027, %v3019, %v3024
    %v3029 = vrsqrt.pop %v3018
    %v3030 = vmul.f32 %v3029, %v3018
    %v3031 = vmul.f32 %v3030, %v3029
    %v3032 = vmul.f32 0.5, %v3031
    %v3033 = vsub.f32 1.5, %v3032
    %v3034 = vmul.f32 %v3029, %v3033
    %vm3035 = vweird.f32 %v3018
    %vm3036 = vweird.f32 %v3029
    %vm3037 = vmor %vm3035, %vm3036
    %v3038 = vsel %vm3037, %v3029, %v3034
    %v3039 = vmul.f32 %v3005, %v3028
    %v3040 = vmul.f32 %v3006, %v3038
    %v3042 = vperm.slane %v2994, 0
    %v3044 = vmul.f32 %v3039, %v3042
    %v3045 = vmul.f32 %v3040, %v3042
    %v3047 = vperm.slane %v2996, 0
    %v3049 = vadd.f32 %v3044, %v3047
    %v3050 = vadd.f32 %v3045, %v3047
    %s3051 = scalar_lea.vmem %s15, 1024
    %v3052 = vld [vmem:[%s3051] sm:$0xff]
    %v3053 = vld [vmem:[%s3051 + $0x8] sm:$0xff]
    %v3054 = vld [vmem:[%s3051 + $0x10] sm:$0xff]
    %v3055 = vld [vmem:[%s3051 + $0x18] sm:$0xff]
    %v3056 = vld [vmem:[%s3051 + $0x20] sm:$0xff]
    %v3057 = vld [vmem:[%s3051 + $0x28] sm:$0xff]
    %v3058 = vld [vmem:[%s3051 + $0x30] sm:$0xff]
    %v3059 = vld [vmem:[%s3051 + $0x38] sm:$0xff]
    %v3060 = vld [vmem:[%s3051 + $0x40] sm:$0xff]
    %v3061 = vld [vmem:[%s3051 + $0x48] sm:$0xff]
    %v3062 = vld [vmem:[%s3051 + $0x50] sm:$0xff]
    %v3063 = vld [vmem:[%s3051 + $0x58] sm:$0xff]
    %v3064 = vld [vmem:[%s3051 + $0x60] sm:$0xff]
    %v3065 = vld [vmem:[%s3051 + $0x68] sm:$0xff]
    %v3066 = vld [vmem:[%s3051 + $0x70] sm:$0xff]
    %v3067 = vld [vmem:[%s3051 + $0x78] sm:$0xff]
    %v3068 = vld [vmem:[%s3051 + $0x80] sm:$0xff]
    %v3069 = vld [vmem:[%s3051 + $0x88] sm:$0xff]
    %v3070 = vld [vmem:[%s3051 + $0x90] sm:$0xff]
    %v3071 = vld [vmem:[%s3051 + $0x98] sm:$0xff]
    %v3072 = vld [vmem:[%s3051 + $0xa0] sm:$0xff]
    %v3073 = vld [vmem:[%s3051 + $0xa8] sm:$0xff]
    %v3074 = vld [vmem:[%s3051 + $0xb0] sm:$0xff]
    %v3075 = vld [vmem:[%s3051 + $0xb8] sm:$0xff]
    %v3076 = vld [vmem:[%s3051 + $0xc0] sm:$0xff]
    %v3077 = vld [vmem:[%s3051 + $0xc8] sm:$0xff]
    %v3078 = vld [vmem:[%s3051 + $0xd0] sm:$0xff]
    %v3079 = vld [vmem:[%s3051 + $0xd8] sm:$0xff]
    %v3080 = vld [vmem:[%s3051 + $0xe0] sm:$0xff]
    %v3081 = vld [vmem:[%s3051 + $0xe8] sm:$0xff]
    %v3082 = vld [vmem:[%s3051 + $0xf0] sm:$0xff]
    %v3083 = vld [vmem:[%s3051 + $0xf8] sm:$0xff]
    %v3084 = vld [vmem:[%s3051 + $0x100] sm:$0xff]
    %v3085 = vld [vmem:[%s3051 + $0x108] sm:$0xff]
    %v3086 = vld [vmem:[%s3051 + $0x110] sm:$0xff]
    %v3087 = vld [vmem:[%s3051 + $0x118] sm:$0xff]
    %v3088 = vld [vmem:[%s3051 + $0x120] sm:$0xff]
    %v3089 = vld [vmem:[%s3051 + $0x128] sm:$0xff]
    %v3090 = vld [vmem:[%s3051 + $0x130] sm:$0xff]
    %v3091 = vld [vmem:[%s3051 + $0x138] sm:$0xff]
    %v3092 = vld [vmem:[%s3051 + $0x140] sm:$0xff]
    %v3093 = vld [vmem:[%s3051 + $0x148] sm:$0xff]
    %v3094 = vld [vmem:[%s3051 + $0x150] sm:$0xff]
    %v3095 = vld [vmem:[%s3051 + $0x158] sm:$0xff]
    %v3096 = vld [vmem:[%s3051 + $0x160] sm:$0xff]
    %v3097 = vld [vmem:[%s3051 + $0x168] sm:$0xff]
    %v3098 = vld [vmem:[%s3051 + $0x170] sm:$0xff]
    %v3099 = vld [vmem:[%s3051 + $0x178] sm:$0xff]
    %v3100 = vld [vmem:[%s3051 + $0x180] sm:$0xff]
    %v3101 = vld [vmem:[%s3051 + $0x188] sm:$0xff]
    %v3102 = vld [vmem:[%s3051 + $0x190] sm:$0xff]
    %v3103 = vld [vmem:[%s3051 + $0x198] sm:$0xff]
    %v3104 = vld [vmem:[%s3051 + $0x1a0] sm:$0xff]
    %v3105 = vld [vmem:[%s3051 + $0x1a8] sm:$0xff]
    %v3106 = vld [vmem:[%s3051 + $0x1b0] sm:$0xff]
    %v3107 = vld [vmem:[%s3051 + $0x1b8] sm:$0xff]
    %v3108 = vld [vmem:[%s3051 + $0x1c0] sm:$0xff]
    %v3109 = vld [vmem:[%s3051 + $0x1c8] sm:$0xff]
    %v3110 = vld [vmem:[%s3051 + $0x1d0] sm:$0xff]
    %v3111 = vld [vmem:[%s3051 + $0x1d8] sm:$0xff]
    %v3112 = vld [vmem:[%s3051 + $0x1e0] sm:$0xff]
    %v3113 = vld [vmem:[%s3051 + $0x1e8] sm:$0xff]
    %v3114 = vld [vmem:[%s3051 + $0x1f0] sm:$0xff]
    %v3115 = vld [vmem:[%s3051 + $0x1f8] sm:$0xff]
    %s3116 = scalar_lea.vmem %s16, 16
    %v3117 = vld [vmem:[%s3116] sm:$0xff]
    %v3119 = vperm.slane %v3117, 0
    %v3120 = vperm.slane %v3117, 1
    %v3121 = vperm.slane %v3117, 2
    %v3122 = vperm.slane %v3117, 3
    %v3123 = vperm.slane %v3117, 4
    %v3124 = vperm.slane %v3117, 5
    %v3125 = vperm.slane %v3117, 6
    %v3126 = vperm.slane %v3117, 7
    %v3136 = vsel %vm381, %v3049, 0
    %v3139 = vsel %vm381, %v3050, 0
    %3141 = vmatpush.msra.mxu0 0.0
    %3142 = vmatpush.msra.mxu0 0.0
    %3143 = vmatpush.msra.mxu0 0.0
    %3144 = vmatpush.msra.mxu0 0.0
    %3145 = vmatpush.msra.mxu0 0.0
    %3146 = vmatpush.msra.mxu0 0.0
    %3147 = vmatpush.msra.mxu0 0.0
    %3148 = vmatpush.msra.mxu0 0.0
    %3149 = vmatpush.msra.mxu0 %v3108
    %3150 = vmatpush.msra.mxu0 %v3100
    %3151 = vmatpush.msra.mxu0 %v3092
    %3152 = vmatpush.msra.mxu0 %v3084
    %3153 = vmatpush.msra.mxu0 %v3076
    %3154 = vmatpush.msra.mxu0 %v3068
    %3155 = vmatpush.msra.mxu0 %v3060
    %3156 = vmatpush.msra.mxu0 %v3052
    %3157 = vmatmul.f32.gmra.mxu0 %v3136
    %v3158 = vpop.f32.mrf.mxu0
    %v3159 = vadd.f32 %v3119, %v3158
    %3160 = vmatmul.f32.gmra.mxu0 %v3139
    %v3161 = vpop.f32.mrf.mxu0
    %v3162 = vadd.f32 %v3119, %v3161
    %3163 = vdwg.mxu0
    %3164 = vmatpush.msra.mxu0 0.0
    %3165 = vmatpush.msra.mxu0 0.0
    %3166 = vmatpush.msra.mxu0 0.0
    %3167 = vmatpush.msra.mxu0 0.0
    %3168 = vmatpush.msra.mxu0 0.0
    %3169 = vmatpush.msra.mxu0 0.0
    %3170 = vmatpush.msra.mxu0 0.0
    %3171 = vmatpush.msra.mxu0 0.0
    %3172 = vmatpush.msra.mxu0 %v3109
    %3173 = vmatpush.msra.mxu0 %v3101
    %3174 = vmatpush.msra.mxu0 %v3093
    %3175 = vmatpush.msra.mxu0 %v3085
    %3176 = vmatpush.msra.mxu0 %v3077
    %3177 = vmatpush.msra.mxu0 %v3069
    %3178 = vmatpush.msra.mxu0 %v3061
    %3179 = vmatpush.msra.mxu0 %v3053
    %3180 = vmatmul.f32.gmra.mxu0 %v3136
    %v3181 = vpop.f32.mrf.mxu0
    %v3182 = vadd.f32 %v3120, %v3181
    %3183 = vmatmul.f32.gmra.mxu0 %v3139
    %v3184 = vpop.f32.mrf.mxu0
    %v3185 = vadd.f32 %v3120, %v3184
    %3186 = vdwg.mxu0
    %3187 = vmatpush.msra.mxu0 0.0
    %3188 = vmatpush.msra.mxu0 0.0
    %3189 = vmatpush.msra.mxu0 0.0
    %3190 = vmatpush.msra.mxu0 0.0
    %3191 = vmatpush.msra.mxu0 0.0
    %3192 = vmatpush.msra.mxu0 0.0
    %3193 = vmatpush.msra.mxu0 0.0
    %3194 = vmatpush.msra.mxu0 0.0
    %3195 = vmatpush.msra.mxu0 %v3110
    %3196 = vmatpush.msra.mxu0 %v3102
    %3197 = vmatpush.msra.mxu0 %v3094
    %3198 = vmatpush.msra.mxu0 %v3086
    %3199 = vmatpush.msra.mxu0 %v3078
    %3200 = vmatpush.msra.mxu0 %v3070
    %3201 = vmatpush.msra.mxu0 %v3062
    %3202 = vmatpush.msra.mxu0 %v3054
    %3203 = vmatmul.f32.gmra.mxu0 %v3136
    %v3204 = vpop.f32.mrf.mxu0
    %v3205 = vadd.f32 %v3121, %v3204
    %3206 = vmatmul.f32.gmra.mxu0 %v3139
    %v3207 = vpop.f32.mrf.mxu0
    %v3208 = vadd.f32 %v3121, %v3207
    %3209 = vdwg.mxu0
    %3210 = vmatpush.msra.mxu0 0.0
    %3211 = vmatpush.msra.mxu0 0.0
    %3212 = vmatpush.msra.mxu0 0.0
    %3213 = vmatpush.msra.mxu0 0.0
    %3214 = vmatpush.msra.mxu0 0.0
    %3215 = vmatpush.msra.mxu0 0.0
    %3216 = vmatpush.msra.mxu0 0.0
    %3217 = vmatpush.msra.mxu0 0.0
    %3218 = vmatpush.msra.mxu0 %v3111
    %3219 = vmatpush.msra.mxu0 %v3103
    %3220 = vmatpush.msra.mxu0 %v3095
    %3221 = vmatpush.msra.mxu0 %v3087
    %3222 = vmatpush.msra.mxu0 %v3079
    %3223 = vmatpush.msra.mxu0 %v3071
    %3224 = vmatpush.msra.mxu0 %v3063
    %3225 = vmatpush.msra.mxu0 %v3055
    %3226 = vmatmul.f32.gmra.mxu0 %v3136
    %v3227 = vpop.f32.mrf.mxu0
    %v3228 = vadd.f32 %v3122, %v3227
    %3229 = vmatmul.f32.gmra.mxu0 %v3139
    %v3230 = vpop.f32.mrf.mxu0
    %v3231 = vadd.f32 %v3122, %v3230
    %3232 = vdwg.mxu0
    %3233 = vmatpush.msra.mxu0 0.0
    %3234 = vmatpush.msra.mxu0 0.0
    %3235 = vmatpush.msra.mxu0 0.0
    %3236 = vmatpush.msra.mxu0 0.0
    %3237 = vmatpush.msra.mxu0 0.0
    %3238 = vmatpush.msra.mxu0 0.0
    %3239 = vmatpush.msra.mxu0 0.0
    %3240 = vmatpush.msra.mxu0 0.0
    %3241 = vmatpush.msra.mxu0 %v3112
    %3242 = vmatpush.msra.mxu0 %v3104
    %3243 = vmatpush.msra.mxu0 %v3096
    %3244 = vmatpush.msra.mxu0 %v3088
    %3245 = vmatpush.msra.mxu0 %v3080
    %3246 = vmatpush.msra.mxu0 %v3072
    %3247 = vmatpush.msra.mxu0 %v3064
    %3248 = vmatpush.msra.mxu0 %v3056
    %3249 = vmatmul.f32.gmra.mxu0 %v3136
    %v3250 = vpop.f32.mrf.mxu0
    %v3251 = vadd.f32 %v3123, %v3250
    %3252 = vmatmul.f32.gmra.mxu0 %v3139
    %v3253 = vpop.f32.mrf.mxu0
    %v3254 = vadd.f32 %v3123, %v3253
    %3255 = vdwg.mxu0
    %3256 = vmatpush.msra.mxu0 0.0
    %3257 = vmatpush.msra.mxu0 0.0
    %3258 = vmatpush.msra.mxu0 0.0
    %3259 = vmatpush.msra.mxu0 0.0
    %3260 = vmatpush.msra.mxu0 0.0
    %3261 = vmatpush.msra.mxu0 0.0
    %3262 = vmatpush.msra.mxu0 0.0
    %3263 = vmatpush.msra.mxu0 0.0
    %3264 = vmatpush.msra.mxu0 %v3113
    %3265 = vmatpush.msra.mxu0 %v3105
    %3266 = vmatpush.msra.mxu0 %v3097
    %3267 = vmatpush.msra.mxu0 %v3089
    %3268 = vmatpush.msra.mxu0 %v3081
    %3269 = vmatpush.msra.mxu0 %v3073
    %3270 = vmatpush.msra.mxu0 %v3065
    %3271 = vmatpush.msra.mxu0 %v3057
    %3272 = vmatmul.f32.gmra.mxu0 %v3136
    %v3273 = vpop.f32.mrf.mxu0
    %v3274 = vadd.f32 %v3124, %v3273
    %3275 = vmatmul.f32.gmra.mxu0 %v3139
    %v3276 = vpop.f32.mrf.mxu0
    %v3277 = vadd.f32 %v3124, %v3276
    %3278 = vdwg.mxu0
    %3279 = vmatpush.msra.mxu0 0.0
    %3280 = vmatpush.msra.mxu0 0.0
    %3281 = vmatpush.msra.mxu0 0.0
    %3282 = vmatpush.msra.mxu0 0.0
    %3283 = vmatpush.msra.mxu0 0.0
    %3284 = vmatpush.msra.mxu0 0.0
    %3285 = vmatpush.msra.mxu0 0.0
    %3286 = vmatpush.msra.mxu0 0.0
    %3287 = vmatpush.msra.mxu0 %v3114
    %3288 = vmatpush.msra.mxu0 %v3106
    %3289 = vmatpush.msra.mxu0 %v3098
    %3290 = vmatpush.msra.mxu0 %v3090
    %3291 = vmatpush.msra.mxu0 %v3082
    %3292 = vmatpush.msra.mxu0 %v3074
    %3293 = vmatpush.msra.mxu0 %v3066
    %3294 = vmatpush.msra.mxu0 %v3058
    %3295 = vmatmul.f32.gmra.mxu0 %v3136
    %v3296 = vpop.f32.mrf.mxu0
    %v3297 = vadd.f32 %v3125, %v3296
    %3298 = vmatmul.f32.gmra.mxu0 %v3139
    %v3299 = vpop.f32.mrf.mxu0
    %v3300 = vadd.f32 %v3125, %v3299
    %3301 = vdwg.mxu0
    %3302 = vmatpush.msra.mxu0 0.0
    %3303 = vmatpush.msra.mxu0 0.0
    %3304 = vmatpush.msra.mxu0 0.0
    %3305 = vmatpush.msra.mxu0 0.0
    %3306 = vmatpush.msra.mxu0 0.0
    %3307 = vmatpush.msra.mxu0 0.0
    %3308 = vmatpush.msra.mxu0 0.0
    %3309 = vmatpush.msra.mxu0 0.0
    %3310 = vmatpush.msra.mxu0 %v3115
    %3311 = vmatpush.msra.mxu0 %v3107
    %3312 = vmatpush.msra.mxu0 %v3099
    %3313 = vmatpush.msra.mxu0 %v3091
    %3314 = vmatpush.msra.mxu0 %v3083
    %3315 = vmatpush.msra.mxu0 %v3075
    %3316 = vmatpush.msra.mxu0 %v3067
    %3317 = vmatpush.msra.mxu0 %v3059
    %3318 = vmatmul.f32.gmra.mxu0 %v3136
    %v3319 = vpop.f32.mrf.mxu0
    %v3320 = vadd.f32 %v3126, %v3319
    %3321 = vmatmul.f32.gmra.mxu0 %v3139
    %v3322 = vpop.f32.mrf.mxu0
    %v3323 = vadd.f32 %v3126, %v3322
    %3324 = vdwg.mxu0
    %v3325 = vmax.f32 %v3159, 0.0
    %v3326 = vmax.f32 %v3182, 0.0
    %v3327 = vmax.f32 %v3205, 0.0
    %v3328 = vmax.f32 %v3228, 0.0
    %v3329 = vmax.f32 %v3251, 0.0
    %v3330 = vmax.f32 %v3274, 0.0
    %v3331 = vmax.f32 %v3297, 0.0
    %v3332 = vmax.f32 %v3320, 0.0
    %v3333 = vmax.f32 %v3162, 0.0
    %v3334 = vmax.f32 %v3185, 0.0
    %v3335 = vmax.f32 %v3208, 0.0
    %v3336 = vmax.f32 %v3231, 0.0
    %v3337 = vmax.f32 %v3254, 0.0
    %v3338 = vmax.f32 %v3277, 0.0
    %v3339 = vmax.f32 %v3300, 0.0
    %v3340 = vmax.f32 %v3323, 0.0
    %s3341 = scalar_lea.vmem %s17, 2048
    %v3342 = vld [vmem:[%s3341] sm:$0xff]
    %v3343 = vld [vmem:[%s3341 + $0x8] sm:$0xff]
    %v3344 = vld [vmem:[%s3341 + $0x10] sm:$0xff]
    %v3345 = vld [vmem:[%s3341 + $0x18] sm:$0xff]
    %v3346 = vld [vmem:[%s3341 + $0x20] sm:$0xff]
    %v3347 = vld [vmem:[%s3341 + $0x28] sm:$0xff]
    %v3348 = vld [vmem:[%s3341 + $0x30] sm:$0xff]
    %v3349 = vld [vmem:[%s3341 + $0x38] sm:$0xff]
    %v3350 = vld [vmem:[%s3341 + $0x40] sm:$0xff]
    %v3351 = vld [vmem:[%s3341 + $0x48] sm:$0xff]
    %v3352 = vld [vmem:[%s3341 + $0x50] sm:$0xff]
    %v3353 = vld [vmem:[%s3341 + $0x58] sm:$0xff]
    %v3354 = vld [vmem:[%s3341 + $0x60] sm:$0xff]
    %v3355 = vld [vmem:[%s3341 + $0x68] sm:$0xff]
    %v3356 = vld [vmem:[%s3341 + $0x70] sm:$0xff]
    %v3357 = vld [vmem:[%s3341 + $0x78] sm:$0xff]
    %v3358 = vld [vmem:[%s3341 + $0x80] sm:$0xff]
    %v3359 = vld [vmem:[%s3341 + $0x88] sm:$0xff]
    %v3360 = vld [vmem:[%s3341 + $0x90] sm:$0xff]
    %v3361 = vld [vmem:[%s3341 + $0x98] sm:$0xff]
    %v3362 = vld [vmem:[%s3341 + $0xa0] sm:$0xff]
    %v3363 = vld [vmem:[%s3341 + $0xa8] sm:$0xff]
    %v3364 = vld [vmem:[%s3341 + $0xb0] sm:$0xff]
    %v3365 = vld [vmem:[%s3341 + $0xb8] sm:$0xff]
    %v3366 = vld [vmem:[%s3341 + $0xc0] sm:$0xff]
    %v3367 = vld [vmem:[%s3341 + $0xc8] sm:$0xff]
    %v3368 = vld [vmem:[%s3341 + $0xd0] sm:$0xff]
    %v3369 = vld [vmem:[%s3341 + $0xd8] sm:$0xff]
    %v3370 = vld [vmem:[%s3341 + $0xe0] sm:$0xff]
    %v3371 = vld [vmem:[%s3341 + $0xe8] sm:$0xff]
    %v3372 = vld [vmem:[%s3341 + $0xf0] sm:$0xff]
    %v3373 = vld [vmem:[%s3341 + $0xf8] sm:$0xff]
    %v3374 = vld [vmem:[%s3341 + $0x100] sm:$0xff]
    %v3375 = vld [vmem:[%s3341 + $0x108] sm:$0xff]
    %v3376 = vld [vmem:[%s3341 + $0x110] sm:$0xff]
    %v3377 = vld [vmem:[%s3341 + $0x118] sm:$0xff]
    %v3378 = vld [vmem:[%s3341 + $0x120] sm:$0xff]
    %v3379 = vld [vmem:[%s3341 + $0x128] sm:$0xff]
    %v3380 = vld [vmem:[%s3341 + $0x130] sm:$0xff]
    %v3381 = vld [vmem:[%s3341 + $0x138] sm:$0xff]
    %v3382 = vld [vmem:[%s3341 + $0x140] sm:$0xff]
    %v3383 = vld [vmem:[%s3341 + $0x148] sm:$0xff]
    %v3384 = vld [vmem:[%s3341 + $0x150] sm:$0xff]
    %v3385 = vld [vmem:[%s3341 + $0x158] sm:$0xff]
    %v3386 = vld [vmem:[%s3341 + $0x160] sm:$0xff]
    %v3387 = vld [vmem:[%s3341 + $0x168] sm:$0xff]
    %v3388 = vld [vmem:[%s3341 + $0x170] sm:$0xff]
    %v3389 = vld [vmem:[%s3341 + $0x178] sm:$0xff]
    %v3390 = vld [vmem:[%s3341 + $0x180] sm:$0xff]
    %v3391 = vld [vmem:[%s3341 + $0x188] sm:$0xff]
    %v3392 = vld [vmem:[%s3341 + $0x190] sm:$0xff]
    %v3393 = vld [vmem:[%s3341 + $0x198] sm:$0xff]
    %v3394 = vld [vmem:[%s3341 + $0x1a0] sm:$0xff]
    %v3395 = vld [vmem:[%s3341 + $0x1a8] sm:$0xff]
    %v3396 = vld [vmem:[%s3341 + $0x1b0] sm:$0xff]
    %v3397 = vld [vmem:[%s3341 + $0x1b8] sm:$0xff]
    %v3398 = vld [vmem:[%s3341 + $0x1c0] sm:$0xff]
    %v3399 = vld [vmem:[%s3341 + $0x1c8] sm:$0xff]
    %v3400 = vld [vmem:[%s3341 + $0x1d0] sm:$0xff]
    %v3401 = vld [vmem:[%s3341 + $0x1d8] sm:$0xff]
    %v3402 = vld [vmem:[%s3341 + $0x1e0] sm:$0xff]
    %v3403 = vld [vmem:[%s3341 + $0x1e8] sm:$0xff]
    %v3404 = vld [vmem:[%s3341 + $0x1f0] sm:$0xff]
    %v3405 = vld [vmem:[%s3341 + $0x1f8] sm:$0xff]
    %v3406 = vld [vmem:[%s3341 + $0x200] sm:$0xff]
    %v3407 = vld [vmem:[%s3341 + $0x208] sm:$0xff]
    %v3408 = vld [vmem:[%s3341 + $0x210] sm:$0xff]
    %v3409 = vld [vmem:[%s3341 + $0x218] sm:$0xff]
    %v3410 = vld [vmem:[%s3341 + $0x220] sm:$0xff]
    %v3411 = vld [vmem:[%s3341 + $0x228] sm:$0xff]
    %v3412 = vld [vmem:[%s3341 + $0x230] sm:$0xff]
    %v3413 = vld [vmem:[%s3341 + $0x238] sm:$0xff]
    %v3414 = vld [vmem:[%s3341 + $0x240] sm:$0xff]
    %v3415 = vld [vmem:[%s3341 + $0x248] sm:$0xff]
    %v3416 = vld [vmem:[%s3341 + $0x250] sm:$0xff]
    %v3417 = vld [vmem:[%s3341 + $0x258] sm:$0xff]
    %v3418 = vld [vmem:[%s3341 + $0x260] sm:$0xff]
    %v3419 = vld [vmem:[%s3341 + $0x268] sm:$0xff]
    %v3420 = vld [vmem:[%s3341 + $0x270] sm:$0xff]
    %v3421 = vld [vmem:[%s3341 + $0x278] sm:$0xff]
    %v3422 = vld [vmem:[%s3341 + $0x280] sm:$0xff]
    %v3423 = vld [vmem:[%s3341 + $0x288] sm:$0xff]
    %v3424 = vld [vmem:[%s3341 + $0x290] sm:$0xff]
    %v3425 = vld [vmem:[%s3341 + $0x298] sm:$0xff]
    %v3426 = vld [vmem:[%s3341 + $0x2a0] sm:$0xff]
    %v3427 = vld [vmem:[%s3341 + $0x2a8] sm:$0xff]
    %v3428 = vld [vmem:[%s3341 + $0x2b0] sm:$0xff]
    %v3429 = vld [vmem:[%s3341 + $0x2b8] sm:$0xff]
    %v3430 = vld [vmem:[%s3341 + $0x2c0] sm:$0xff]
    %v3431 = vld [vmem:[%s3341 + $0x2c8] sm:$0xff]
    %v3432 = vld [vmem:[%s3341 + $0x2d0] sm:$0xff]
    %v3433 = vld [vmem:[%s3341 + $0x2d8] sm:$0xff]
    %v3434 = vld [vmem:[%s3341 + $0x2e0] sm:$0xff]
    %v3435 = vld [vmem:[%s3341 + $0x2e8] sm:$0xff]
    %v3436 = vld [vmem:[%s3341 + $0x2f0] sm:$0xff]
    %v3437 = vld [vmem:[%s3341 + $0x2f8] sm:$0xff]
    %v3438 = vld [vmem:[%s3341 + $0x300] sm:$0xff]
    %v3439 = vld [vmem:[%s3341 + $0x308] sm:$0xff]
    %v3440 = vld [vmem:[%s3341 + $0x310] sm:$0xff]
    %v3441 = vld [vmem:[%s3341 + $0x318] sm:$0xff]
    %v3442 = vld [vmem:[%s3341 + $0x320] sm:$0xff]
    %v3443 = vld [vmem:[%s3341 + $0x328] sm:$0xff]
    %v3444 = vld [vmem:[%s3341 + $0x330] sm:$0xff]
    %v3445 = vld [vmem:[%s3341 + $0x338] sm:$0xff]
    %v3446 = vld [vmem:[%s3341 + $0x340] sm:$0xff]
    %v3447 = vld [vmem:[%s3341 + $0x348] sm:$0xff]
    %v3448 = vld [vmem:[%s3341 + $0x350] sm:$0xff]
    %v3449 = vld [vmem:[%s3341 + $0x358] sm:$0xff]
    %v3450 = vld [vmem:[%s3341 + $0x360] sm:$0xff]
    %v3451 = vld [vmem:[%s3341 + $0x368] sm:$0xff]
    %v3452 = vld [vmem:[%s3341 + $0x370] sm:$0xff]
    %v3453 = vld [vmem:[%s3341 + $0x378] sm:$0xff]
    %v3454 = vld [vmem:[%s3341 + $0x380] sm:$0xff]
    %v3455 = vld [vmem:[%s3341 + $0x388] sm:$0xff]
    %v3456 = vld [vmem:[%s3341 + $0x390] sm:$0xff]
    %v3457 = vld [vmem:[%s3341 + $0x398] sm:$0xff]
    %v3458 = vld [vmem:[%s3341 + $0x3a0] sm:$0xff]
    %v3459 = vld [vmem:[%s3341 + $0x3a8] sm:$0xff]
    %v3460 = vld [vmem:[%s3341 + $0x3b0] sm:$0xff]
    %v3461 = vld [vmem:[%s3341 + $0x3b8] sm:$0xff]
    %v3462 = vld [vmem:[%s3341 + $0x3c0] sm:$0xff]
    %v3463 = vld [vmem:[%s3341 + $0x3c8] sm:$0xff]
    %v3464 = vld [vmem:[%s3341 + $0x3d0] sm:$0xff]
    %v3465 = vld [vmem:[%s3341 + $0x3d8] sm:$0xff]
    %v3466 = vld [vmem:[%s3341 + $0x3e0] sm:$0xff]
    %v3467 = vld [vmem:[%s3341 + $0x3e8] sm:$0xff]
    %v3468 = vld [vmem:[%s3341 + $0x3f0] sm:$0xff]
    %v3469 = vld [vmem:[%s3341 + $0x3f8] sm:$0xff]
    %s3470 = scalar_lea.vmem %s18, 2
    %v3471 = vld [vmem:[%s3470] sm:$0x1]
    %v3473 = vperm.slane %v3471, 0
    %3475 = vmatpush.msra.mxu0 %v3357
    %3476 = vmatpush.msra.mxu0 %v3356
    %3477 = vmatpush.msra.mxu0 %v3355
    %3478 = vmatpush.msra.mxu0 %v3354
    %3479 = vmatpush.msra.mxu0 %v3353
    %3480 = vmatpush.msra.mxu0 %v3352
    %3481 = vmatpush.msra.mxu0 %v3351
    %3482 = vmatpush.msra.mxu0 %v3350
    %3483 = vmatpush.msra.mxu0 %v3349
    %3484 = vmatpush.msra.mxu0 %v3348
    %3485 = vmatpush.msra.mxu0 %v3347
    %3486 = vmatpush.msra.mxu0 %v3346
    %3487 = vmatpush.msra.mxu0 %v3345
    %3488 = vmatpush.msra.mxu0 %v3344
    %3489 = vmatpush.msra.mxu0 %v3343
    %3490 = vmatpush.msra.mxu0 %v3342
    %3491 = vmatmul.f32.gmra.mxu0 %v3325
    %v3492 = vpop.f32.mrf.mxu0
    %v3493 = vadd.f32 %v3473, %v3492
    %3494 = vmatmul.f32.gmra.mxu0 %v3333
    %v3495 = vpop.f32.mrf.mxu0
    %v3496 = vadd.f32 %v3473, %v3495
    %3497 = vdwg.mxu0
    %3498 = vmatpush.msra.mxu0 %v3373
    %3499 = vmatpush.msra.mxu0 %v3372
    %3500 = vmatpush.msra.mxu0 %v3371
    %3501 = vmatpush.msra.mxu0 %v3370
    %3502 = vmatpush.msra.mxu0 %v3369
    %3503 = vmatpush.msra.mxu0 %v3368
    %3504 = vmatpush.msra.mxu0 %v3367
    %3505 = vmatpush.msra.mxu0 %v3366
    %3506 = vmatpush.msra.mxu0 %v3365
    %3507 = vmatpush.msra.mxu0 %v3364
    %3508 = vmatpush.msra.mxu0 %v3363
    %3509 = vmatpush.msra.mxu0 %v3362
    %3510 = vmatpush.msra.mxu0 %v3361
    %3511 = vmatpush.msra.mxu0 %v3360
    %3512 = vmatpush.msra.mxu0 %v3359
    %3513 = vmatpush.msra.mxu0 %v3358
    %3514 = vmatmul.f32.gmra.mxu0 %v3326
    %v3515 = vpop.f32.mrf.mxu0
    %v3516 = vadd.f32 %v3493, %v3515
    %3517 = vmatmul.f32.gmra.mxu0 %v3334
    %v3518 = vpop.f32.mrf.mxu0
    %v3519 = vadd.f32 %v3496, %v3518
    %3520 = vdwg.mxu0
    %3521 = vmatpush.msra.mxu0 %v3389
    %3522 = vmatpush.msra.mxu0 %v3388
    %3523 = vmatpush.msra.mxu0 %v3387
    %3524 = vmatpush.msra.mxu0 %v3386
    %3525 = vmatpush.msra.mxu0 %v3385
    %3526 = vmatpush.msra.mxu0 %v3384
    %3527 = vmatpush.msra.mxu0 %v3383
    %3528 = vmatpush.msra.mxu0 %v3382
    %3529 = vmatpush.msra.mxu0 %v3381
    %3530 = vmatpush.msra.mxu0 %v3380
    %3531 = vmatpush.msra.mxu0 %v3379
    %3532 = vmatpush.msra.mxu0 %v3378
    %3533 = vmatpush.msra.mxu0 %v3377
    %3534 = vmatpush.msra.mxu0 %v3376
    %3535 = vmatpush.msra.mxu0 %v3375
    %3536 = vmatpush.msra.mxu0 %v3374
    %3537 = vmatmul.f32.gmra.mxu0 %v3327
    %v3538 = vpop.f32.mrf.mxu0
    %v3539 = vadd.f32 %v3516, %v3538
    %3540 = vmatmul.f32.gmra.mxu0 %v3335
    %v3541 = vpop.f32.mrf.mxu0
    %v3542 = vadd.f32 %v3519, %v3541
    %3543 = vdwg.mxu0
    %3544 = vmatpush.msra.mxu0 %v3405
    %3545 = vmatpush.msra.mxu0 %v3404
    %3546 = vmatpush.msra.mxu0 %v3403
    %3547 = vmatpush.msra.mxu0 %v3402
    %3548 = vmatpush.msra.mxu0 %v3401
    %3549 = vmatpush.msra.mxu0 %v3400
    %3550 = vmatpush.msra.mxu0 %v3399
    %3551 = vmatpush.msra.mxu0 %v3398
    %3552 = vmatpush.msra.mxu0 %v3397
    %3553 = vmatpush.msra.mxu0 %v3396
    %3554 = vmatpush.msra.mxu0 %v3395
    %3555 = vmatpush.msra.mxu0 %v3394
    %3556 = vmatpush.msra.mxu0 %v3393
    %3557 = vmatpush.msra.mxu0 %v3392
    %3558 = vmatpush.msra.mxu0 %v3391
    %3559 = vmatpush.msra.mxu0 %v3390
    %3560 = vmatmul.f32.gmra.mxu0 %v3328
    %v3561 = vpop.f32.mrf.mxu0
    %v3562 = vadd.f32 %v3539, %v3561
    %3563 = vmatmul.f32.gmra.mxu0 %v3336
    %v3564 = vpop.f32.mrf.mxu0
    %v3565 = vadd.f32 %v3542, %v3564
    %3566 = vdwg.mxu0
    %3567 = vmatpush.msra.mxu0 %v3421
    %3568 = vmatpush.msra.mxu0 %v3420
    %3569 = vmatpush.msra.mxu0 %v3419
    %3570 = vmatpush.msra.mxu0 %v3418
    %3571 = vmatpush.msra.mxu0 %v3417
    %3572 = vmatpush.msra.mxu0 %v3416
    %3573 = vmatpush.msra.mxu0 %v3415
    %3574 = vmatpush.msra.mxu0 %v3414
    %3575 = vmatpush.msra.mxu0 %v3413
    %3576 = vmatpush.msra.mxu0 %v3412
    %3577 = vmatpush.msra.mxu0 %v3411
    %3578 = vmatpush.msra.mxu0 %v3410
    %3579 = vmatpush.msra.mxu0 %v3409
    %3580 = vmatpush.msra.mxu0 %v3408
    %3581 = vmatpush.msra.mxu0 %v3407
    %3582 = vmatpush.msra.mxu0 %v3406
    %3583 = vmatmul.f32.gmra.mxu0 %v3329
    %v3584 = vpop.f32.mrf.mxu0
    %v3585 = vadd.f32 %v3562, %v3584
    %3586 = vmatmul.f32.gmra.mxu0 %v3337
    %v3587 = vpop.f32.mrf.mxu0
    %v3588 = vadd.f32 %v3565, %v3587
    %3589 = vdwg.mxu0
    %3590 = vmatpush.msra.mxu0 %v3437
    %3591 = vmatpush.msra.mxu0 %v3436
    %3592 = vmatpush.msra.mxu0 %v3435
    %3593 = vmatpush.msra.mxu0 %v3434
    %3594 = vmatpush.msra.mxu0 %v3433
    %3595 = vmatpush.msra.mxu0 %v3432
    %3596 = vmatpush.msra.mxu0 %v3431
    %3597 = vmatpush.msra.mxu0 %v3430
    %3598 = vmatpush.msra.mxu0 %v3429
    %3599 = vmatpush.msra.mxu0 %v3428
    %3600 = vmatpush.msra.mxu0 %v3427
    %3601 = vmatpush.msra.mxu0 %v3426
    %3602 = vmatpush.msra.mxu0 %v3425
    %3603 = vmatpush.msra.mxu0 %v3424
    %3604 = vmatpush.msra.mxu0 %v3423
    %3605 = vmatpush.msra.mxu0 %v3422
    %3606 = vmatmul.f32.gmra.mxu0 %v3330
    %v3607 = vpop.f32.mrf.mxu0
    %v3608 = vadd.f32 %v3585, %v3607
    %3609 = vmatmul.f32.gmra.mxu0 %v3338
    %v3610 = vpop.f32.mrf.mxu0
    %v3611 = vadd.f32 %v3588, %v3610
    %3612 = vdwg.mxu0
    %3613 = vmatpush.msra.mxu0 %v3453
    %3614 = vmatpush.msra.mxu0 %v3452
    %3615 = vmatpush.msra.mxu0 %v3451
    %3616 = vmatpush.msra.mxu0 %v3450
    %3617 = vmatpush.msra.mxu0 %v3449
    %3618 = vmatpush.msra.mxu0 %v3448
    %3619 = vmatpush.msra.mxu0 %v3447
    %3620 = vmatpush.msra.mxu0 %v3446
    %3621 = vmatpush.msra.mxu0 %v3445
    %3622 = vmatpush.msra.mxu0 %v3444
    %3623 = vmatpush.msra.mxu0 %v3443
    %3624 = vmatpush.msra.mxu0 %v3442
    %3625 = vmatpush.msra.mxu0 %v3441
    %3626 = vmatpush.msra.mxu0 %v3440
    %3627 = vmatpush.msra.mxu0 %v3439
    %3628 = vmatpush.msra.mxu0 %v3438
    %3629 = vmatmul.f32.gmra.mxu0 %v3331
    %v3630 = vpop.f32.mrf.mxu0
    %v3631 = vadd.f32 %v3608, %v3630
    %3632 = vmatmul.f32.gmra.mxu0 %v3339
    %v3633 = vpop.f32.mrf.mxu0
    %v3634 = vadd.f32 %v3611, %v3633
    %3635 = vdwg.mxu0
    %3636 = vmatpush.msra.mxu0 %v3469
    %3637 = vmatpush.msra.mxu0 %v3468
    %3638 = vmatpush.msra.mxu0 %v3467
    %3639 = vmatpush.msra.mxu0 %v3466
    %3640 = vmatpush.msra.mxu0 %v3465
    %3641 = vmatpush.msra.mxu0 %v3464
    %3642 = vmatpush.msra.mxu0 %v3463
    %3643 = vmatpush.msra.mxu0 %v3462
    %3644 = vmatpush.msra.mxu0 %v3461
    %3645 = vmatpush.msra.mxu0 %v3460
    %3646 = vmatpush.msra.mxu0 %v3459
    %3647 = vmatpush.msra.mxu0 %v3458
    %3648 = vmatpush.msra.mxu0 %v3457
    %3649 = vmatpush.msra.mxu0 %v3456
    %3650 = vmatpush.msra.mxu0 %v3455
    %3651 = vmatpush.msra.mxu0 %v3454
    %3652 = vmatmul.f32.gmra.mxu0 %v3332
    %v3653 = vpop.f32.mrf.mxu0
    %v3654 = vadd.f32 %v3631, %v3653
    %3655 = vmatmul.f32.gmra.mxu0 %v3340
    %v3656 = vpop.f32.mrf.mxu0
    %v3657 = vadd.f32 %v3634, %v3656
    %3658 = vdwg.mxu0
    %v3659 = vadd.f32 %v3049, %v3654
    %v3660 = vadd.f32 %v3050, %v3657
    %s3661 = scalar_lea.vmem %s19, 2
    %v3662 = vld [vmem:[%s3661] sm:$0x1]
    %s3663 = scalar_lea.vmem %s20, 2
    %v3664 = vld [vmem:[%s3663] sm:$0x1]
    %v3665 = vsel %vm381, %v3659, 0.0
    %3666 = vadd.xlane.f32.xlu0 %v3665
    %v3667 = vpop.xlane.xlu0 %3666
    %v3668 = vsel %vm381, %v3660, 0.0
    %3669 = vadd.xlane.f32.xlu0 %v3668
    %v3670 = vpop.xlane.xlu0 %3669
    %v3671 = vmul.f32 %v3667, %v770
    %v3672 = vmul.f32 %v3670, %v770
    %v3673 = vsub.f32 %v3659, %v3671
    %v3674 = vsub.f32 %v3660, %v3672
    %v3675 = vmul.f32 %v3673, %v3673
    %v3676 = vmul.f32 %v3674, %v3674
    %v3677 = vsel %vm381, %v3675, 0.0
    %3678 = vadd.xlane.f32.xlu0 %v3677
    %v3679 = vpop.xlane.xlu0 %3678
    %v3680 = vsel %vm381, %v3676, 0.0
    %3681 = vadd.xlane.f32.xlu0 %v3680
    %v3682 = vpop.xlane.xlu0 %3681
    %v3683 = vmul.f32 %v3679, %v770
    %v3684 = vmul.f32 %v3682, %v770
    %v3685 = vadd.f32 %v3683, 1e-05
    %v3686 = vadd.f32 %v3684, 1e-05
    %v3687 = vrsqrt.pop %v3685
    %v3688 = vmul.f32 %v3687, %v3685
    %v3689 = vmul.f32 %v3688, %v3687
    %v3690 = vmul.f32 0.5, %v3689
    %v3691 = vsub.f32 1.5, %v3690
    %v3692 = vmul.f32 %v3687, %v3691
    %vm3693 = vweird.f32 %v3685
    %vm3694 = vweird.f32 %v3687
    %vm3695 = vmor %vm3693, %vm3694
    %v3696 = vsel %vm3695, %v3687, %v3692
    %v3697 = vrsqrt.pop %v3686
    %v3698 = vmul.f32 %v3697, %v3686
    %v3699 = vmul.f32 %v3698, %v3697
    %v3700 = vmul.f32 0.5, %v3699
    %v3701 = vsub.f32 1.5, %v3700
    %v3702 = vmul.f32 %v3697, %v3701
    %vm3703 = vweird.f32 %v3686
    %vm3704 = vweird.f32 %v3697
    %vm3705 = vmor %vm3703, %vm3704
    %v3706 = vsel %vm3705, %v3697, %v3702
    %v3707 = vmul.f32 %v3673, %v3696
    %v3708 = vmul.f32 %v3674, %v3706
    %v3710 = vperm.slane %v3662, 0
    %v3712 = vmul.f32 %v3707, %v3710
    %v3713 = vmul.f32 %v3708, %v3710
    %v3715 = vperm.slane %v3664, 0
    %v3717 = vadd.f32 %v3712, %v3715
    %v3718 = vadd.f32 %v3713, %v3715
    %v3719 = vld [vmem:[%s21] sm:$0xff]
    %v3720 = vld [vmem:[%s21 + $0x8] sm:$0xff]
    %v3721 = vld [vmem:[%s21 + $0x10] sm:$0xff]
    %v3722 = vld [vmem:[%s21 + $0x18] sm:$0xff]
    %v3723 = vld [vmem:[%s21 + $0x20] sm:$0xff]
    %v3724 = vld [vmem:[%s21 + $0x28] sm:$0xff]
    %v3725 = vld [vmem:[%s21 + $0x30] sm:$0xff]
    %v3726 = vld [vmem:[%s21 + $0x38] sm:$0xff]
    %v3727 = vld [vmem:[%s22] sm:$0x1]
    %v3729 = vperm.slane %v3727, 0
    %v3732 = vsel %vm381, %v3717, 0
    %v3735 = vsel %vm381, %v3718, 0
    %3737 = vmatpush.msra.mxu0 0.0
    %3738 = vmatpush.msra.mxu0 0.0
    %3739 = vmatpush.msra.mxu0 0.0
    %3740 = vmatpush.msra.mxu0 0.0
    %3741 = vmatpush.msra.mxu0 0.0
    %3742 = vmatpush.msra.mxu0 0.0
    %3743 = vmatpush.msra.mxu0 0.0
    %3744 = vmatpush.msra.mxu0 0.0
    %3745 = vmatpush.msra.mxu0 %v3726
    %3746 = vmatpush.msra.mxu0 %v3725
    %3747 = vmatpush.msra.mxu0 %v3724
    %3748 = vmatpush.msra.mxu0 %v3723
    %3749 = vmatpush.msra.mxu0 %v3722
    %3750 = vmatpush.msra.mxu0 %v3721
    %3751 = vmatpush.msra.mxu0 %v3720
    %3752 = vmatpush.msra.mxu0 %v3719
    %3753 = vmatmul.f32.gmra.mxu0 %v3732
    %v3754 = vpop.f32.mrf.mxu0
    %v3755 = vadd.f32 %v3729, %v3754
    %3756 = vmatmul.f32.gmra.mxu0 %v3735
    %v3757 = vpop.f32.mrf.mxu0
    %v3758 = vadd.f32 %v3729, %v3757
    %3759 = vdwg.mxu0
    %v3760 = vmax.f32 %v3755, 0.0
    %v3761 = vmax.f32 %v3758, 0.0
    %v3762 = vld [vmem:[%s23] sm:$0xff]
    %v3763 = vld [vmem:[%s23 + $0x8] sm:$0xff]
    %v3764 = vld [vmem:[%s23 + $0x10] sm:$0xff]
    %v3765 = vld [vmem:[%s23 + $0x18] sm:$0xff]
    %v3766 = vld [vmem:[%s23 + $0x20] sm:$0xff]
    %v3767 = vld [vmem:[%s23 + $0x28] sm:$0xff]
    %v3768 = vld [vmem:[%s23 + $0x30] sm:$0xff]
    %v3769 = vld [vmem:[%s23 + $0x38] sm:$0xff]
    %v3770 = vld [vmem:[%s24] sm:$0x1]
    %v3772 = vperm.slane %v3770, 0
    %v3775 = vsel %vm381, %v3760, 0
    %v3778 = vsel %vm381, %v3761, 0
    %3780 = vmatpush.msra.mxu0 0.0
    %3781 = vmatpush.msra.mxu0 0.0
    %3782 = vmatpush.msra.mxu0 0.0
    %3783 = vmatpush.msra.mxu0 0.0
    %3784 = vmatpush.msra.mxu0 0.0
    %3785 = vmatpush.msra.mxu0 0.0
    %3786 = vmatpush.msra.mxu0 0.0
    %3787 = vmatpush.msra.mxu0 0.0
    %3788 = vmatpush.msra.mxu0 %v3769
    %3789 = vmatpush.msra.mxu0 %v3768
    %3790 = vmatpush.msra.mxu0 %v3767
    %3791 = vmatpush.msra.mxu0 %v3766
    %3792 = vmatpush.msra.mxu0 %v3765
    %3793 = vmatpush.msra.mxu0 %v3764
    %3794 = vmatpush.msra.mxu0 %v3763
    %3795 = vmatpush.msra.mxu0 %v3762
    %3796 = vmatmul.f32.gmra.mxu0 %v3775
    %v3797 = vpop.f32.mrf.mxu0
    %v3798 = vadd.f32 %v3772, %v3797
    %3799 = vmatmul.f32.gmra.mxu0 %v3778
    %v3800 = vpop.f32.mrf.mxu0
    %v3801 = vadd.f32 %v3772, %v3800
    %3802 = vdwg.mxu0
    %v3803 = vmax.f32 %v3798, 0.0
    %v3804 = vmax.f32 %v3801, 0.0
    %v3805 = vld [vmem:[%s25] sm:$0xff]
    %v3806 = vld [vmem:[%s25 + $0x8] sm:$0xff]
    %v3807 = vld [vmem:[%s25 + $0x10] sm:$0xff]
    %v3808 = vld [vmem:[%s25 + $0x18] sm:$0xff]
    %v3809 = vld [vmem:[%s25 + $0x20] sm:$0xff]
    %v3810 = vld [vmem:[%s25 + $0x28] sm:$0xff]
    %v3811 = vld [vmem:[%s25 + $0x30] sm:$0xff]
    %v3812 = vld [vmem:[%s25 + $0x38] sm:$0xff]
    %v3813 = vld [vmem:[%s26] sm:$0x1]
    %v3815 = vperm.slane %v3813, 0
    %v3818 = vsel %vm381, %v3803, 0
    %v3821 = vsel %vm381, %v3804, 0
    %3823 = vmatpush.msra.mxu0 0.0
    %3824 = vmatpush.msra.mxu0 0.0
    %3825 = vmatpush.msra.mxu0 0.0
    %3826 = vmatpush.msra.mxu0 0.0
    %3827 = vmatpush.msra.mxu0 0.0
    %3828 = vmatpush.msra.mxu0 0.0
    %3829 = vmatpush.msra.mxu0 0.0
    %3830 = vmatpush.msra.mxu0 0.0
    %3831 = vmatpush.msra.mxu0 %v3812
    %3832 = vmatpush.msra.mxu0 %v3811
    %3833 = vmatpush.msra.mxu0 %v3810
    %3834 = vmatpush.msra.mxu0 %v3809
    %3835 = vmatpush.msra.mxu0 %v3808
    %3836 = vmatpush.msra.mxu0 %v3807
    %3837 = vmatpush.msra.mxu0 %v3806
    %3838 = vmatpush.msra.mxu0 %v3805
    %3839 = vmatmul.f32.gmra.mxu0 %v3818
    %v3840 = vpop.f32.mrf.mxu0
    %v3841 = vadd.f32 %v3815, %v3840
    %3842 = vmatmul.f32.gmra.mxu0 %v3821
    %v3843 = vpop.f32.mrf.mxu0
    %v3844 = vadd.f32 %v3815, %v3843
    %3845 = vdwg.mxu0
    %3846 = vst [vmem:[#allocation2] sm:$0xff] %v3841
    %3847 = vst [vmem:[#allocation2 + $0x8] sm:$0xff] %v3844
    // Predicated region
    $region110: #{tpu_custom_call.1} parent=1 // pred_check
      _
    $region111: #{tpu_custom_call.1} parent=1 // pred_check_branch
      %3849 = sbr.rel (0) target = $region113
    $region112: #{tpu_custom_call.1} parent=1 // pred_region
      %3851 = vsyncadd [#allocation3], 0
      %s3852 = sshll.u32 [#allocation2], 4
      %s3853 = int_to_ptr.vmem [resolvable:$true] %s3852
      %s3854 = sshll.u32 %s27, 4
      %s3855 = int_to_ptr.hbm [resolvable:$true] %s3854
      %3860 = dma.vmem_to_hbm [thread:$0]  %s3853, 256, %s3855, [#allocation3], 128, 128, 8
    $region113: #{tpu_custom_call.1} parent=1 // pred_fallthru
      _
    // Predicated region
    $region114: #{tpu_custom_call.1} parent=1 // pred_check
      _
    $region115: #{tpu_custom_call.1} parent=1 // pred_check_branch
      %3862 = sbr.rel (0) target = $region117
    $region116: #{tpu_custom_call.1} parent=1 // pred_region
      %3864 = dma.done [#allocation3], 256
    $region117: #{tpu_custom_call.1} parent=1 // pred_fallthru
      _
    %3865 = vsyncpa [#allocation3], 1

</llo_original>
